<compile_context>
chip_gen: v6e
topology: v6e:2x2x1
jax: 0.10.0
libtpu: 0.0.40
codegen_flags: <defaults>
</compile_context>

<pallas_src>
import numpy as np

import jax
import jax.numpy as jnp
from jax import lax
from jax.experimental import pallas as pl
from jax.experimental.pallas import tpu as pltpu

# ----------------------------- configuration --------------------------------
BATCH = 2          # batch size
MICS = 2           # n mic channels
T = 16             # STFT frames (time)
DF_DIM = 24        # df_computer.df_dim (audio feature dim)
BCH = 16           # ConvTasNet bottleneck "B"
HCH = 32           # ConvTasNet conv channels "H"
P = 3              # depthwise kernel size "P"
X = 2              # blocks per repeat "X"
AV_FUSION_IDX = 1  # audio repeats before fusion
V = 16             # video embedding dim "V"
OUT_SPK = 1
NUM_BINS = 8       # df_computer.num_bins "F"
FR = 8             # lip-video frames
LM_DIM = 190       # landmark dim (fc1 input)
FC1_DIM = 512
GLN_EPS = 1e-5

NA = AV_FUSION_IDX * X                      # audio-stack blocks
DIL_A = tuple(2 ** b for _ in range(AV_FUSION_IDX) for b in range(X))   # (1, 2)
DIL_F = tuple(2 ** b for b in range(X))                                  # (1, 2)
DW_OFFSETS = tuple(sorted({s * d for d in set(DIL_A + DIL_F) for s in (-1, 1)}))

MF = MICS * NUM_BINS
OUT_W = 4 * MF + NUM_BINS                   # [sr | si | srn | sin | mag] = 72 lanes

# packed per-block vector-parameter rows
ROW_B1, ROW_A1, ROW_G1, ROW_BE1 = 0, 1, 2, 3
ROW_WD0 = 4                                  # depthwise taps at rows 4, 5, 6
ROW_BD, ROW_A2, ROW_G2, ROW_BE2, ROW_BS = 7, 8, 9, 10, 11
NVEC = 12


# ------------------------------ fused kernel ---------------------------------


def fused_forward_kernel(
    af_ref, lip_ref, reim_ref, interp_ref,
    fc1w_ref, fc1b_ref, fc2w_ref, c1w_ref,
    fusw_ref, wmask_ref, smallb_ref,
    w1a_ref, wsa_ref, veca_ref,
    w1f_ref, wsf_ref, vecf_ref,
    out_ref,
):
    """Whole batch processed in one grid step, fully resident in VMEM."""
    R = BATCH * T
    CMAX = 2 * HCH

    # Hoisted once: per-offset depthwise boundary masks (batch is folded into
    # rows, so the mask also prevents roll wrap-around across the sample edge).
    tt = lax.broadcasted_iota(jnp.int32, (R, CMAX), 0) % T
    masks_full, masks_half = {}, {}
    for off in DW_OFFSETS:
        m = jnp.logical_and(tt + off >= 0, tt + off < T).astype(jnp.float32)
        masks_full[off] = m                       # (R, 2*HCH)
        masks_half[off] = m[:, :HCH]              # (R, HCH)

    smallb = smallb_ref[...]                      # packed small biases (4, 2*BCH)
    fc2b = smallb[0:1, :V]
    c1b = smallb[1:2, :BCH]
    fusb = smallb[2:3, :BCH]
    bmask = smallb[3:4, :]

    def prelu(y, a_row):                          # nn.PReLU() (alpha broadcast per lane)
        return jnp.where(y >= 0.0, y, a_row * y)

    def gln(y, g_row, be_row, n_lane_groups):
        """gLN over each (sample, lane-group); sum & sum-of-squares fused into
        one sublane reduction of the lane-concatenated [y | y*y] tile.
        NOTE: one-pass E[x^2]-E[x]^2 variance (clamped >= 0); fine at these scales."""
        C = y.shape[1]
        gw = C // n_lane_groups
        z = jnp.concatenate([y, y * y], axis=1)   # (R, 2C)
        rows_out = []
        for b in range(BATCH):
            colsum = jnp.sum(z[b * T:(b + 1) * T, :], axis=0, keepdims=True)   # (1, 2C)
            pieces = []
            for g in range(n_lane_groups):
                lo, hi = g * gw, (g + 1) * gw
                n = float(T * gw)
                s = jnp.sum(colsum[:, lo:hi])
                ss = jnp.sum(colsum[:, C + lo:C + hi])
                mean = s * (1.0 / n)
                var = jnp.maximum(ss * (1.0 / n) - mean * mean, 0.0)
                rstd = lax.rsqrt(var + GLN_EPS)
                yb = y[b * T:(b + 1) * T, lo:hi]
                pieces.append(g_row[:, lo:hi] * (yb - mean) * rstd + be_row[:, lo:hi])
            rows_out.append(pieces[0] if n_lane_groups == 1
                            else jnp.concatenate(pieces, axis=1))
        return jnp.concatenate(rows_out, axis=0)

    def conv_block(x, w1, ws, vec, dil, n_lane_groups, cin):
        """Conv1DBlock: 1x1 - PReLU - gLN - depthwise dilated - PReLU - gLN - 1x1 + res.
        For the fused stack the speech/noise branches are lane-packed (block-diag weights)."""
        Cc = w1.shape[1]
        masks = masks_full if Cc == CMAX else masks_half
        b1, a1 = vec[ROW_B1:ROW_B1 + 1, :], vec[ROW_A1:ROW_A1 + 1, :]
        g1, be1 = vec[ROW_G1:ROW_G1 + 1, :], vec[ROW_BE1:ROW_BE1 + 1, :]
        bd, a2 = vec[ROW_BD:ROW_BD + 1, :], vec[ROW_A2:ROW_A2 + 1, :]
        g2, be2 = vec[ROW_G2:ROW_G2 + 1, :], vec[ROW_BE2:ROW_BE2 + 1, :]
        bs = vec[ROW_BS:ROW_BS + 1, :cin]

        # conv1x1 (B -> H)
        y = jnp.dot(x, w1, preferred_element_type=jnp.float32) + b1
        y = gln(prelu(y, a1), g1, be1, n_lane_groups)

        # depthwise dilated conv ('same'): center tap fused with the bias;
        # off-center taps via sublane rolls + hoisted boundary masks (P == 3).
        pad = dil * (P - 1) // 2
        acc = y * vec[ROW_WD0 + 1:ROW_WD0 + 2, :] + bd
        for k in (0, 2):
            off = k * dil - pad                   # static per-tap time offset
            sh = pltpu.roll(y, (-off) % R, 0) * masks[off]   # shifted[t] = y[t+off]
            acc = acc + sh * vec[ROW_WD0 + k:ROW_WD0 + k + 1, :]
        y = gln(prelu(acc, a2), g2, be2, n_lane_groups)

        # sconv (H -> B) + residual
        out = jnp.dot(y, ws, preferred_element_type=jnp.float32) + bs
        return x + out

    # ---- audio branch: conv1x1_1 then audio TCN blocks ----
    x = jnp.dot(af_ref[...], c1w_ref[...], preferred_element_type=jnp.float32) + c1b
    for blk in range(NA):
        x = conv_block(x, w1a_ref[blk], wsa_ref[blk], veca_ref[blk],
                       DIL_A[blk], 1, BCH)                        # (R, BCH)

    # ---- video branch (lip_fea == 'landmark'): fc2(fc1(lip)) + nearest interp ----
    vf = jnp.dot(lip_ref[...], fc1w_ref[...], preferred_element_type=jnp.float32) + fc1b_ref[...]
    vf = jnp.dot(vf, fc2w_ref[...], preferred_element_type=jnp.float32) + fc2b    # (B*FR, V)
    # TODO(synk): OxfordLipNet (self.lip_blocks) definition unavailable; treated as identity.
    vT = jnp.dot(interp_ref[...], vf, preferred_element_type=jnp.float32)         # (R, V)

    # ---- AV fusion: one block-diag matmul [x | vT] @ blockdiag(wa, wv) ----
    # TODO(synk): FactorizedLayer definition unavailable; factorized (projected
    # elementwise-product) fusion used in its place.
    proj = jnp.dot(jnp.concatenate([x, vT], axis=1), fusw_ref[...],
                   preferred_element_type=jnp.float32)                            # (R, 2*BCH)
    av = proj[:, :BCH] * proj[:, BCH:] + fusb                                     # (R, BCH)

    # ---- fusion / fusion_noise TCN stacks lane-packed as [speech | noise] ----
    z = jnp.concatenate([av, av], axis=1)                                         # (R, 2*BCH)
    for blk in range(X):
        z = conv_block(z, w1f_ref[blk], wsf_ref[blk], vecf_ref[blk],
                       DIL_F[blk], 2, 2 * BCH)

    # ---- packed mask heads ([r_sp | i_sp | r_n | i_n]) + relu ----
    e = jnp.maximum(
        jnp.dot(z, wmask_ref[...], preferred_element_type=jnp.float32) + bmask, 0.0)
    m_r, m_i = e[:, 0:NUM_BINS], e[:, NUM_BINS:2 * NUM_BINS]
    m_rn, m_in = e[:, 2 * NUM_BINS:3 * NUM_BINS], e[:, 3 * NUM_BINS:4 * NUM_BINS]

    # ---- complex mask application (mics lane-packed) + single lane-dense store ----
    reim = reim_ref[...]
    re, im = reim[:, 0:MF], reim[:, MF:2 * MF]                                    # (R, M*F)
    mr2 = jnp.concatenate([m_r] * MICS, axis=1)
    mi2 = jnp.concatenate([m_i] * MICS, axis=1)
    mrn2 = jnp.concatenate([m_rn] * MICS, axis=1)
    min2 = jnp.concatenate([m_in] * MICS, axis=1)
    sr = mr2 * re - mi2 * im
    si = mr2 * im + mi2 * re + 1e-10
    srn = mrn2 * re - min2 * im
    sin_ = mrn2 * im + min2 * re + 1e-10
    emag = jnp.sqrt(sr[:, :NUM_BINS] ** 2 + si[:, :NUM_BINS] ** 2)                # ref mic 0
    out_ref[...] = jnp.concatenate([sr, si, srn, sin_, emag], axis=1)             # (R, 72)


def build_fused_call():
    shapes = [
        (BATCH * T, DF_DIM),                  # audio features (batch folded into rows)
        (BATCH * FR, LM_DIM),                 # lip landmarks
        (BATCH * T, 2 * MF),                  # [real | imag], mics packed in lanes
        (BATCH * T, BATCH * FR),              # block-diag nearest-interp matrix
        (LM_DIM, FC1_DIM),                    # fc1
        (1, FC1_DIM),
        (FC1_DIM, V),                         # fc2
        (DF_DIM, BCH),                        # conv1x1_1
        (BCH + V, 2 * BCH),                   # blockdiag(wa, wv) fusion
        (2 * BCH, 4 * NUM_BINS),              # packed mask heads
        (4, 2 * BCH),                         # packed small biases
        (NA, BCH, HCH),                       # audio-stack conv1x1 weights
        (NA, HCH, BCH),                       # audio-stack sconv weights
        (NA, NVEC, HCH),                      # audio-stack packed vector params
        (X, 2 * BCH, 2 * HCH),                # fused-stack block-diag conv1x1
        (X, 2 * HCH, 2 * BCH),                # fused-stack block-diag sconv
        (X, NVEC, 2 * HCH),                   # fused-stack packed vector params
    ]

    def spec(shape):
        zeros = (0,) * len(shape)
        return pl.BlockSpec(shape, lambda i, _z=zeros: _z)

    return pl.pallas_call(
        fused_forward_kernel,
        out_shape=jax.ShapeDtypeStruct((BATCH * T, OUT_W), jnp.float32),
        grid=(1,),
        in_specs=[spec(s) for s in shapes],
        out_specs=pl.BlockSpec((BATCH * T, OUT_W), lambda i: (0, 0)),
        compiler_params=pltpu.CompilerParams(dimension_semantics=("arbitrary",)),
    )


# ------------------------------ parameter setup ------------------------------


def _blockdiag(a, b):
    m, n = a.shape
    p, q = b.shape
    out = np.zeros((m + p, n + q), np.float32)
    out[:m, :n] = a
    out[m:, n:] = b
    return out


def _interp_matrix_folded():
    """Block-diag (B*T, B*FR) one-hot matrix = F.interpolate(mode='nearest') per sample."""
    m = np.zeros((BATCH * T, BATCH * FR), np.float32)
    src = (np.arange(T) * FR) // T
    for b in range(BATCH):
        m[b * T + np.arange(T), b * FR + src] = 1.0
    return m


def make_params():
    rng = np.random.default_rng(0)

    def rnd(shape, scale=0.1):
        return (scale * rng.standard_normal(shape)).astype(np.float32)

    def raw_block():
        return dict(
            w1=rnd((BCH, HCH)), b1=rnd((HCH,), 0.02),
            a1=np.float32(0.25), g1=np.ones(HCH, np.float32), be1=rnd((HCH,), 0.02),
            wd=rnd((P, HCH)), bd=rnd((HCH,), 0.02),
            a2=np.float32(0.25), g2=np.ones(HCH, np.float32), be2=rnd((HCH,), 0.02),
            ws=rnd((HCH, BCH)), bs=rnd((BCH,), 0.02))

    audio_blocks = [raw_block() for _ in range(NA)]
    speech_blocks = [raw_block() for _ in range(X)]
    noise_blocks = [raw_block() for _ in range(X)]

    def vec_single(blk):
        v = np.zeros((NVEC, HCH), np.float32)
        v[ROW_B1], v[ROW_A1], v[ROW_G1], v[ROW_BE1] = blk['b1'], blk['a1'], blk['g1'], blk['be1']
        v[ROW_WD0:ROW_WD0 + P] = blk['wd']
        v[ROW_BD], v[ROW_A2], v[ROW_G2], v[ROW_BE2] = blk['bd'], blk['a2'], blk['g2'], blk['be2']
        v[ROW_BS, :BCH] = blk['bs']
        return v

    def vec_packed(sb, nb):
        v = np.zeros((NVEC, 2 * HCH), np.float32)
        v[:, :HCH] = vec_single(sb)
        v[:, HCH:] = vec_single(nb)
        v[ROW_BS] = 0.0
        v[ROW_BS, :BCH] = sb['bs']
        v[ROW_BS, BCH:2 * BCH] = nb['bs']
        return v

    # fusion + mask heads
    wa, wv, fus_b = rnd((BCH, BCH)), rnd((V, BCH)), rnd((BCH,), 0.02)
    wr_sp, wi_sp = rnd((BCH, NUM_BINS)), rnd((BCH, NUM_BINS))
    wr_n, wi_n = rnd((BCH, NUM_BINS)), rnd((BCH, NUM_BINS))
    b_mask = np.concatenate([rnd((NUM_BINS,), 0.02) for _ in range(4)])
    fc2_b, c1_b = rnd((V,), 0.02), rnd((BCH,), 0.02)

    smallb = np.zeros((4, 2 * BCH), np.float32)
    smallb[0, :V] = fc2_b
    smallb[1, :BCH] = c1_b
    smallb[2, :BCH] = fus_b
    smallb[3, :] = b_mask

    params = {
        "interp": _interp_matrix_folded(),
        "fc1_w": rnd((LM_DIM, FC1_DIM), 0.05),
        "fc1_b": rnd((1, FC1_DIM), 0.02),
        "fc2_w": rnd((FC1_DIM, V), 0.05),
        "c1_w": rnd((DF_DIM, BCH)),
        "fus_w": _blockdiag(wa, wv),
        "w_mask": _blockdiag(np.concatenate([wr_sp, wi_sp], axis=1),
                             np.concatenate([wr_n, wi_n], axis=1)),
        "smallb": smallb,
        "w1_a": np.stack([b['w1'] for b in audio_blocks]),
        "ws_a": np.stack([b['ws'] for b in audio_blocks]),
        "vec_a": np.stack([vec_single(b) for b in audio_blocks]),
        "w1_f": np.stack([_blockdiag(s['w1'], n['w1'])
                          for s, n in zip(speech_blocks, noise_blocks)]),
        "ws_f": np.stack([_blockdiag(s['ws'], n['ws'])
                          for s, n in zip(speech_blocks, noise_blocks)]),
        "vec_f": np.stack([vec_packed(s, n)
                           for s, n in zip(speech_blocks, noise_blocks)]),
    }
    return {k: jnp.asarray(v) for k, v in params.items()}


# ------------------------------- forward pass --------------------------------


def conv_tasnet_forward(params, audio_fea, mag, phase, lip_video):
    """audio_fea: (B, DF_DIM, T), mag/phase: (B, M, F, T), lip_video: (B, FR, 190)."""
    # KB-scale input layout prep (single fused XLA op); sin/cos stay outside the
    # Pallas kernel for portable lowering.
    af = jnp.transpose(audio_fea, (0, 2, 1)).reshape(BATCH * T, DF_DIM)
    real = jnp.transpose(mag * jnp.cos(phase), (0, 3, 1, 2)).reshape(BATCH * T, MF)
    imag = jnp.transpose(mag * jnp.sin(phase), (0, 3, 1, 2)).reshape(BATCH * T, MF)
    reim = jnp.concatenate([real, imag], axis=1)
    lip = lip_video.reshape(BATCH * FR, LM_DIM)

    fused = build_fused_call()
    out = fused(af, lip, reim, params["interp"],
                params["fc1_w"], params["fc1_b"], params["fc2_w"], params["c1_w"],
                params["fus_w"], params["w_mask"], params["smallb"],
                params["w1_a"], params["ws_a"], params["vec_a"],
                params["w1_f"], params["ws_f"], params["vec_f"])          # (B*T, 72)

    # decode the single packed output back to the reference (B, M, F, T) layout
    o = out.reshape(BATCH, T, OUT_W)

    def unpack(lo):
        return jnp.transpose(
            o[:, :, lo:lo + MF].reshape(BATCH, T, MICS, NUM_BINS), (0, 2, 3, 1))

    est_r = unpack(0)
    est_i = unpack(MF)
    est_rn = unpack(2 * MF)
    est_in = unpack(3 * MF)
    est_mag = jnp.transpose(o[:, :, 4 * MF:4 * MF + NUM_BINS], (0, 2, 1))

    # TODO(synk): DFComputer (STFT front-end), PSD/MVDR (get_power_spectral_density_matrix_*,
    # get_mvdr_vector_stable, apply_beamforming_vector), ComplexTensor and iSTFT definitions
    # are not provided in the reference; the beamforming + synthesis stage is not reproduced.
    return est_r, est_i, est_rn, est_in, est_mag


# ----------------------------------- main ------------------------------------

if __name__ == "__main__":
    params = make_params()

    # TODO(synk): DFComputer definition unavailable; its outputs (audio features,
    # magnitude, phase) are synthesized deterministically here.
    key = jax.random.PRNGKey(0)
    k_af, k_mag, k_ph, k_lip = jax.random.split(key, 4)
    audio_fea = jax.random.normal(k_af, (BATCH, DF_DIM, T), jnp.float32)
    mag = jnp.abs(jax.random.normal(k_mag, (BATCH, MICS, NUM_BINS, T), jnp.float32))
    phase = jax.random.uniform(k_ph, (BATCH, MICS, NUM_BINS, T), jnp.float32,
                               minval=-np.pi, maxval=np.pi)
    lip_video = jax.random.normal(k_lip, (BATCH, FR, LM_DIM), jnp.float32)

    fwd = jax.jit(conv_tasnet_forward)
    outs = jax.block_until_ready(fwd(params, audio_fea, mag, phase, lip_video))

    est_r, est_i, est_rn, est_in, est_mag = outs
    assert est_r.shape == (BATCH, MICS, NUM_BINS, T)
    assert est_i.shape == (BATCH, MICS, NUM_BINS, T)
    assert est_rn.shape == (BATCH, MICS, NUM_BINS, T)
    assert est_in.shape == (BATCH, MICS, NUM_BINS, T)
    assert est_mag.shape == (BATCH, NUM_BINS, T)
    assert all(bool(jnp.isfinite(o).all()) for o in outs)
    print("KERNEL_OK")
</pallas_src>

<mosaic_0001>
module attributes {stable_mosaic.version = 11 : i64} {
  func.func @fused_forward_kernel(%arg0: i32, %arg1: memref<32x24xf32, #tpu.memory_space<vmem>>, %arg2: memref<16x190xf32, #tpu.memory_space<vmem>>, %arg3: memref<32x32xf32, #tpu.memory_space<vmem>>, %arg4: memref<32x16xf32, #tpu.memory_space<vmem>>, %arg5: memref<190x512xf32, #tpu.memory_space<vmem>>, %arg6: memref<1x512xf32, #tpu.memory_space<vmem>>, %arg7: memref<512x16xf32, #tpu.memory_space<vmem>>, %arg8: memref<24x16xf32, #tpu.memory_space<vmem>>, %arg9: memref<32x32xf32, #tpu.memory_space<vmem>>, %arg10: memref<32x32xf32, #tpu.memory_space<vmem>>, %arg11: memref<4x32xf32, #tpu.memory_space<vmem>>, %arg12: memref<2x16x32xf32, #tpu.memory_space<vmem>>, %arg13: memref<2x32x16xf32, #tpu.memory_space<vmem>>, %arg14: memref<2x12x32xf32, #tpu.memory_space<vmem>>, %arg15: memref<2x32x64xf32, #tpu.memory_space<vmem>>, %arg16: memref<2x64x32xf32, #tpu.memory_space<vmem>>, %arg17: memref<2x12x64xf32, #tpu.memory_space<vmem>>, %arg18: memref<32x72xf32, #tpu.memory_space<vmem>>) attributes {dimension_semantics = [#tpu.dimension_semantics<arbitrary>], iteration_bounds = array<i64: 1>, scalar_prefetch = 0 : i64, scratch_operands = 0 : i64, tpu.core_type = #tpu.core_type<tc>, window_params = [{pipeline_mode = #tpu.pipeline_mode<synchronous>, transform_indices = @transform_0, window_bounds = array<i64: 32, 24>}, {pipeline_mode = #tpu.pipeline_mode<synchronous>, transform_indices = @transform_1, window_bounds = array<i64: 16, 190>}, {pipeline_mode = #tpu.pipeline_mode<synchronous>, transform_indices = @transform_2, window_bounds = array<i64: 32, 32>}, {pipeline_mode = #tpu.pipeline_mode<synchronous>, transform_indices = @transform_3, window_bounds = array<i64: 32, 16>}, {pipeline_mode = #tpu.pipeline_mode<synchronous>, transform_indices = @transform_4, window_bounds = array<i64: 190, 512>}, {pipeline_mode = #tpu.pipeline_mode<synchronous>, transform_indices = @transform_5, window_bounds = array<i64: 1, 512>}, {pipeline_mode = #tpu.pipeline_mode<synchronous>, transform_indices = @transform_6, window_bounds = array<i64: 512, 16>}, {pipeline_mode = #tpu.pipeline_mode<synchronous>, transform_indices = @transform_7, window_bounds = array<i64: 24, 16>}, {pipeline_mode = #tpu.pipeline_mode<synchronous>, transform_indices = @transform_8, window_bounds = array<i64: 32, 32>}, {pipeline_mode = #tpu.pipeline_mode<synchronous>, transform_indices = @transform_9, window_bounds = array<i64: 32, 32>}, {pipeline_mode = #tpu.pipeline_mode<synchronous>, transform_indices = @transform_10, window_bounds = array<i64: 4, 32>}, {pipeline_mode = #tpu.pipeline_mode<synchronous>, transform_indices = @transform_11, window_bounds = array<i64: 2, 16, 32>}, {pipeline_mode = #tpu.pipeline_mode<synchronous>, transform_indices = @transform_12, window_bounds = array<i64: 2, 32, 16>}, {pipeline_mode = #tpu.pipeline_mode<synchronous>, transform_indices = @transform_13, window_bounds = array<i64: 2, 12, 32>}, {pipeline_mode = #tpu.pipeline_mode<synchronous>, transform_indices = @transform_14, window_bounds = array<i64: 2, 32, 64>}, {pipeline_mode = #tpu.pipeline_mode<synchronous>, transform_indices = @transform_15, window_bounds = array<i64: 2, 64, 32>}, {pipeline_mode = #tpu.pipeline_mode<synchronous>, transform_indices = @transform_16, window_bounds = array<i64: 2, 12, 64>}, {pipeline_mode = #tpu.pipeline_mode<synchronous>, transform_indices = @transform_17, window_bounds = array<i64: 32, 72>}]} {
    %0 = tpu.iota {dimensions = array<i32: 0>} : vector<32x64xi32>
    %c16_i32 = arith.constant 16 : i32
    %c0_i32 = arith.constant 0 : i32
    %1 = arith.cmpi eq, %c16_i32, %c0_i32 : i32
    %c1_i32 = arith.constant 1 : i32
    %2 = arith.select %1, %c1_i32, %c16_i32 : i32
    %3 = vector.broadcast %2 : i32 to vector<32x64xi32>
    %4 = arith.remsi %0, %3 : vector<32x64xi32>
    %c0_i32_0 = arith.constant 0 : i32
    %5 = vector.broadcast %c0_i32_0 : i32 to vector<32x64xi32>
    %6 = arith.cmpi ne, %4, %5 : vector<32x64xi32>
    %c0_i32_1 = arith.constant 0 : i32
    %7 = vector.broadcast %c0_i32_1 : i32 to vector<32x64xi32>
    %8 = arith.cmpi slt, %4, %7 : vector<32x64xi32>
    %c0_i32_2 = arith.constant 0 : i32
    %9 = arith.cmpi slt, %2, %c0_i32_2 : i32
    %10 = vector.broadcast %9 : i1 to vector<32x64xi1>
    %11 = vector.broadcast %10 : vector<32x64xi1> to vector<32x64xi1>
    %12 = arith.xori %8, %11 : vector<32x64xi1>
    %13 = arith.andi %12, %6 : vector<32x64xi1>
    %14 = vector.broadcast %2 : i32 to vector<32x64xi32>
    %15 = arith.addi %4, %14 : vector<32x64xi32>
    %16 = arith.select %13, %15, %4 : vector<32x64xi1>, vector<32x64xi32>
    %c-2_i32 = arith.constant -2 : i32
    %17 = vector.broadcast %c-2_i32 : i32 to vector<32x64xi32>
    %18 = arith.addi %16, %17 : vector<32x64xi32>
    %c0_i32_3 = arith.constant 0 : i32
    %19 = vector.broadcast %c0_i32_3 : i32 to vector<32x64xi32>
    %20 = arith.cmpi sge, %18, %19 : vector<32x64xi32>
    %c-2_i32_4 = arith.constant -2 : i32
    %21 = vector.broadcast %c-2_i32_4 : i32 to vector<32x64xi32>
    %22 = arith.addi %16, %21 : vector<32x64xi32>
    %c16_i32_5 = arith.constant 16 : i32
    %23 = vector.broadcast %c16_i32_5 : i32 to vector<32x64xi32>
    %24 = arith.cmpi slt, %22, %23 : vector<32x64xi32>
    %25 = arith.andi %20, %24 : vector<32x64xi1>
    %26 = arith.extui %25 : vector<32x64xi1> to vector<32x64xi32>
    %27 = arith.sitofp %26 : vector<32x64xi32> to vector<32x64xf32>
    %28 = vector.extract_strided_slice %27 {offsets = [0, 0], sizes = [32, 32], strides = [1, 1]} : vector<32x64xf32> to vector<32x32xf32>
    %c-1_i32 = arith.constant -1 : i32
    %29 = vector.broadcast %c-1_i32 : i32 to vector<32x64xi32>
    %30 = arith.addi %16, %29 : vector<32x64xi32>
    %c0_i32_6 = arith.constant 0 : i32
    %31 = vector.broadcast %c0_i32_6 : i32 to vector<32x64xi32>
    %32 = arith.cmpi sge, %30, %31 : vector<32x64xi32>
    %c-1_i32_7 = arith.constant -1 : i32
    %33 = vector.broadcast %c-1_i32_7 : i32 to vector<32x64xi32>
    %34 = arith.addi %16, %33 : vector<32x64xi32>
    %c16_i32_8 = arith.constant 16 : i32
    %35 = vector.broadcast %c16_i32_8 : i32 to vector<32x64xi32>
    %36 = arith.cmpi slt, %34, %35 : vector<32x64xi32>
    %37 = arith.andi %32, %36 : vector<32x64xi1>
    %38 = arith.extui %37 : vector<32x64xi1> to vector<32x64xi32>
    %39 = arith.sitofp %38 : vector<32x64xi32> to vector<32x64xf32>
    %40 = vector.extract_strided_slice %39 {offsets = [0, 0], sizes = [32, 32], strides = [1, 1]} : vector<32x64xf32> to vector<32x32xf32>
    %c1_i32_9 = arith.constant 1 : i32
    %41 = vector.broadcast %c1_i32_9 : i32 to vector<32x64xi32>
    %42 = arith.addi %16, %41 : vector<32x64xi32>
    %c0_i32_10 = arith.constant 0 : i32
    %43 = vector.broadcast %c0_i32_10 : i32 to vector<32x64xi32>
    %44 = arith.cmpi sge, %42, %43 : vector<32x64xi32>
    %c1_i32_11 = arith.constant 1 : i32
    %45 = vector.broadcast %c1_i32_11 : i32 to vector<32x64xi32>
    %46 = arith.addi %16, %45 : vector<32x64xi32>
    %c16_i32_12 = arith.constant 16 : i32
    %47 = vector.broadcast %c16_i32_12 : i32 to vector<32x64xi32>
    %48 = arith.cmpi slt, %46, %47 : vector<32x64xi32>
    %49 = arith.andi %44, %48 : vector<32x64xi1>
    %50 = arith.extui %49 : vector<32x64xi1> to vector<32x64xi32>
    %51 = arith.sitofp %50 : vector<32x64xi32> to vector<32x64xf32>
    %52 = vector.extract_strided_slice %51 {offsets = [0, 0], sizes = [32, 32], strides = [1, 1]} : vector<32x64xf32> to vector<32x32xf32>
    %c2_i32 = arith.constant 2 : i32
    %53 = vector.broadcast %c2_i32 : i32 to vector<32x64xi32>
    %54 = arith.addi %16, %53 : vector<32x64xi32>
    %c0_i32_13 = arith.constant 0 : i32
    %55 = vector.broadcast %c0_i32_13 : i32 to vector<32x64xi32>
    %56 = arith.cmpi sge, %54, %55 : vector<32x64xi32>
    %c2_i32_14 = arith.constant 2 : i32
    %57 = vector.broadcast %c2_i32_14 : i32 to vector<32x64xi32>
    %58 = arith.addi %16, %57 : vector<32x64xi32>
    %c16_i32_15 = arith.constant 16 : i32
    %59 = vector.broadcast %c16_i32_15 : i32 to vector<32x64xi32>
    %60 = arith.cmpi slt, %58, %59 : vector<32x64xi32>
    %61 = arith.andi %56, %60 : vector<32x64xi1>
    %62 = arith.extui %61 : vector<32x64xi1> to vector<32x64xi32>
    %63 = arith.sitofp %62 : vector<32x64xi32> to vector<32x64xf32>
    %64 = vector.extract_strided_slice %63 {offsets = [0, 0], sizes = [32, 32], strides = [1, 1]} : vector<32x64xf32> to vector<32x32xf32>
    %c0 = arith.constant 0 : index
    %c0_16 = arith.constant 0 : index
    %65 = vector.load %arg11[%c0, %c0_16] : memref<4x32xf32, #tpu.memory_space<vmem>>, vector<4x32xf32>
    %66 = vector.extract_strided_slice %65 {offsets = [0, 0], sizes = [1, 16], strides = [1, 1]} : vector<4x32xf32> to vector<1x16xf32>
    %67 = vector.extract_strided_slice %65 {offsets = [1, 0], sizes = [1, 16], strides = [1, 1]} : vector<4x32xf32> to vector<1x16xf32>
    %68 = vector.extract_strided_slice %65 {offsets = [2, 0], sizes = [1, 16], strides = [1, 1]} : vector<4x32xf32> to vector<1x16xf32>
    %69 = vector.extract_strided_slice %65 {offsets = [3, 0], sizes = [1, 32], strides = [1, 1]} : vector<4x32xf32> to vector<1x32xf32>
    %c0_17 = arith.constant 0 : index
    %c0_18 = arith.constant 0 : index
    %70 = vector.load %arg1[%c0_17, %c0_18] : memref<32x24xf32, #tpu.memory_space<vmem>>, vector<32x24xf32>
    %c0_19 = arith.constant 0 : index
    %c0_20 = arith.constant 0 : index
    %71 = vector.load %arg8[%c0_19, %c0_20] : memref<24x16xf32, #tpu.memory_space<vmem>>, vector<24x16xf32>
    %cst = arith.constant dense<0.000000e+00> : vector<32x16xf32>
    %72 = tpu.matmul %70, %71, %cst {dimension_numbers = #tpu.dot_dimension_numbers<[1], [0], [0], [1], [0, 0, 1, 1], [], []>} : vector<32x24xf32>, vector<24x16xf32>, vector<32x16xf32> -> vector<32x16xf32>
    %73 = vector.broadcast %67 : vector<1x16xf32> to vector<32x16xf32>
    %74 = arith.addf %72, %73 : vector<32x16xf32>
    %c0_21 = arith.constant 0 : index
    %c0_22 = arith.constant 0 : index
    %c0_23 = arith.constant 0 : index
    %75 = vector.load %arg12[%c0_21, %c0_22, %c0_23] : memref<2x16x32xf32, #tpu.memory_space<vmem>>, vector<1x16x32xf32>
    %76 = vector.shape_cast %75 : vector<1x16x32xf32> to vector<16x32xf32>
    %c0_24 = arith.constant 0 : index
    %c0_25 = arith.constant 0 : index
    %c0_26 = arith.constant 0 : index
    %77 = vector.load %arg13[%c0_24, %c0_25, %c0_26] : memref<2x32x16xf32, #tpu.memory_space<vmem>>, vector<1x32x16xf32>
    %78 = vector.shape_cast %77 : vector<1x32x16xf32> to vector<32x16xf32>
    %c0_27 = arith.constant 0 : index
    %c0_28 = arith.constant 0 : index
    %c0_29 = arith.constant 0 : index
    %79 = vector.load %arg14[%c0_27, %c0_28, %c0_29] : memref<2x12x32xf32, #tpu.memory_space<vmem>>, vector<1x12x32xf32>
    %80 = vector.shape_cast %79 : vector<1x12x32xf32> to vector<12x32xf32>
    %81 = vector.extract_strided_slice %80 {offsets = [0, 0], sizes = [1, 32], strides = [1, 1]} : vector<12x32xf32> to vector<1x32xf32>
    %82 = vector.extract_strided_slice %80 {offsets = [1, 0], sizes = [1, 32], strides = [1, 1]} : vector<12x32xf32> to vector<1x32xf32>
    %83 = vector.extract_strided_slice %80 {offsets = [2, 0], sizes = [1, 32], strides = [1, 1]} : vector<12x32xf32> to vector<1x32xf32>
    %84 = vector.extract_strided_slice %80 {offsets = [3, 0], sizes = [1, 32], strides = [1, 1]} : vector<12x32xf32> to vector<1x32xf32>
    %85 = vector.extract_strided_slice %80 {offsets = [7, 0], sizes = [1, 32], strides = [1, 1]} : vector<12x32xf32> to vector<1x32xf32>
    %86 = vector.extract_strided_slice %80 {offsets = [8, 0], sizes = [1, 32], strides = [1, 1]} : vector<12x32xf32> to vector<1x32xf32>
    %87 = vector.extract_strided_slice %80 {offsets = [9, 0], sizes = [1, 32], strides = [1, 1]} : vector<12x32xf32> to vector<1x32xf32>
    %88 = vector.extract_strided_slice %80 {offsets = [10, 0], sizes = [1, 32], strides = [1, 1]} : vector<12x32xf32> to vector<1x32xf32>
    %89 = vector.extract_strided_slice %80 {offsets = [11, 0], sizes = [1, 16], strides = [1, 1]} : vector<12x32xf32> to vector<1x16xf32>
    %cst_30 = arith.constant dense<0.000000e+00> : vector<32x32xf32>
    %90 = tpu.matmul %74, %76, %cst_30 {dimension_numbers = #tpu.dot_dimension_numbers<[1], [0], [0], [1], [0, 0, 1, 1], [], []>} : vector<32x16xf32>, vector<16x32xf32>, vector<32x32xf32> -> vector<32x32xf32>
    %91 = vector.broadcast %81 : vector<1x32xf32> to vector<32x32xf32>
    %92 = arith.addf %90, %91 : vector<32x32xf32>
    %cst_31 = arith.constant 0.000000e+00 : f32
    %93 = vector.broadcast %cst_31 : f32 to vector<32x32xf32>
    %94 = arith.cmpf oge, %92, %93 : vector<32x32xf32>
    %95 = vector.broadcast %82 : vector<1x32xf32> to vector<32x32xf32>
    %96 = arith.mulf %95, %92 : vector<32x32xf32>
    %97 = arith.select %94, %92, %96 : vector<32x32xi1>, vector<32x32xf32>
    %98 = arith.mulf %97, %97 : vector<32x32xf32>
    %99 = tpu.concatenate %97, %98 in 1 : vector<32x32xf32>, vector<32x32xf32> -> vector<32x64xf32>
    %100 = vector.extract_strided_slice %99 {offsets = [0, 0], sizes = [16, 64], strides = [1, 1]} : vector<32x64xf32> to vector<16x64xf32>
    %cst_32 = arith.constant dense<0.000000e+00> : vector<64xf32>
    %101 = vector.multi_reduction <add>, %100, %cst_32 [0] : vector<16x64xf32> to vector<64xf32>
    %102 = vector.shape_cast %101 : vector<64xf32> to vector<1x64xf32>
    %103 = vector.extract_strided_slice %102 {offsets = [0, 0], sizes = [1, 32], strides = [1, 1]} : vector<1x64xf32> to vector<1x32xf32>
    %104 = vector.shape_cast %103 : vector<1x32xf32> to vector<1x1x32xf32>
    %cst_33 = arith.constant dense<0.000000e+00> : vector<1xf32>
    %105 = vector.multi_reduction <add>, %104, %cst_33 [1, 2] : vector<1x1x32xf32> to vector<1xf32>
    %106 = vector.shape_cast %105 : vector<1xf32> to vector<1x1x1xf32>
    %107 = vector.extract %106[0, 0, 0] : f32 from vector<1x1x1xf32>
    %108 = vector.extract_strided_slice %102 {offsets = [0, 32], sizes = [1, 32], strides = [1, 1]} : vector<1x64xf32> to vector<1x32xf32>
    %109 = vector.shape_cast %108 : vector<1x32xf32> to vector<1x1x32xf32>
    %cst_34 = arith.constant dense<0.000000e+00> : vector<1xf32>
    %110 = vector.multi_reduction <add>, %109, %cst_34 [1, 2] : vector<1x1x32xf32> to vector<1xf32>
    %111 = vector.shape_cast %110 : vector<1xf32> to vector<1x1x1xf32>
    %112 = vector.extract %111[0, 0, 0] : f32 from vector<1x1x1xf32>
    %cst_35 = arith.constant 0.001953125 : f32
    %113 = arith.mulf %107, %cst_35 : f32
    %cst_36 = arith.constant 0.001953125 : f32
    %114 = arith.mulf %112, %cst_36 : f32
    %115 = arith.mulf %113, %113 : f32
    %116 = arith.subf %114, %115 : f32
    %cst_37 = arith.constant 0.000000e+00 : f32
    %117 = arith.maximumf %116, %cst_37 : f32
    %cst_38 = arith.constant 9.99999974E-6 : f32
    %118 = arith.addf %117, %cst_38 : f32
    %119 = math.rsqrt %118 : f32
    %120 = vector.extract_strided_slice %97 {offsets = [0, 0], sizes = [16, 32], strides = [1, 1]} : vector<32x32xf32> to vector<16x32xf32>
    %121 = vector.broadcast %113 : f32 to vector<16x32xf32>
    %122 = arith.subf %120, %121 : vector<16x32xf32>
    %123 = vector.broadcast %83 : vector<1x32xf32> to vector<16x32xf32>
    %124 = arith.mulf %123, %122 : vector<16x32xf32>
    %125 = vector.broadcast %119 : f32 to vector<16x32xf32>
    %126 = arith.mulf %124, %125 : vector<16x32xf32>
    %127 = vector.broadcast %84 : vector<1x32xf32> to vector<16x32xf32>
    %128 = arith.addf %126, %127 : vector<16x32xf32>
    %129 = vector.extract_strided_slice %99 {offsets = [16, 0], sizes = [16, 64], strides = [1, 1]} : vector<32x64xf32> to vector<16x64xf32>
    %cst_39 = arith.constant dense<0.000000e+00> : vector<64xf32>
    %130 = vector.multi_reduction <add>, %129, %cst_39 [0] : vector<16x64xf32> to vector<64xf32>
    %131 = vector.shape_cast %130 : vector<64xf32> to vector<1x64xf32>
    %132 = vector.extract_strided_slice %131 {offsets = [0, 0], sizes = [1, 32], strides = [1, 1]} : vector<1x64xf32> to vector<1x32xf32>
    %133 = vector.shape_cast %132 : vector<1x32xf32> to vector<1x1x32xf32>
    %cst_40 = arith.constant dense<0.000000e+00> : vector<1xf32>
    %134 = vector.multi_reduction <add>, %133, %cst_40 [1, 2] : vector<1x1x32xf32> to vector<1xf32>
    %135 = vector.shape_cast %134 : vector<1xf32> to vector<1x1x1xf32>
    %136 = vector.extract %135[0, 0, 0] : f32 from vector<1x1x1xf32>
    %137 = vector.extract_strided_slice %131 {offsets = [0, 32], sizes = [1, 32], strides = [1, 1]} : vector<1x64xf32> to vector<1x32xf32>
    %138 = vector.shape_cast %137 : vector<1x32xf32> to vector<1x1x32xf32>
    %cst_41 = arith.constant dense<0.000000e+00> : vector<1xf32>
    %139 = vector.multi_reduction <add>, %138, %cst_41 [1, 2] : vector<1x1x32xf32> to vector<1xf32>
    %140 = vector.shape_cast %139 : vector<1xf32> to vector<1x1x1xf32>
    %141 = vector.extract %140[0, 0, 0] : f32 from vector<1x1x1xf32>
    %cst_42 = arith.constant 0.001953125 : f32
    %142 = arith.mulf %136, %cst_42 : f32
    %cst_43 = arith.constant 0.001953125 : f32
    %143 = arith.mulf %141, %cst_43 : f32
    %144 = arith.mulf %142, %142 : f32
    %145 = arith.subf %143, %144 : f32
    %cst_44 = arith.constant 0.000000e+00 : f32
    %146 = arith.maximumf %145, %cst_44 : f32
    %cst_45 = arith.constant 9.99999974E-6 : f32
    %147 = arith.addf %146, %cst_45 : f32
    %148 = math.rsqrt %147 : f32
    %149 = vector.extract_strided_slice %97 {offsets = [16, 0], sizes = [16, 32], strides = [1, 1]} : vector<32x32xf32> to vector<16x32xf32>
    %150 = vector.broadcast %142 : f32 to vector<16x32xf32>
    %151 = arith.subf %149, %150 : vector<16x32xf32>
    %152 = vector.broadcast %83 : vector<1x32xf32> to vector<16x32xf32>
    %153 = arith.mulf %152, %151 : vector<16x32xf32>
    %154 = vector.broadcast %148 : f32 to vector<16x32xf32>
    %155 = arith.mulf %153, %154 : vector<16x32xf32>
    %156 = vector.broadcast %84 : vector<1x32xf32> to vector<16x32xf32>
    %157 = arith.addf %155, %156 : vector<16x32xf32>
    %158 = tpu.concatenate %128, %157 in 0 : vector<16x32xf32>, vector<16x32xf32> -> vector<32x32xf32>
    %159 = vector.extract_strided_slice %80 {offsets = [5, 0], sizes = [1, 32], strides = [1, 1]} : vector<12x32xf32> to vector<1x32xf32>
    %160 = vector.broadcast %159 : vector<1x32xf32> to vector<32x32xf32>
    %161 = arith.mulf %158, %160 : vector<32x32xf32>
    %162 = vector.broadcast %85 : vector<1x32xf32> to vector<32x32xf32>
    %163 = arith.addf %161, %162 : vector<32x32xf32>
    %c1_i32_46 = arith.constant 1 : i32
    %164 = tpu.dynamic_rotate %158 by %c1_i32_46 dim 0 : vector<32x32xf32>, i32 -> vector<32x32xf32>
    %165 = arith.mulf %164, %40 : vector<32x32xf32>
    %166 = vector.extract_strided_slice %80 {offsets = [4, 0], sizes = [1, 32], strides = [1, 1]} : vector<12x32xf32> to vector<1x32xf32>
    %167 = vector.broadcast %166 : vector<1x32xf32> to vector<32x32xf32>
    %168 = arith.mulf %165, %167 : vector<32x32xf32>
    %169 = arith.addf %163, %168 : vector<32x32xf32>
    %c31_i32 = arith.constant 31 : i32
    %170 = tpu.dynamic_rotate %158 by %c31_i32 dim 0 : vector<32x32xf32>, i32 -> vector<32x32xf32>
    %171 = arith.mulf %170, %52 : vector<32x32xf32>
    %172 = vector.extract_strided_slice %80 {offsets = [6, 0], sizes = [1, 32], strides = [1, 1]} : vector<12x32xf32> to vector<1x32xf32>
    %173 = vector.broadcast %172 : vector<1x32xf32> to vector<32x32xf32>
    %174 = arith.mulf %171, %173 : vector<32x32xf32>
    %175 = arith.addf %169, %174 : vector<32x32xf32>
    %cst_47 = arith.constant 0.000000e+00 : f32
    %176 = vector.broadcast %cst_47 : f32 to vector<32x32xf32>
    %177 = arith.cmpf oge, %175, %176 : vector<32x32xf32>
    %178 = vector.broadcast %86 : vector<1x32xf32> to vector<32x32xf32>
    %179 = arith.mulf %178, %175 : vector<32x32xf32>
    %180 = arith.select %177, %175, %179 : vector<32x32xi1>, vector<32x32xf32>
    %181 = arith.mulf %180, %180 : vector<32x32xf32>
    %182 = tpu.concatenate %180, %181 in 1 : vector<32x32xf32>, vector<32x32xf32> -> vector<32x64xf32>
    %183 = vector.extract_strided_slice %182 {offsets = [0, 0], sizes = [16, 64], strides = [1, 1]} : vector<32x64xf32> to vector<16x64xf32>
    %cst_48 = arith.constant dense<0.000000e+00> : vector<64xf32>
    %184 = vector.multi_reduction <add>, %183, %cst_48 [0] : vector<16x64xf32> to vector<64xf32>
    %185 = vector.shape_cast %184 : vector<64xf32> to vector<1x64xf32>
    %186 = vector.extract_strided_slice %185 {offsets = [0, 0], sizes = [1, 32], strides = [1, 1]} : vector<1x64xf32> to vector<1x32xf32>
    %187 = vector.shape_cast %186 : vector<1x32xf32> to vector<1x1x32xf32>
    %cst_49 = arith.constant dense<0.000000e+00> : vector<1xf32>
    %188 = vector.multi_reduction <add>, %187, %cst_49 [1, 2] : vector<1x1x32xf32> to vector<1xf32>
    %189 = vector.shape_cast %188 : vector<1xf32> to vector<1x1x1xf32>
    %190 = vector.extract %189[0, 0, 0] : f32 from vector<1x1x1xf32>
    %191 = vector.extract_strided_slice %185 {offsets = [0, 32], sizes = [1, 32], strides = [1, 1]} : vector<1x64xf32> to vector<1x32xf32>
    %192 = vector.shape_cast %191 : vector<1x32xf32> to vector<1x1x32xf32>
    %cst_50 = arith.constant dense<0.000000e+00> : vector<1xf32>
    %193 = vector.multi_reduction <add>, %192, %cst_50 [1, 2] : vector<1x1x32xf32> to vector<1xf32>
    %194 = vector.shape_cast %193 : vector<1xf32> to vector<1x1x1xf32>
    %195 = vector.extract %194[0, 0, 0] : f32 from vector<1x1x1xf32>
    %cst_51 = arith.constant 0.001953125 : f32
    %196 = arith.mulf %190, %cst_51 : f32
    %cst_52 = arith.constant 0.001953125 : f32
    %197 = arith.mulf %195, %cst_52 : f32
    %198 = arith.mulf %196, %196 : f32
    %199 = arith.subf %197, %198 : f32
    %cst_53 = arith.constant 0.000000e+00 : f32
    %200 = arith.maximumf %199, %cst_53 : f32
    %cst_54 = arith.constant 9.99999974E-6 : f32
    %201 = arith.addf %200, %cst_54 : f32
    %202 = math.rsqrt %201 : f32
    %203 = vector.extract_strided_slice %180 {offsets = [0, 0], sizes = [16, 32], strides = [1, 1]} : vector<32x32xf32> to vector<16x32xf32>
    %204 = vector.broadcast %196 : f32 to vector<16x32xf32>
    %205 = arith.subf %203, %204 : vector<16x32xf32>
    %206 = vector.broadcast %87 : vector<1x32xf32> to vector<16x32xf32>
    %207 = arith.mulf %206, %205 : vector<16x32xf32>
    %208 = vector.broadcast %202 : f32 to vector<16x32xf32>
    %209 = arith.mulf %207, %208 : vector<16x32xf32>
    %210 = vector.broadcast %88 : vector<1x32xf32> to vector<16x32xf32>
    %211 = arith.addf %209, %210 : vector<16x32xf32>
    %212 = vector.extract_strided_slice %182 {offsets = [16, 0], sizes = [16, 64], strides = [1, 1]} : vector<32x64xf32> to vector<16x64xf32>
    %cst_55 = arith.constant dense<0.000000e+00> : vector<64xf32>
    %213 = vector.multi_reduction <add>, %212, %cst_55 [0] : vector<16x64xf32> to vector<64xf32>
    %214 = vector.shape_cast %213 : vector<64xf32> to vector<1x64xf32>
    %215 = vector.extract_strided_slice %214 {offsets = [0, 0], sizes = [1, 32], strides = [1, 1]} : vector<1x64xf32> to vector<1x32xf32>
    %216 = vector.shape_cast %215 : vector<1x32xf32> to vector<1x1x32xf32>
    %cst_56 = arith.constant dense<0.000000e+00> : vector<1xf32>
    %217 = vector.multi_reduction <add>, %216, %cst_56 [1, 2] : vector<1x1x32xf32> to vector<1xf32>
    %218 = vector.shape_cast %217 : vector<1xf32> to vector<1x1x1xf32>
    %219 = vector.extract %218[0, 0, 0] : f32 from vector<1x1x1xf32>
    %220 = vector.extract_strided_slice %214 {offsets = [0, 32], sizes = [1, 32], strides = [1, 1]} : vector<1x64xf32> to vector<1x32xf32>
    %221 = vector.shape_cast %220 : vector<1x32xf32> to vector<1x1x32xf32>
    %cst_57 = arith.constant dense<0.000000e+00> : vector<1xf32>
    %222 = vector.multi_reduction <add>, %221, %cst_57 [1, 2] : vector<1x1x32xf32> to vector<1xf32>
    %223 = vector.shape_cast %222 : vector<1xf32> to vector<1x1x1xf32>
    %224 = vector.extract %223[0, 0, 0] : f32 from vector<1x1x1xf32>
    %cst_58 = arith.constant 0.001953125 : f32
    %225 = arith.mulf %219, %cst_58 : f32
    %cst_59 = arith.constant 0.001953125 : f32
    %226 = arith.mulf %224, %cst_59 : f32
    %227 = arith.mulf %225, %225 : f32
    %228 = arith.subf %226, %227 : f32
    %cst_60 = arith.constant 0.000000e+00 : f32
    %229 = arith.maximumf %228, %cst_60 : f32
    %cst_61 = arith.constant 9.99999974E-6 : f32
    %230 = arith.addf %229, %cst_61 : f32
    %231 = math.rsqrt %230 : f32
    %232 = vector.extract_strided_slice %180 {offsets = [16, 0], sizes = [16, 32], strides = [1, 1]} : vector<32x32xf32> to vector<16x32xf32>
    %233 = vector.broadcast %225 : f32 to vector<16x32xf32>
    %234 = arith.subf %232, %233 : vector<16x32xf32>
    %235 = vector.broadcast %87 : vector<1x32xf32> to vector<16x32xf32>
    %236 = arith.mulf %235, %234 : vector<16x32xf32>
    %237 = vector.broadcast %231 : f32 to vector<16x32xf32>
    %238 = arith.mulf %236, %237 : vector<16x32xf32>
    %239 = vector.broadcast %88 : vector<1x32xf32> to vector<16x32xf32>
    %240 = arith.addf %238, %239 : vector<16x32xf32>
    %241 = tpu.concatenate %211, %240 in 0 : vector<16x32xf32>, vector<16x32xf32> -> vector<32x32xf32>
    %cst_62 = arith.constant dense<0.000000e+00> : vector<32x16xf32>
    %242 = tpu.matmul %241, %78, %cst_62 {dimension_numbers = #tpu.dot_dimension_numbers<[1], [0], [0], [1], [0, 0, 1, 1], [], []>} : vector<32x32xf32>, vector<32x16xf32>, vector<32x16xf32> -> vector<32x16xf32>
    %243 = vector.broadcast %89 : vector<1x16xf32> to vector<32x16xf32>
    %244 = arith.addf %242, %243 : vector<32x16xf32>
    %245 = arith.addf %74, %244 : vector<32x16xf32>
    %c1 = arith.constant 1 : index
    %c0_63 = arith.constant 0 : index
    %c0_64 = arith.constant 0 : index
    %246 = vector.load %arg12[%c1, %c0_63, %c0_64] : memref<2x16x32xf32, #tpu.memory_space<vmem>>, vector<1x16x32xf32>
    %247 = vector.shape_cast %246 : vector<1x16x32xf32> to vector<16x32xf32>
    %c1_65 = arith.constant 1 : index
    %c0_66 = arith.constant 0 : index
    %c0_67 = arith.constant 0 : index
    %248 = vector.load %arg13[%c1_65, %c0_66, %c0_67] : memref<2x32x16xf32, #tpu.memory_space<vmem>>, vector<1x32x16xf32>
    %249 = vector.shape_cast %248 : vector<1x32x16xf32> to vector<32x16xf32>
    %c1_68 = arith.constant 1 : index
    %c0_69 = arith.constant 0 : index
    %c0_70 = arith.constant 0 : index
    %250 = vector.load %arg14[%c1_68, %c0_69, %c0_70] : memref<2x12x32xf32, #tpu.memory_space<vmem>>, vector<1x12x32xf32>
    %251 = vector.shape_cast %250 : vector<1x12x32xf32> to vector<12x32xf32>
    %252 = vector.extract_strided_slice %251 {offsets = [0, 0], sizes = [1, 32], strides = [1, 1]} : vector<12x32xf32> to vector<1x32xf32>
    %253 = vector.extract_strided_slice %251 {offsets = [1, 0], sizes = [1, 32], strides = [1, 1]} : vector<12x32xf32> to vector<1x32xf32>
    %254 = vector.extract_strided_slice %251 {offsets = [2, 0], sizes = [1, 32], strides = [1, 1]} : vector<12x32xf32> to vector<1x32xf32>
    %255 = vector.extract_strided_slice %251 {offsets = [3, 0], sizes = [1, 32], strides = [1, 1]} : vector<12x32xf32> to vector<1x32xf32>
    %256 = vector.extract_strided_slice %251 {offsets = [7, 0], sizes = [1, 32], strides = [1, 1]} : vector<12x32xf32> to vector<1x32xf32>
    %257 = vector.extract_strided_slice %251 {offsets = [8, 0], sizes = [1, 32], strides = [1, 1]} : vector<12x32xf32> to vector<1x32xf32>
    %258 = vector.extract_strided_slice %251 {offsets = [9, 0], sizes = [1, 32], strides = [1, 1]} : vector<12x32xf32> to vector<1x32xf32>
    %259 = vector.extract_strided_slice %251 {offsets = [10, 0], sizes = [1, 32], strides = [1, 1]} : vector<12x32xf32> to vector<1x32xf32>
    %260 = vector.extract_strided_slice %251 {offsets = [11, 0], sizes = [1, 16], strides = [1, 1]} : vector<12x32xf32> to vector<1x16xf32>
    %cst_71 = arith.constant dense<0.000000e+00> : vector<32x32xf32>
    %261 = tpu.matmul %245, %247, %cst_71 {dimension_numbers = #tpu.dot_dimension_numbers<[1], [0], [0], [1], [0, 0, 1, 1], [], []>} : vector<32x16xf32>, vector<16x32xf32>, vector<32x32xf32> -> vector<32x32xf32>
    %262 = vector.broadcast %252 : vector<1x32xf32> to vector<32x32xf32>
    %263 = arith.addf %261, %262 : vector<32x32xf32>
    %cst_72 = arith.constant 0.000000e+00 : f32
    %264 = vector.broadcast %cst_72 : f32 to vector<32x32xf32>
    %265 = arith.cmpf oge, %263, %264 : vector<32x32xf32>
    %266 = vector.broadcast %253 : vector<1x32xf32> to vector<32x32xf32>
    %267 = arith.mulf %266, %263 : vector<32x32xf32>
    %268 = arith.select %265, %263, %267 : vector<32x32xi1>, vector<32x32xf32>
    %269 = arith.mulf %268, %268 : vector<32x32xf32>
    %270 = tpu.concatenate %268, %269 in 1 : vector<32x32xf32>, vector<32x32xf32> -> vector<32x64xf32>
    %271 = vector.extract_strided_slice %270 {offsets = [0, 0], sizes = [16, 64], strides = [1, 1]} : vector<32x64xf32> to vector<16x64xf32>
    %cst_73 = arith.constant dense<0.000000e+00> : vector<64xf32>
    %272 = vector.multi_reduction <add>, %271, %cst_73 [0] : vector<16x64xf32> to vector<64xf32>
    %273 = vector.shape_cast %272 : vector<64xf32> to vector<1x64xf32>
    %274 = vector.extract_strided_slice %273 {offsets = [0, 0], sizes = [1, 32], strides = [1, 1]} : vector<1x64xf32> to vector<1x32xf32>
    %275 = vector.shape_cast %274 : vector<1x32xf32> to vector<1x1x32xf32>
    %cst_74 = arith.constant dense<0.000000e+00> : vector<1xf32>
    %276 = vector.multi_reduction <add>, %275, %cst_74 [1, 2] : vector<1x1x32xf32> to vector<1xf32>
    %277 = vector.shape_cast %276 : vector<1xf32> to vector<1x1x1xf32>
    %278 = vector.extract %277[0, 0, 0] : f32 from vector<1x1x1xf32>
    %279 = vector.extract_strided_slice %273 {offsets = [0, 32], sizes = [1, 32], strides = [1, 1]} : vector<1x64xf32> to vector<1x32xf32>
    %280 = vector.shape_cast %279 : vector<1x32xf32> to vector<1x1x32xf32>
    %cst_75 = arith.constant dense<0.000000e+00> : vector<1xf32>
    %281 = vector.multi_reduction <add>, %280, %cst_75 [1, 2] : vector<1x1x32xf32> to vector<1xf32>
    %282 = vector.shape_cast %281 : vector<1xf32> to vector<1x1x1xf32>
    %283 = vector.extract %282[0, 0, 0] : f32 from vector<1x1x1xf32>
    %cst_76 = arith.constant 0.001953125 : f32
    %284 = arith.mulf %278, %cst_76 : f32
    %cst_77 = arith.constant 0.001953125 : f32
    %285 = arith.mulf %283, %cst_77 : f32
    %286 = arith.mulf %284, %284 : f32
    %287 = arith.subf %285, %286 : f32
    %cst_78 = arith.constant 0.000000e+00 : f32
    %288 = arith.maximumf %287, %cst_78 : f32
    %cst_79 = arith.constant 9.99999974E-6 : f32
    %289 = arith.addf %288, %cst_79 : f32
    %290 = math.rsqrt %289 : f32
    %291 = vector.extract_strided_slice %268 {offsets = [0, 0], sizes = [16, 32], strides = [1, 1]} : vector<32x32xf32> to vector<16x32xf32>
    %292 = vector.broadcast %284 : f32 to vector<16x32xf32>
    %293 = arith.subf %291, %292 : vector<16x32xf32>
    %294 = vector.broadcast %254 : vector<1x32xf32> to vector<16x32xf32>
    %295 = arith.mulf %294, %293 : vector<16x32xf32>
    %296 = vector.broadcast %290 : f32 to vector<16x32xf32>
    %297 = arith.mulf %295, %296 : vector<16x32xf32>
    %298 = vector.broadcast %255 : vector<1x32xf32> to vector<16x32xf32>
    %299 = arith.addf %297, %298 : vector<16x32xf32>
    %300 = vector.extract_strided_slice %270 {offsets = [16, 0], sizes = [16, 64], strides = [1, 1]} : vector<32x64xf32> to vector<16x64xf32>
    %cst_80 = arith.constant dense<0.000000e+00> : vector<64xf32>
    %301 = vector.multi_reduction <add>, %300, %cst_80 [0] : vector<16x64xf32> to vector<64xf32>
    %302 = vector.shape_cast %301 : vector<64xf32> to vector<1x64xf32>
    %303 = vector.extract_strided_slice %302 {offsets = [0, 0], sizes = [1, 32], strides = [1, 1]} : vector<1x64xf32> to vector<1x32xf32>
    %304 = vector.shape_cast %303 : vector<1x32xf32> to vector<1x1x32xf32>
    %cst_81 = arith.constant dense<0.000000e+00> : vector<1xf32>
    %305 = vector.multi_reduction <add>, %304, %cst_81 [1, 2] : vector<1x1x32xf32> to vector<1xf32>
    %306 = vector.shape_cast %305 : vector<1xf32> to vector<1x1x1xf32>
    %307 = vector.extract %306[0, 0, 0] : f32 from vector<1x1x1xf32>
    %308 = vector.extract_strided_slice %302 {offsets = [0, 32], sizes = [1, 32], strides = [1, 1]} : vector<1x64xf32> to vector<1x32xf32>
    %309 = vector.shape_cast %308 : vector<1x32xf32> to vector<1x1x32xf32>
    %cst_82 = arith.constant dense<0.000000e+00> : vector<1xf32>
    %310 = vector.multi_reduction <add>, %309, %cst_82 [1, 2] : vector<1x1x32xf32> to vector<1xf32>
    %311 = vector.shape_cast %310 : vector<1xf32> to vector<1x1x1xf32>
    %312 = vector.extract %311[0, 0, 0] : f32 from vector<1x1x1xf32>
    %cst_83 = arith.constant 0.001953125 : f32
    %313 = arith.mulf %307, %cst_83 : f32
    %cst_84 = arith.constant 0.001953125 : f32
    %314 = arith.mulf %312, %cst_84 : f32
    %315 = arith.mulf %313, %313 : f32
    %316 = arith.subf %314, %315 : f32
    %cst_85 = arith.constant 0.000000e+00 : f32
    %317 = arith.maximumf %316, %cst_85 : f32
    %cst_86 = arith.constant 9.99999974E-6 : f32
    %318 = arith.addf %317, %cst_86 : f32
    %319 = math.rsqrt %318 : f32
    %320 = vector.extract_strided_slice %268 {offsets = [16, 0], sizes = [16, 32], strides = [1, 1]} : vector<32x32xf32> to vector<16x32xf32>
    %321 = vector.broadcast %313 : f32 to vector<16x32xf32>
    %322 = arith.subf %320, %321 : vector<16x32xf32>
    %323 = vector.broadcast %254 : vector<1x32xf32> to vector<16x32xf32>
    %324 = arith.mulf %323, %322 : vector<16x32xf32>
    %325 = vector.broadcast %319 : f32 to vector<16x32xf32>
    %326 = arith.mulf %324, %325 : vector<16x32xf32>
    %327 = vector.broadcast %255 : vector<1x32xf32> to vector<16x32xf32>
    %328 = arith.addf %326, %327 : vector<16x32xf32>
    %329 = tpu.concatenate %299, %328 in 0 : vector<16x32xf32>, vector<16x32xf32> -> vector<32x32xf32>
    %330 = vector.extract_strided_slice %251 {offsets = [5, 0], sizes = [1, 32], strides = [1, 1]} : vector<12x32xf32> to vector<1x32xf32>
    %331 = vector.broadcast %330 : vector<1x32xf32> to vector<32x32xf32>
    %332 = arith.mulf %329, %331 : vector<32x32xf32>
    %333 = vector.broadcast %256 : vector<1x32xf32> to vector<32x32xf32>
    %334 = arith.addf %332, %333 : vector<32x32xf32>
    %c2_i32_87 = arith.constant 2 : i32
    %335 = tpu.dynamic_rotate %329 by %c2_i32_87 dim 0 : vector<32x32xf32>, i32 -> vector<32x32xf32>
    %336 = arith.mulf %335, %28 : vector<32x32xf32>
    %337 = vector.extract_strided_slice %251 {offsets = [4, 0], sizes = [1, 32], strides = [1, 1]} : vector<12x32xf32> to vector<1x32xf32>
    %338 = vector.broadcast %337 : vector<1x32xf32> to vector<32x32xf32>
    %339 = arith.mulf %336, %338 : vector<32x32xf32>
    %340 = arith.addf %334, %339 : vector<32x32xf32>
    %c30_i32 = arith.constant 30 : i32
    %341 = tpu.dynamic_rotate %329 by %c30_i32 dim 0 : vector<32x32xf32>, i32 -> vector<32x32xf32>
    %342 = arith.mulf %341, %64 : vector<32x32xf32>
    %343 = vector.extract_strided_slice %251 {offsets = [6, 0], sizes = [1, 32], strides = [1, 1]} : vector<12x32xf32> to vector<1x32xf32>
    %344 = vector.broadcast %343 : vector<1x32xf32> to vector<32x32xf32>
    %345 = arith.mulf %342, %344 : vector<32x32xf32>
    %346 = arith.addf %340, %345 : vector<32x32xf32>
    %cst_88 = arith.constant 0.000000e+00 : f32
    %347 = vector.broadcast %cst_88 : f32 to vector<32x32xf32>
    %348 = arith.cmpf oge, %346, %347 : vector<32x32xf32>
    %349 = vector.broadcast %257 : vector<1x32xf32> to vector<32x32xf32>
    %350 = arith.mulf %349, %346 : vector<32x32xf32>
    %351 = arith.select %348, %346, %350 : vector<32x32xi1>, vector<32x32xf32>
    %352 = arith.mulf %351, %351 : vector<32x32xf32>
    %353 = tpu.concatenate %351, %352 in 1 : vector<32x32xf32>, vector<32x32xf32> -> vector<32x64xf32>
    %354 = vector.extract_strided_slice %353 {offsets = [0, 0], sizes = [16, 64], strides = [1, 1]} : vector<32x64xf32> to vector<16x64xf32>
    %cst_89 = arith.constant dense<0.000000e+00> : vector<64xf32>
    %355 = vector.multi_reduction <add>, %354, %cst_89 [0] : vector<16x64xf32> to vector<64xf32>
    %356 = vector.shape_cast %355 : vector<64xf32> to vector<1x64xf32>
    %357 = vector.extract_strided_slice %356 {offsets = [0, 0], sizes = [1, 32], strides = [1, 1]} : vector<1x64xf32> to vector<1x32xf32>
    %358 = vector.shape_cast %357 : vector<1x32xf32> to vector<1x1x32xf32>
    %cst_90 = arith.constant dense<0.000000e+00> : vector<1xf32>
    %359 = vector.multi_reduction <add>, %358, %cst_90 [1, 2] : vector<1x1x32xf32> to vector<1xf32>
    %360 = vector.shape_cast %359 : vector<1xf32> to vector<1x1x1xf32>
    %361 = vector.extract %360[0, 0, 0] : f32 from vector<1x1x1xf32>
    %362 = vector.extract_strided_slice %356 {offsets = [0, 32], sizes = [1, 32], strides = [1, 1]} : vector<1x64xf32> to vector<1x32xf32>
    %363 = vector.shape_cast %362 : vector<1x32xf32> to vector<1x1x32xf32>
    %cst_91 = arith.constant dense<0.000000e+00> : vector<1xf32>
    %364 = vector.multi_reduction <add>, %363, %cst_91 [1, 2] : vector<1x1x32xf32> to vector<1xf32>
    %365 = vector.shape_cast %364 : vector<1xf32> to vector<1x1x1xf32>
    %366 = vector.extract %365[0, 0, 0] : f32 from vector<1x1x1xf32>
    %cst_92 = arith.constant 0.001953125 : f32
    %367 = arith.mulf %361, %cst_92 : f32
    %cst_93 = arith.constant 0.001953125 : f32
    %368 = arith.mulf %366, %cst_93 : f32
    %369 = arith.mulf %367, %367 : f32
    %370 = arith.subf %368, %369 : f32
    %cst_94 = arith.constant 0.000000e+00 : f32
    %371 = arith.maximumf %370, %cst_94 : f32
    %cst_95 = arith.constant 9.99999974E-6 : f32
    %372 = arith.addf %371, %cst_95 : f32
    %373 = math.rsqrt %372 : f32
    %374 = vector.extract_strided_slice %351 {offsets = [0, 0], sizes = [16, 32], strides = [1, 1]} : vector<32x32xf32> to vector<16x32xf32>
    %375 = vector.broadcast %367 : f32 to vector<16x32xf32>
    %376 = arith.subf %374, %375 : vector<16x32xf32>
    %377 = vector.broadcast %258 : vector<1x32xf32> to vector<16x32xf32>
    %378 = arith.mulf %377, %376 : vector<16x32xf32>
    %379 = vector.broadcast %373 : f32 to vector<16x32xf32>
    %380 = arith.mulf %378, %379 : vector<16x32xf32>
    %381 = vector.broadcast %259 : vector<1x32xf32> to vector<16x32xf32>
    %382 = arith.addf %380, %381 : vector<16x32xf32>
    %383 = vector.extract_strided_slice %353 {offsets = [16, 0], sizes = [16, 64], strides = [1, 1]} : vector<32x64xf32> to vector<16x64xf32>
    %cst_96 = arith.constant dense<0.000000e+00> : vector<64xf32>
    %384 = vector.multi_reduction <add>, %383, %cst_96 [0] : vector<16x64xf32> to vector<64xf32>
    %385 = vector.shape_cast %384 : vector<64xf32> to vector<1x64xf32>
    %386 = vector.extract_strided_slice %385 {offsets = [0, 0], sizes = [1, 32], strides = [1, 1]} : vector<1x64xf32> to vector<1x32xf32>
    %387 = vector.shape_cast %386 : vector<1x32xf32> to vector<1x1x32xf32>
    %cst_97 = arith.constant dense<0.000000e+00> : vector<1xf32>
    %388 = vector.multi_reduction <add>, %387, %cst_97 [1, 2] : vector<1x1x32xf32> to vector<1xf32>
    %389 = vector.shape_cast %388 : vector<1xf32> to vector<1x1x1xf32>
    %390 = vector.extract %389[0, 0, 0] : f32 from vector<1x1x1xf32>
    %391 = vector.extract_strided_slice %385 {offsets = [0, 32], sizes = [1, 32], strides = [1, 1]} : vector<1x64xf32> to vector<1x32xf32>
    %392 = vector.shape_cast %391 : vector<1x32xf32> to vector<1x1x32xf32>
    %cst_98 = arith.constant dense<0.000000e+00> : vector<1xf32>
    %393 = vector.multi_reduction <add>, %392, %cst_98 [1, 2] : vector<1x1x32xf32> to vector<1xf32>
    %394 = vector.shape_cast %393 : vector<1xf32> to vector<1x1x1xf32>
    %395 = vector.extract %394[0, 0, 0] : f32 from vector<1x1x1xf32>
    %cst_99 = arith.constant 0.001953125 : f32
    %396 = arith.mulf %390, %cst_99 : f32
    %cst_100 = arith.constant 0.001953125 : f32
    %397 = arith.mulf %395, %cst_100 : f32
    %398 = arith.mulf %396, %396 : f32
    %399 = arith.subf %397, %398 : f32
    %cst_101 = arith.constant 0.000000e+00 : f32
    %400 = arith.maximumf %399, %cst_101 : f32
    %cst_102 = arith.constant 9.99999974E-6 : f32
    %401 = arith.addf %400, %cst_102 : f32
    %402 = math.rsqrt %401 : f32
    %403 = vector.extract_strided_slice %351 {offsets = [16, 0], sizes = [16, 32], strides = [1, 1]} : vector<32x32xf32> to vector<16x32xf32>
    %404 = vector.broadcast %396 : f32 to vector<16x32xf32>
    %405 = arith.subf %403, %404 : vector<16x32xf32>
    %406 = vector.broadcast %258 : vector<1x32xf32> to vector<16x32xf32>
    %407 = arith.mulf %406, %405 : vector<16x32xf32>
    %408 = vector.broadcast %402 : f32 to vector<16x32xf32>
    %409 = arith.mulf %407, %408 : vector<16x32xf32>
    %410 = vector.broadcast %259 : vector<1x32xf32> to vector<16x32xf32>
    %411 = arith.addf %409, %410 : vector<16x32xf32>
    %412 = tpu.concatenate %382, %411 in 0 : vector<16x32xf32>, vector<16x32xf32> -> vector<32x32xf32>
    %cst_103 = arith.constant dense<0.000000e+00> : vector<32x16xf32>
    %413 = tpu.matmul %412, %249, %cst_103 {dimension_numbers = #tpu.dot_dimension_numbers<[1], [0], [0], [1], [0, 0, 1, 1], [], []>} : vector<32x32xf32>, vector<32x16xf32>, vector<32x16xf32> -> vector<32x16xf32>
    %414 = vector.broadcast %260 : vector<1x16xf32> to vector<32x16xf32>
    %415 = arith.addf %413, %414 : vector<32x16xf32>
    %416 = arith.addf %245, %415 : vector<32x16xf32>
    %c0_104 = arith.constant 0 : index
    %c0_105 = arith.constant 0 : index
    %417 = vector.load %arg2[%c0_104, %c0_105] : memref<16x190xf32, #tpu.memory_space<vmem>>, vector<16x190xf32>
    %c0_106 = arith.constant 0 : index
    %c0_107 = arith.constant 0 : index
    %418 = vector.load %arg5[%c0_106, %c0_107] : memref<190x512xf32, #tpu.memory_space<vmem>>, vector<190x512xf32>
    %cst_108 = arith.constant dense<0.000000e+00> : vector<16x512xf32>
    %419 = tpu.matmul %417, %418, %cst_108 {dimension_numbers = #tpu.dot_dimension_numbers<[1], [0], [0], [1], [0, 0, 1, 1], [], []>} : vector<16x190xf32>, vector<190x512xf32>, vector<16x512xf32> -> vector<16x512xf32>
    %c0_109 = arith.constant 0 : index
    %c0_110 = arith.constant 0 : index
    %420 = vector.load %arg6[%c0_109, %c0_110] : memref<1x512xf32, #tpu.memory_space<vmem>>, vector<1x512xf32>
    %421 = vector.broadcast %420 : vector<1x512xf32> to vector<16x512xf32>
    %422 = arith.addf %419, %421 : vector<16x512xf32>
    %c0_111 = arith.constant 0 : index
    %c0_112 = arith.constant 0 : index
    %423 = vector.load %arg7[%c0_111, %c0_112] : memref<512x16xf32, #tpu.memory_space<vmem>>, vector<512x16xf32>
    %cst_113 = arith.constant dense<0.000000e+00> : vector<16x16xf32>
    %424 = tpu.matmul %422, %423, %cst_113 {dimension_numbers = #tpu.dot_dimension_numbers<[1], [0], [0], [1], [0, 0, 1, 1], [], []>} : vector<16x512xf32>, vector<512x16xf32>, vector<16x16xf32> -> vector<16x16xf32>
    %425 = vector.broadcast %66 : vector<1x16xf32> to vector<16x16xf32>
    %426 = arith.addf %424, %425 : vector<16x16xf32>
    %c0_114 = arith.constant 0 : index
    %c0_115 = arith.constant 0 : index
    %427 = vector.load %arg4[%c0_114, %c0_115] : memref<32x16xf32, #tpu.memory_space<vmem>>, vector<32x16xf32>
    %cst_116 = arith.constant dense<0.000000e+00> : vector<32x16xf32>
    %428 = tpu.matmul %427, %426, %cst_116 {dimension_numbers = #tpu.dot_dimension_numbers<[1], [0], [0], [1], [0, 0, 1, 1], [], []>} : vector<32x16xf32>, vector<16x16xf32>, vector<32x16xf32> -> vector<32x16xf32>
    %429 = tpu.concatenate %416, %428 in 1 : vector<32x16xf32>, vector<32x16xf32> -> vector<32x32xf32>
    %c0_117 = arith.constant 0 : index
    %c0_118 = arith.constant 0 : index
    %430 = vector.load %arg9[%c0_117, %c0_118] : memref<32x32xf32, #tpu.memory_space<vmem>>, vector<32x32xf32>
    %cst_119 = arith.constant dense<0.000000e+00> : vector<32x32xf32>
    %431 = tpu.matmul %429, %430, %cst_119 {dimension_numbers = #tpu.dot_dimension_numbers<[1], [0], [0], [1], [0, 0, 1, 1], [], []>} : vector<32x32xf32>, vector<32x32xf32>, vector<32x32xf32> -> vector<32x32xf32>
    %432 = vector.extract_strided_slice %431 {offsets = [0, 0], sizes = [32, 16], strides = [1, 1]} : vector<32x32xf32> to vector<32x16xf32>
    %433 = vector.extract_strided_slice %431 {offsets = [0, 16], sizes = [32, 16], strides = [1, 1]} : vector<32x32xf32> to vector<32x16xf32>
    %434 = arith.mulf %432, %433 : vector<32x16xf32>
    %435 = vector.broadcast %68 : vector<1x16xf32> to vector<32x16xf32>
    %436 = arith.addf %434, %435 : vector<32x16xf32>
    %437 = tpu.concatenate %436, %436 in 1 : vector<32x16xf32>, vector<32x16xf32> -> vector<32x32xf32>
    %c0_120 = arith.constant 0 : index
    %c0_121 = arith.constant 0 : index
    %c0_122 = arith.constant 0 : index
    %438 = vector.load %arg15[%c0_120, %c0_121, %c0_122] : memref<2x32x64xf32, #tpu.memory_space<vmem>>, vector<1x32x64xf32>
    %439 = vector.shape_cast %438 : vector<1x32x64xf32> to vector<32x64xf32>
    %c0_123 = arith.constant 0 : index
    %c0_124 = arith.constant 0 : index
    %c0_125 = arith.constant 0 : index
    %440 = vector.load %arg16[%c0_123, %c0_124, %c0_125] : memref<2x64x32xf32, #tpu.memory_space<vmem>>, vector<1x64x32xf32>
    %441 = vector.shape_cast %440 : vector<1x64x32xf32> to vector<64x32xf32>
    %c0_126 = arith.constant 0 : index
    %c0_127 = arith.constant 0 : index
    %c0_128 = arith.constant 0 : index
    %442 = vector.load %arg17[%c0_126, %c0_127, %c0_128] : memref<2x12x64xf32, #tpu.memory_space<vmem>>, vector<1x12x64xf32>
    %443 = vector.shape_cast %442 : vector<1x12x64xf32> to vector<12x64xf32>
    %444 = vector.extract_strided_slice %443 {offsets = [0, 0], sizes = [1, 64], strides = [1, 1]} : vector<12x64xf32> to vector<1x64xf32>
    %445 = vector.extract_strided_slice %443 {offsets = [1, 0], sizes = [1, 64], strides = [1, 1]} : vector<12x64xf32> to vector<1x64xf32>
    %446 = vector.extract_strided_slice %443 {offsets = [2, 0], sizes = [1, 64], strides = [1, 1]} : vector<12x64xf32> to vector<1x64xf32>
    %447 = vector.extract_strided_slice %443 {offsets = [3, 0], sizes = [1, 64], strides = [1, 1]} : vector<12x64xf32> to vector<1x64xf32>
    %448 = vector.extract_strided_slice %443 {offsets = [7, 0], sizes = [1, 64], strides = [1, 1]} : vector<12x64xf32> to vector<1x64xf32>
    %449 = vector.extract_strided_slice %443 {offsets = [8, 0], sizes = [1, 64], strides = [1, 1]} : vector<12x64xf32> to vector<1x64xf32>
    %450 = vector.extract_strided_slice %443 {offsets = [9, 0], sizes = [1, 64], strides = [1, 1]} : vector<12x64xf32> to vector<1x64xf32>
    %451 = vector.extract_strided_slice %443 {offsets = [10, 0], sizes = [1, 64], strides = [1, 1]} : vector<12x64xf32> to vector<1x64xf32>
    %452 = vector.extract_strided_slice %443 {offsets = [11, 0], sizes = [1, 32], strides = [1, 1]} : vector<12x64xf32> to vector<1x32xf32>
    %cst_129 = arith.constant dense<0.000000e+00> : vector<32x64xf32>
    %453 = tpu.matmul %437, %439, %cst_129 {dimension_numbers = #tpu.dot_dimension_numbers<[1], [0], [0], [1], [0, 0, 1, 1], [], []>} : vector<32x32xf32>, vector<32x64xf32>, vector<32x64xf32> -> vector<32x64xf32>
    %454 = vector.broadcast %444 : vector<1x64xf32> to vector<32x64xf32>
    %455 = arith.addf %453, %454 : vector<32x64xf32>
    %cst_130 = arith.constant 0.000000e+00 : f32
    %456 = vector.broadcast %cst_130 : f32 to vector<32x64xf32>
    %457 = arith.cmpf oge, %455, %456 : vector<32x64xf32>
    %458 = vector.broadcast %445 : vector<1x64xf32> to vector<32x64xf32>
    %459 = arith.mulf %458, %455 : vector<32x64xf32>
    %460 = arith.select %457, %455, %459 : vector<32x64xi1>, vector<32x64xf32>
    %461 = arith.mulf %460, %460 : vector<32x64xf32>
    %462 = tpu.concatenate %460, %461 in 1 : vector<32x64xf32>, vector<32x64xf32> -> vector<32x128xf32>
    %463 = vector.extract_strided_slice %462 {offsets = [0, 0], sizes = [16, 128], strides = [1, 1]} : vector<32x128xf32> to vector<16x128xf32>
    %cst_131 = arith.constant dense<0.000000e+00> : vector<128xf32>
    %464 = vector.multi_reduction <add>, %463, %cst_131 [0] : vector<16x128xf32> to vector<128xf32>
    %465 = vector.shape_cast %464 : vector<128xf32> to vector<1x128xf32>
    %466 = vector.extract_strided_slice %465 {offsets = [0, 0], sizes = [1, 32], strides = [1, 1]} : vector<1x128xf32> to vector<1x32xf32>
    %467 = vector.shape_cast %466 : vector<1x32xf32> to vector<1x1x32xf32>
    %cst_132 = arith.constant dense<0.000000e+00> : vector<1xf32>
    %468 = vector.multi_reduction <add>, %467, %cst_132 [1, 2] : vector<1x1x32xf32> to vector<1xf32>
    %469 = vector.shape_cast %468 : vector<1xf32> to vector<1x1x1xf32>
    %470 = vector.extract %469[0, 0, 0] : f32 from vector<1x1x1xf32>
    %471 = vector.extract_strided_slice %465 {offsets = [0, 64], sizes = [1, 32], strides = [1, 1]} : vector<1x128xf32> to vector<1x32xf32>
    %472 = vector.shape_cast %471 : vector<1x32xf32> to vector<1x1x32xf32>
    %cst_133 = arith.constant dense<0.000000e+00> : vector<1xf32>
    %473 = vector.multi_reduction <add>, %472, %cst_133 [1, 2] : vector<1x1x32xf32> to vector<1xf32>
    %474 = vector.shape_cast %473 : vector<1xf32> to vector<1x1x1xf32>
    %475 = vector.extract %474[0, 0, 0] : f32 from vector<1x1x1xf32>
    %cst_134 = arith.constant 0.001953125 : f32
    %476 = arith.mulf %470, %cst_134 : f32
    %cst_135 = arith.constant 0.001953125 : f32
    %477 = arith.mulf %475, %cst_135 : f32
    %478 = arith.mulf %476, %476 : f32
    %479 = arith.subf %477, %478 : f32
    %cst_136 = arith.constant 0.000000e+00 : f32
    %480 = arith.maximumf %479, %cst_136 : f32
    %cst_137 = arith.constant 9.99999974E-6 : f32
    %481 = arith.addf %480, %cst_137 : f32
    %482 = math.rsqrt %481 : f32
    %483 = vector.extract_strided_slice %460 {offsets = [0, 0], sizes = [16, 32], strides = [1, 1]} : vector<32x64xf32> to vector<16x32xf32>
    %484 = vector.extract_strided_slice %446 {offsets = [0, 0], sizes = [1, 32], strides = [1, 1]} : vector<1x64xf32> to vector<1x32xf32>
    %485 = vector.broadcast %476 : f32 to vector<16x32xf32>
    %486 = arith.subf %483, %485 : vector<16x32xf32>
    %487 = vector.broadcast %484 : vector<1x32xf32> to vector<16x32xf32>
    %488 = arith.mulf %487, %486 : vector<16x32xf32>
    %489 = vector.broadcast %482 : f32 to vector<16x32xf32>
    %490 = arith.mulf %488, %489 : vector<16x32xf32>
    %491 = vector.extract_strided_slice %447 {offsets = [0, 0], sizes = [1, 32], strides = [1, 1]} : vector<1x64xf32> to vector<1x32xf32>
    %492 = vector.broadcast %491 : vector<1x32xf32> to vector<16x32xf32>
    %493 = arith.addf %490, %492 : vector<16x32xf32>
    %494 = vector.extract_strided_slice %465 {offsets = [0, 32], sizes = [1, 32], strides = [1, 1]} : vector<1x128xf32> to vector<1x32xf32>
    %495 = vector.shape_cast %494 : vector<1x32xf32> to vector<1x1x32xf32>
    %cst_138 = arith.constant dense<0.000000e+00> : vector<1xf32>
    %496 = vector.multi_reduction <add>, %495, %cst_138 [1, 2] : vector<1x1x32xf32> to vector<1xf32>
    %497 = vector.shape_cast %496 : vector<1xf32> to vector<1x1x1xf32>
    %498 = vector.extract %497[0, 0, 0] : f32 from vector<1x1x1xf32>
    %499 = vector.extract_strided_slice %465 {offsets = [0, 96], sizes = [1, 32], strides = [1, 1]} : vector<1x128xf32> to vector<1x32xf32>
    %500 = vector.shape_cast %499 : vector<1x32xf32> to vector<1x1x32xf32>
    %cst_139 = arith.constant dense<0.000000e+00> : vector<1xf32>
    %501 = vector.multi_reduction <add>, %500, %cst_139 [1, 2] : vector<1x1x32xf32> to vector<1xf32>
    %502 = vector.shape_cast %501 : vector<1xf32> to vector<1x1x1xf32>
    %503 = vector.extract %502[0, 0, 0] : f32 from vector<1x1x1xf32>
    %cst_140 = arith.constant 0.001953125 : f32
    %504 = arith.mulf %498, %cst_140 : f32
    %cst_141 = arith.constant 0.001953125 : f32
    %505 = arith.mulf %503, %cst_141 : f32
    %506 = arith.mulf %504, %504 : f32
    %507 = arith.subf %505, %506 : f32
    %cst_142 = arith.constant 0.000000e+00 : f32
    %508 = arith.maximumf %507, %cst_142 : f32
    %cst_143 = arith.constant 9.99999974E-6 : f32
    %509 = arith.addf %508, %cst_143 : f32
    %510 = math.rsqrt %509 : f32
    %511 = vector.extract_strided_slice %460 {offsets = [0, 32], sizes = [16, 32], strides = [1, 1]} : vector<32x64xf32> to vector<16x32xf32>
    %512 = vector.extract_strided_slice %446 {offsets = [0, 32], sizes = [1, 32], strides = [1, 1]} : vector<1x64xf32> to vector<1x32xf32>
    %513 = vector.broadcast %504 : f32 to vector<16x32xf32>
    %514 = arith.subf %511, %513 : vector<16x32xf32>
    %515 = vector.broadcast %512 : vector<1x32xf32> to vector<16x32xf32>
    %516 = arith.mulf %515, %514 : vector<16x32xf32>
    %517 = vector.broadcast %510 : f32 to vector<16x32xf32>
    %518 = arith.mulf %516, %517 : vector<16x32xf32>
    %519 = vector.extract_strided_slice %447 {offsets = [0, 32], sizes = [1, 32], strides = [1, 1]} : vector<1x64xf32> to vector<1x32xf32>
    %520 = vector.broadcast %519 : vector<1x32xf32> to vector<16x32xf32>
    %521 = arith.addf %518, %520 : vector<16x32xf32>
    %522 = tpu.concatenate %493, %521 in 1 : vector<16x32xf32>, vector<16x32xf32> -> vector<16x64xf32>
    %523 = vector.extract_strided_slice %462 {offsets = [16, 0], sizes = [16, 128], strides = [1, 1]} : vector<32x128xf32> to vector<16x128xf32>
    %cst_144 = arith.constant dense<0.000000e+00> : vector<128xf32>
    %524 = vector.multi_reduction <add>, %523, %cst_144 [0] : vector<16x128xf32> to vector<128xf32>
    %525 = vector.shape_cast %524 : vector<128xf32> to vector<1x128xf32>
    %526 = vector.extract_strided_slice %525 {offsets = [0, 0], sizes = [1, 32], strides = [1, 1]} : vector<1x128xf32> to vector<1x32xf32>
    %527 = vector.shape_cast %526 : vector<1x32xf32> to vector<1x1x32xf32>
    %cst_145 = arith.constant dense<0.000000e+00> : vector<1xf32>
    %528 = vector.multi_reduction <add>, %527, %cst_145 [1, 2] : vector<1x1x32xf32> to vector<1xf32>
    %529 = vector.shape_cast %528 : vector<1xf32> to vector<1x1x1xf32>
    %530 = vector.extract %529[0, 0, 0] : f32 from vector<1x1x1xf32>
    %531 = vector.extract_strided_slice %525 {offsets = [0, 64], sizes = [1, 32], strides = [1, 1]} : vector<1x128xf32> to vector<1x32xf32>
    %532 = vector.shape_cast %531 : vector<1x32xf32> to vector<1x1x32xf32>
    %cst_146 = arith.constant dense<0.000000e+00> : vector<1xf32>
    %533 = vector.multi_reduction <add>, %532, %cst_146 [1, 2] : vector<1x1x32xf32> to vector<1xf32>
    %534 = vector.shape_cast %533 : vector<1xf32> to vector<1x1x1xf32>
    %535 = vector.extract %534[0, 0, 0] : f32 from vector<1x1x1xf32>
    %cst_147 = arith.constant 0.001953125 : f32
    %536 = arith.mulf %530, %cst_147 : f32
    %cst_148 = arith.constant 0.001953125 : f32
    %537 = arith.mulf %535, %cst_148 : f32
    %538 = arith.mulf %536, %536 : f32
    %539 = arith.subf %537, %538 : f32
    %cst_149 = arith.constant 0.000000e+00 : f32
    %540 = arith.maximumf %539, %cst_149 : f32
    %cst_150 = arith.constant 9.99999974E-6 : f32
    %541 = arith.addf %540, %cst_150 : f32
    %542 = math.rsqrt %541 : f32
    %543 = vector.extract_strided_slice %460 {offsets = [16, 0], sizes = [16, 32], strides = [1, 1]} : vector<32x64xf32> to vector<16x32xf32>
    %544 = vector.extract_strided_slice %446 {offsets = [0, 0], sizes = [1, 32], strides = [1, 1]} : vector<1x64xf32> to vector<1x32xf32>
    %545 = vector.broadcast %536 : f32 to vector<16x32xf32>
    %546 = arith.subf %543, %545 : vector<16x32xf32>
    %547 = vector.broadcast %544 : vector<1x32xf32> to vector<16x32xf32>
    %548 = arith.mulf %547, %546 : vector<16x32xf32>
    %549 = vector.broadcast %542 : f32 to vector<16x32xf32>
    %550 = arith.mulf %548, %549 : vector<16x32xf32>
    %551 = vector.extract_strided_slice %447 {offsets = [0, 0], sizes = [1, 32], strides = [1, 1]} : vector<1x64xf32> to vector<1x32xf32>
    %552 = vector.broadcast %551 : vector<1x32xf32> to vector<16x32xf32>
    %553 = arith.addf %550, %552 : vector<16x32xf32>
    %554 = vector.extract_strided_slice %525 {offsets = [0, 32], sizes = [1, 32], strides = [1, 1]} : vector<1x128xf32> to vector<1x32xf32>
    %555 = vector.shape_cast %554 : vector<1x32xf32> to vector<1x1x32xf32>
    %cst_151 = arith.constant dense<0.000000e+00> : vector<1xf32>
    %556 = vector.multi_reduction <add>, %555, %cst_151 [1, 2] : vector<1x1x32xf32> to vector<1xf32>
    %557 = vector.shape_cast %556 : vector<1xf32> to vector<1x1x1xf32>
    %558 = vector.extract %557[0, 0, 0] : f32 from vector<1x1x1xf32>
    %559 = vector.extract_strided_slice %525 {offsets = [0, 96], sizes = [1, 32], strides = [1, 1]} : vector<1x128xf32> to vector<1x32xf32>
    %560 = vector.shape_cast %559 : vector<1x32xf32> to vector<1x1x32xf32>
    %cst_152 = arith.constant dense<0.000000e+00> : vector<1xf32>
    %561 = vector.multi_reduction <add>, %560, %cst_152 [1, 2] : vector<1x1x32xf32> to vector<1xf32>
    %562 = vector.shape_cast %561 : vector<1xf32> to vector<1x1x1xf32>
    %563 = vector.extract %562[0, 0, 0] : f32 from vector<1x1x1xf32>
    %cst_153 = arith.constant 0.001953125 : f32
    %564 = arith.mulf %558, %cst_153 : f32
    %cst_154 = arith.constant 0.001953125 : f32
    %565 = arith.mulf %563, %cst_154 : f32
    %566 = arith.mulf %564, %564 : f32
    %567 = arith.subf %565, %566 : f32
    %cst_155 = arith.constant 0.000000e+00 : f32
    %568 = arith.maximumf %567, %cst_155 : f32
    %cst_156 = arith.constant 9.99999974E-6 : f32
    %569 = arith.addf %568, %cst_156 : f32
    %570 = math.rsqrt %569 : f32
    %571 = vector.extract_strided_slice %460 {offsets = [16, 32], sizes = [16, 32], strides = [1, 1]} : vector<32x64xf32> to vector<16x32xf32>
    %572 = vector.extract_strided_slice %446 {offsets = [0, 32], sizes = [1, 32], strides = [1, 1]} : vector<1x64xf32> to vector<1x32xf32>
    %573 = vector.broadcast %564 : f32 to vector<16x32xf32>
    %574 = arith.subf %571, %573 : vector<16x32xf32>
    %575 = vector.broadcast %572 : vector<1x32xf32> to vector<16x32xf32>
    %576 = arith.mulf %575, %574 : vector<16x32xf32>
    %577 = vector.broadcast %570 : f32 to vector<16x32xf32>
    %578 = arith.mulf %576, %577 : vector<16x32xf32>
    %579 = vector.extract_strided_slice %447 {offsets = [0, 32], sizes = [1, 32], strides = [1, 1]} : vector<1x64xf32> to vector<1x32xf32>
    %580 = vector.broadcast %579 : vector<1x32xf32> to vector<16x32xf32>
    %581 = arith.addf %578, %580 : vector<16x32xf32>
    %582 = tpu.concatenate %553, %581 in 1 : vector<16x32xf32>, vector<16x32xf32> -> vector<16x64xf32>
    %583 = tpu.concatenate %522, %582 in 0 : vector<16x64xf32>, vector<16x64xf32> -> vector<32x64xf32>
    %584 = vector.extract_strided_slice %443 {offsets = [5, 0], sizes = [1, 64], strides = [1, 1]} : vector<12x64xf32> to vector<1x64xf32>
    %585 = vector.broadcast %584 : vector<1x64xf32> to vector<32x64xf32>
    %586 = arith.mulf %583, %585 : vector<32x64xf32>
    %587 = vector.broadcast %448 : vector<1x64xf32> to vector<32x64xf32>
    %588 = arith.addf %586, %587 : vector<32x64xf32>
    %c1_i32_157 = arith.constant 1 : i32
    %589 = tpu.dynamic_rotate %583 by %c1_i32_157 dim 0 : vector<32x64xf32>, i32 -> vector<32x64xf32>
    %590 = arith.mulf %589, %39 : vector<32x64xf32>
    %591 = vector.extract_strided_slice %443 {offsets = [4, 0], sizes = [1, 64], strides = [1, 1]} : vector<12x64xf32> to vector<1x64xf32>
    %592 = vector.broadcast %591 : vector<1x64xf32> to vector<32x64xf32>
    %593 = arith.mulf %590, %592 : vector<32x64xf32>
    %594 = arith.addf %588, %593 : vector<32x64xf32>
    %c31_i32_158 = arith.constant 31 : i32
    %595 = tpu.dynamic_rotate %583 by %c31_i32_158 dim 0 : vector<32x64xf32>, i32 -> vector<32x64xf32>
    %596 = arith.mulf %595, %51 : vector<32x64xf32>
    %597 = vector.extract_strided_slice %443 {offsets = [6, 0], sizes = [1, 64], strides = [1, 1]} : vector<12x64xf32> to vector<1x64xf32>
    %598 = vector.broadcast %597 : vector<1x64xf32> to vector<32x64xf32>
    %599 = arith.mulf %596, %598 : vector<32x64xf32>
    %600 = arith.addf %594, %599 : vector<32x64xf32>
    %cst_159 = arith.constant 0.000000e+00 : f32
    %601 = vector.broadcast %cst_159 : f32 to vector<32x64xf32>
    %602 = arith.cmpf oge, %600, %601 : vector<32x64xf32>
    %603 = vector.broadcast %449 : vector<1x64xf32> to vector<32x64xf32>
    %604 = arith.mulf %603, %600 : vector<32x64xf32>
    %605 = arith.select %602, %600, %604 : vector<32x64xi1>, vector<32x64xf32>
    %606 = arith.mulf %605, %605 : vector<32x64xf32>
    %607 = tpu.concatenate %605, %606 in 1 : vector<32x64xf32>, vector<32x64xf32> -> vector<32x128xf32>
    %608 = vector.extract_strided_slice %607 {offsets = [0, 0], sizes = [16, 128], strides = [1, 1]} : vector<32x128xf32> to vector<16x128xf32>
    %cst_160 = arith.constant dense<0.000000e+00> : vector<128xf32>
    %609 = vector.multi_reduction <add>, %608, %cst_160 [0] : vector<16x128xf32> to vector<128xf32>
    %610 = vector.shape_cast %609 : vector<128xf32> to vector<1x128xf32>
    %611 = vector.extract_strided_slice %610 {offsets = [0, 0], sizes = [1, 32], strides = [1, 1]} : vector<1x128xf32> to vector<1x32xf32>
    %612 = vector.shape_cast %611 : vector<1x32xf32> to vector<1x1x32xf32>
    %cst_161 = arith.constant dense<0.000000e+00> : vector<1xf32>
    %613 = vector.multi_reduction <add>, %612, %cst_161 [1, 2] : vector<1x1x32xf32> to vector<1xf32>
    %614 = vector.shape_cast %613 : vector<1xf32> to vector<1x1x1xf32>
    %615 = vector.extract %614[0, 0, 0] : f32 from vector<1x1x1xf32>
    %616 = vector.extract_strided_slice %610 {offsets = [0, 64], sizes = [1, 32], strides = [1, 1]} : vector<1x128xf32> to vector<1x32xf32>
    %617 = vector.shape_cast %616 : vector<1x32xf32> to vector<1x1x32xf32>
    %cst_162 = arith.constant dense<0.000000e+00> : vector<1xf32>
    %618 = vector.multi_reduction <add>, %617, %cst_162 [1, 2] : vector<1x1x32xf32> to vector<1xf32>
    %619 = vector.shape_cast %618 : vector<1xf32> to vector<1x1x1xf32>
    %620 = vector.extract %619[0, 0, 0] : f32 from vector<1x1x1xf32>
    %cst_163 = arith.constant 0.001953125 : f32
    %621 = arith.mulf %615, %cst_163 : f32
    %cst_164 = arith.constant 0.001953125 : f32
    %622 = arith.mulf %620, %cst_164 : f32
    %623 = arith.mulf %621, %621 : f32
    %624 = arith.subf %622, %623 : f32
    %cst_165 = arith.constant 0.000000e+00 : f32
    %625 = arith.maximumf %624, %cst_165 : f32
    %cst_166 = arith.constant 9.99999974E-6 : f32
    %626 = arith.addf %625, %cst_166 : f32
    %627 = math.rsqrt %626 : f32
    %628 = vector.extract_strided_slice %605 {offsets = [0, 0], sizes = [16, 32], strides = [1, 1]} : vector<32x64xf32> to vector<16x32xf32>
    %629 = vector.extract_strided_slice %450 {offsets = [0, 0], sizes = [1, 32], strides = [1, 1]} : vector<1x64xf32> to vector<1x32xf32>
    %630 = vector.broadcast %621 : f32 to vector<16x32xf32>
    %631 = arith.subf %628, %630 : vector<16x32xf32>
    %632 = vector.broadcast %629 : vector<1x32xf32> to vector<16x32xf32>
    %633 = arith.mulf %632, %631 : vector<16x32xf32>
    %634 = vector.broadcast %627 : f32 to vector<16x32xf32>
    %635 = arith.mulf %633, %634 : vector<16x32xf32>
    %636 = vector.extract_strided_slice %451 {offsets = [0, 0], sizes = [1, 32], strides = [1, 1]} : vector<1x64xf32> to vector<1x32xf32>
    %637 = vector.broadcast %636 : vector<1x32xf32> to vector<16x32xf32>
    %638 = arith.addf %635, %637 : vector<16x32xf32>
    %639 = vector.extract_strided_slice %610 {offsets = [0, 32], sizes = [1, 32], strides = [1, 1]} : vector<1x128xf32> to vector<1x32xf32>
    %640 = vector.shape_cast %639 : vector<1x32xf32> to vector<1x1x32xf32>
    %cst_167 = arith.constant dense<0.000000e+00> : vector<1xf32>
    %641 = vector.multi_reduction <add>, %640, %cst_167 [1, 2] : vector<1x1x32xf32> to vector<1xf32>
    %642 = vector.shape_cast %641 : vector<1xf32> to vector<1x1x1xf32>
    %643 = vector.extract %642[0, 0, 0] : f32 from vector<1x1x1xf32>
    %644 = vector.extract_strided_slice %610 {offsets = [0, 96], sizes = [1, 32], strides = [1, 1]} : vector<1x128xf32> to vector<1x32xf32>
    %645 = vector.shape_cast %644 : vector<1x32xf32> to vector<1x1x32xf32>
    %cst_168 = arith.constant dense<0.000000e+00> : vector<1xf32>
    %646 = vector.multi_reduction <add>, %645, %cst_168 [1, 2] : vector<1x1x32xf32> to vector<1xf32>
    %647 = vector.shape_cast %646 : vector<1xf32> to vector<1x1x1xf32>
    %648 = vector.extract %647[0, 0, 0] : f32 from vector<1x1x1xf32>
    %cst_169 = arith.constant 0.001953125 : f32
    %649 = arith.mulf %643, %cst_169 : f32
    %cst_170 = arith.constant 0.001953125 : f32
    %650 = arith.mulf %648, %cst_170 : f32
    %651 = arith.mulf %649, %649 : f32
    %652 = arith.subf %650, %651 : f32
    %cst_171 = arith.constant 0.000000e+00 : f32
    %653 = arith.maximumf %652, %cst_171 : f32
    %cst_172 = arith.constant 9.99999974E-6 : f32
    %654 = arith.addf %653, %cst_172 : f32
    %655 = math.rsqrt %654 : f32
    %656 = vector.extract_strided_slice %605 {offsets = [0, 32], sizes = [16, 32], strides = [1, 1]} : vector<32x64xf32> to vector<16x32xf32>
    %657 = vector.extract_strided_slice %450 {offsets = [0, 32], sizes = [1, 32], strides = [1, 1]} : vector<1x64xf32> to vector<1x32xf32>
    %658 = vector.broadcast %649 : f32 to vector<16x32xf32>
    %659 = arith.subf %656, %658 : vector<16x32xf32>
    %660 = vector.broadcast %657 : vector<1x32xf32> to vector<16x32xf32>
    %661 = arith.mulf %660, %659 : vector<16x32xf32>
    %662 = vector.broadcast %655 : f32 to vector<16x32xf32>
    %663 = arith.mulf %661, %662 : vector<16x32xf32>
    %664 = vector.extract_strided_slice %451 {offsets = [0, 32], sizes = [1, 32], strides = [1, 1]} : vector<1x64xf32> to vector<1x32xf32>
    %665 = vector.broadcast %664 : vector<1x32xf32> to vector<16x32xf32>
    %666 = arith.addf %663, %665 : vector<16x32xf32>
    %667 = tpu.concatenate %638, %666 in 1 : vector<16x32xf32>, vector<16x32xf32> -> vector<16x64xf32>
    %668 = vector.extract_strided_slice %607 {offsets = [16, 0], sizes = [16, 128], strides = [1, 1]} : vector<32x128xf32> to vector<16x128xf32>
    %cst_173 = arith.constant dense<0.000000e+00> : vector<128xf32>
    %669 = vector.multi_reduction <add>, %668, %cst_173 [0] : vector<16x128xf32> to vector<128xf32>
    %670 = vector.shape_cast %669 : vector<128xf32> to vector<1x128xf32>
    %671 = vector.extract_strided_slice %670 {offsets = [0, 0], sizes = [1, 32], strides = [1, 1]} : vector<1x128xf32> to vector<1x32xf32>
    %672 = vector.shape_cast %671 : vector<1x32xf32> to vector<1x1x32xf32>
    %cst_174 = arith.constant dense<0.000000e+00> : vector<1xf32>
    %673 = vector.multi_reduction <add>, %672, %cst_174 [1, 2] : vector<1x1x32xf32> to vector<1xf32>
    %674 = vector.shape_cast %673 : vector<1xf32> to vector<1x1x1xf32>
    %675 = vector.extract %674[0, 0, 0] : f32 from vector<1x1x1xf32>
    %676 = vector.extract_strided_slice %670 {offsets = [0, 64], sizes = [1, 32], strides = [1, 1]} : vector<1x128xf32> to vector<1x32xf32>
    %677 = vector.shape_cast %676 : vector<1x32xf32> to vector<1x1x32xf32>
    %cst_175 = arith.constant dense<0.000000e+00> : vector<1xf32>
    %678 = vector.multi_reduction <add>, %677, %cst_175 [1, 2] : vector<1x1x32xf32> to vector<1xf32>
    %679 = vector.shape_cast %678 : vector<1xf32> to vector<1x1x1xf32>
    %680 = vector.extract %679[0, 0, 0] : f32 from vector<1x1x1xf32>
    %cst_176 = arith.constant 0.001953125 : f32
    %681 = arith.mulf %675, %cst_176 : f32
    %cst_177 = arith.constant 0.001953125 : f32
    %682 = arith.mulf %680, %cst_177 : f32
    %683 = arith.mulf %681, %681 : f32
    %684 = arith.subf %682, %683 : f32
    %cst_178 = arith.constant 0.000000e+00 : f32
    %685 = arith.maximumf %684, %cst_178 : f32
    %cst_179 = arith.constant 9.99999974E-6 : f32
    %686 = arith.addf %685, %cst_179 : f32
    %687 = math.rsqrt %686 : f32
    %688 = vector.extract_strided_slice %605 {offsets = [16, 0], sizes = [16, 32], strides = [1, 1]} : vector<32x64xf32> to vector<16x32xf32>
    %689 = vector.extract_strided_slice %450 {offsets = [0, 0], sizes = [1, 32], strides = [1, 1]} : vector<1x64xf32> to vector<1x32xf32>
    %690 = vector.broadcast %681 : f32 to vector<16x32xf32>
    %691 = arith.subf %688, %690 : vector<16x32xf32>
    %692 = vector.broadcast %689 : vector<1x32xf32> to vector<16x32xf32>
    %693 = arith.mulf %692, %691 : vector<16x32xf32>
    %694 = vector.broadcast %687 : f32 to vector<16x32xf32>
    %695 = arith.mulf %693, %694 : vector<16x32xf32>
    %696 = vector.extract_strided_slice %451 {offsets = [0, 0], sizes = [1, 32], strides = [1, 1]} : vector<1x64xf32> to vector<1x32xf32>
    %697 = vector.broadcast %696 : vector<1x32xf32> to vector<16x32xf32>
    %698 = arith.addf %695, %697 : vector<16x32xf32>
    %699 = vector.extract_strided_slice %670 {offsets = [0, 32], sizes = [1, 32], strides = [1, 1]} : vector<1x128xf32> to vector<1x32xf32>
    %700 = vector.shape_cast %699 : vector<1x32xf32> to vector<1x1x32xf32>
    %cst_180 = arith.constant dense<0.000000e+00> : vector<1xf32>
    %701 = vector.multi_reduction <add>, %700, %cst_180 [1, 2] : vector<1x1x32xf32> to vector<1xf32>
    %702 = vector.shape_cast %701 : vector<1xf32> to vector<1x1x1xf32>
    %703 = vector.extract %702[0, 0, 0] : f32 from vector<1x1x1xf32>
    %704 = vector.extract_strided_slice %670 {offsets = [0, 96], sizes = [1, 32], strides = [1, 1]} : vector<1x128xf32> to vector<1x32xf32>
    %705 = vector.shape_cast %704 : vector<1x32xf32> to vector<1x1x32xf32>
    %cst_181 = arith.constant dense<0.000000e+00> : vector<1xf32>
    %706 = vector.multi_reduction <add>, %705, %cst_181 [1, 2] : vector<1x1x32xf32> to vector<1xf32>
    %707 = vector.shape_cast %706 : vector<1xf32> to vector<1x1x1xf32>
    %708 = vector.extract %707[0, 0, 0] : f32 from vector<1x1x1xf32>
    %cst_182 = arith.constant 0.001953125 : f32
    %709 = arith.mulf %703, %cst_182 : f32
    %cst_183 = arith.constant 0.001953125 : f32
    %710 = arith.mulf %708, %cst_183 : f32
    %711 = arith.mulf %709, %709 : f32
    %712 = arith.subf %710, %711 : f32
    %cst_184 = arith.constant 0.000000e+00 : f32
    %713 = arith.maximumf %712, %cst_184 : f32
    %cst_185 = arith.constant 9.99999974E-6 : f32
    %714 = arith.addf %713, %cst_185 : f32
    %715 = math.rsqrt %714 : f32
    %716 = vector.extract_strided_slice %605 {offsets = [16, 32], sizes = [16, 32], strides = [1, 1]} : vector<32x64xf32> to vector<16x32xf32>
    %717 = vector.extract_strided_slice %450 {offsets = [0, 32], sizes = [1, 32], strides = [1, 1]} : vector<1x64xf32> to vector<1x32xf32>
    %718 = vector.broadcast %709 : f32 to vector<16x32xf32>
    %719 = arith.subf %716, %718 : vector<16x32xf32>
    %720 = vector.broadcast %717 : vector<1x32xf32> to vector<16x32xf32>
    %721 = arith.mulf %720, %719 : vector<16x32xf32>
    %722 = vector.broadcast %715 : f32 to vector<16x32xf32>
    %723 = arith.mulf %721, %722 : vector<16x32xf32>
    %724 = vector.extract_strided_slice %451 {offsets = [0, 32], sizes = [1, 32], strides = [1, 1]} : vector<1x64xf32> to vector<1x32xf32>
    %725 = vector.broadcast %724 : vector<1x32xf32> to vector<16x32xf32>
    %726 = arith.addf %723, %725 : vector<16x32xf32>
    %727 = tpu.concatenate %698, %726 in 1 : vector<16x32xf32>, vector<16x32xf32> -> vector<16x64xf32>
    %728 = tpu.concatenate %667, %727 in 0 : vector<16x64xf32>, vector<16x64xf32> -> vector<32x64xf32>
    %cst_186 = arith.constant dense<0.000000e+00> : vector<32x32xf32>
    %729 = tpu.matmul %728, %441, %cst_186 {dimension_numbers = #tpu.dot_dimension_numbers<[1], [0], [0], [1], [0, 0, 1, 1], [], []>} : vector<32x64xf32>, vector<64x32xf32>, vector<32x32xf32> -> vector<32x32xf32>
    %730 = vector.broadcast %452 : vector<1x32xf32> to vector<32x32xf32>
    %731 = arith.addf %729, %730 : vector<32x32xf32>
    %732 = arith.addf %437, %731 : vector<32x32xf32>
    %c1_187 = arith.constant 1 : index
    %c0_188 = arith.constant 0 : index
    %c0_189 = arith.constant 0 : index
    %733 = vector.load %arg15[%c1_187, %c0_188, %c0_189] : memref<2x32x64xf32, #tpu.memory_space<vmem>>, vector<1x32x64xf32>
    %734 = vector.shape_cast %733 : vector<1x32x64xf32> to vector<32x64xf32>
    %c1_190 = arith.constant 1 : index
    %c0_191 = arith.constant 0 : index
    %c0_192 = arith.constant 0 : index
    %735 = vector.load %arg16[%c1_190, %c0_191, %c0_192] : memref<2x64x32xf32, #tpu.memory_space<vmem>>, vector<1x64x32xf32>
    %736 = vector.shape_cast %735 : vector<1x64x32xf32> to vector<64x32xf32>
    %c1_193 = arith.constant 1 : index
    %c0_194 = arith.constant 0 : index
    %c0_195 = arith.constant 0 : index
    %737 = vector.load %arg17[%c1_193, %c0_194, %c0_195] : memref<2x12x64xf32, #tpu.memory_space<vmem>>, vector<1x12x64xf32>
    %738 = vector.shape_cast %737 : vector<1x12x64xf32> to vector<12x64xf32>
    %739 = vector.extract_strided_slice %738 {offsets = [0, 0], sizes = [1, 64], strides = [1, 1]} : vector<12x64xf32> to vector<1x64xf32>
    %740 = vector.extract_strided_slice %738 {offsets = [1, 0], sizes = [1, 64], strides = [1, 1]} : vector<12x64xf32> to vector<1x64xf32>
    %741 = vector.extract_strided_slice %738 {offsets = [2, 0], sizes = [1, 64], strides = [1, 1]} : vector<12x64xf32> to vector<1x64xf32>
    %742 = vector.extract_strided_slice %738 {offsets = [3, 0], sizes = [1, 64], strides = [1, 1]} : vector<12x64xf32> to vector<1x64xf32>
    %743 = vector.extract_strided_slice %738 {offsets = [7, 0], sizes = [1, 64], strides = [1, 1]} : vector<12x64xf32> to vector<1x64xf32>
    %744 = vector.extract_strided_slice %738 {offsets = [8, 0], sizes = [1, 64], strides = [1, 1]} : vector<12x64xf32> to vector<1x64xf32>
    %745 = vector.extract_strided_slice %738 {offsets = [9, 0], sizes = [1, 64], strides = [1, 1]} : vector<12x64xf32> to vector<1x64xf32>
    %746 = vector.extract_strided_slice %738 {offsets = [10, 0], sizes = [1, 64], strides = [1, 1]} : vector<12x64xf32> to vector<1x64xf32>
    %747 = vector.extract_strided_slice %738 {offsets = [11, 0], sizes = [1, 32], strides = [1, 1]} : vector<12x64xf32> to vector<1x32xf32>
    %cst_196 = arith.constant dense<0.000000e+00> : vector<32x64xf32>
    %748 = tpu.matmul %732, %734, %cst_196 {dimension_numbers = #tpu.dot_dimension_numbers<[1], [0], [0], [1], [0, 0, 1, 1], [], []>} : vector<32x32xf32>, vector<32x64xf32>, vector<32x64xf32> -> vector<32x64xf32>
    %749 = vector.broadcast %739 : vector<1x64xf32> to vector<32x64xf32>
    %750 = arith.addf %748, %749 : vector<32x64xf32>
    %cst_197 = arith.constant 0.000000e+00 : f32
    %751 = vector.broadcast %cst_197 : f32 to vector<32x64xf32>
    %752 = arith.cmpf oge, %750, %751 : vector<32x64xf32>
    %753 = vector.broadcast %740 : vector<1x64xf32> to vector<32x64xf32>
    %754 = arith.mulf %753, %750 : vector<32x64xf32>
    %755 = arith.select %752, %750, %754 : vector<32x64xi1>, vector<32x64xf32>
    %756 = arith.mulf %755, %755 : vector<32x64xf32>
    %757 = tpu.concatenate %755, %756 in 1 : vector<32x64xf32>, vector<32x64xf32> -> vector<32x128xf32>
    %758 = vector.extract_strided_slice %757 {offsets = [0, 0], sizes = [16, 128], strides = [1, 1]} : vector<32x128xf32> to vector<16x128xf32>
    %cst_198 = arith.constant dense<0.000000e+00> : vector<128xf32>
    %759 = vector.multi_reduction <add>, %758, %cst_198 [0] : vector<16x128xf32> to vector<128xf32>
    %760 = vector.shape_cast %759 : vector<128xf32> to vector<1x128xf32>
    %761 = vector.extract_strided_slice %760 {offsets = [0, 0], sizes = [1, 32], strides = [1, 1]} : vector<1x128xf32> to vector<1x32xf32>
    %762 = vector.shape_cast %761 : vector<1x32xf32> to vector<1x1x32xf32>
    %cst_199 = arith.constant dense<0.000000e+00> : vector<1xf32>
    %763 = vector.multi_reduction <add>, %762, %cst_199 [1, 2] : vector<1x1x32xf32> to vector<1xf32>
    %764 = vector.shape_cast %763 : vector<1xf32> to vector<1x1x1xf32>
    %765 = vector.extract %764[0, 0, 0] : f32 from vector<1x1x1xf32>
    %766 = vector.extract_strided_slice %760 {offsets = [0, 64], sizes = [1, 32], strides = [1, 1]} : vector<1x128xf32> to vector<1x32xf32>
    %767 = vector.shape_cast %766 : vector<1x32xf32> to vector<1x1x32xf32>
    %cst_200 = arith.constant dense<0.000000e+00> : vector<1xf32>
    %768 = vector.multi_reduction <add>, %767, %cst_200 [1, 2] : vector<1x1x32xf32> to vector<1xf32>
    %769 = vector.shape_cast %768 : vector<1xf32> to vector<1x1x1xf32>
    %770 = vector.extract %769[0, 0, 0] : f32 from vector<1x1x1xf32>
    %cst_201 = arith.constant 0.001953125 : f32
    %771 = arith.mulf %765, %cst_201 : f32
    %cst_202 = arith.constant 0.001953125 : f32
    %772 = arith.mulf %770, %cst_202 : f32
    %773 = arith.mulf %771, %771 : f32
    %774 = arith.subf %772, %773 : f32
    %cst_203 = arith.constant 0.000000e+00 : f32
    %775 = arith.maximumf %774, %cst_203 : f32
    %cst_204 = arith.constant 9.99999974E-6 : f32
    %776 = arith.addf %775, %cst_204 : f32
    %777 = math.rsqrt %776 : f32
    %778 = vector.extract_strided_slice %755 {offsets = [0, 0], sizes = [16, 32], strides = [1, 1]} : vector<32x64xf32> to vector<16x32xf32>
    %779 = vector.extract_strided_slice %741 {offsets = [0, 0], sizes = [1, 32], strides = [1, 1]} : vector<1x64xf32> to vector<1x32xf32>
    %780 = vector.broadcast %771 : f32 to vector<16x32xf32>
    %781 = arith.subf %778, %780 : vector<16x32xf32>
    %782 = vector.broadcast %779 : vector<1x32xf32> to vector<16x32xf32>
    %783 = arith.mulf %782, %781 : vector<16x32xf32>
    %784 = vector.broadcast %777 : f32 to vector<16x32xf32>
    %785 = arith.mulf %783, %784 : vector<16x32xf32>
    %786 = vector.extract_strided_slice %742 {offsets = [0, 0], sizes = [1, 32], strides = [1, 1]} : vector<1x64xf32> to vector<1x32xf32>
    %787 = vector.broadcast %786 : vector<1x32xf32> to vector<16x32xf32>
    %788 = arith.addf %785, %787 : vector<16x32xf32>
    %789 = vector.extract_strided_slice %760 {offsets = [0, 32], sizes = [1, 32], strides = [1, 1]} : vector<1x128xf32> to vector<1x32xf32>
    %790 = vector.shape_cast %789 : vector<1x32xf32> to vector<1x1x32xf32>
    %cst_205 = arith.constant dense<0.000000e+00> : vector<1xf32>
    %791 = vector.multi_reduction <add>, %790, %cst_205 [1, 2] : vector<1x1x32xf32> to vector<1xf32>
    %792 = vector.shape_cast %791 : vector<1xf32> to vector<1x1x1xf32>
    %793 = vector.extract %792[0, 0, 0] : f32 from vector<1x1x1xf32>
    %794 = vector.extract_strided_slice %760 {offsets = [0, 96], sizes = [1, 32], strides = [1, 1]} : vector<1x128xf32> to vector<1x32xf32>
    %795 = vector.shape_cast %794 : vector<1x32xf32> to vector<1x1x32xf32>
    %cst_206 = arith.constant dense<0.000000e+00> : vector<1xf32>
    %796 = vector.multi_reduction <add>, %795, %cst_206 [1, 2] : vector<1x1x32xf32> to vector<1xf32>
    %797 = vector.shape_cast %796 : vector<1xf32> to vector<1x1x1xf32>
    %798 = vector.extract %797[0, 0, 0] : f32 from vector<1x1x1xf32>
    %cst_207 = arith.constant 0.001953125 : f32
    %799 = arith.mulf %793, %cst_207 : f32
    %cst_208 = arith.constant 0.001953125 : f32
    %800 = arith.mulf %798, %cst_208 : f32
    %801 = arith.mulf %799, %799 : f32
    %802 = arith.subf %800, %801 : f32
    %cst_209 = arith.constant 0.000000e+00 : f32
    %803 = arith.maximumf %802, %cst_209 : f32
    %cst_210 = arith.constant 9.99999974E-6 : f32
    %804 = arith.addf %803, %cst_210 : f32
    %805 = math.rsqrt %804 : f32
    %806 = vector.extract_strided_slice %755 {offsets = [0, 32], sizes = [16, 32], strides = [1, 1]} : vector<32x64xf32> to vector<16x32xf32>
    %807 = vector.extract_strided_slice %741 {offsets = [0, 32], sizes = [1, 32], strides = [1, 1]} : vector<1x64xf32> to vector<1x32xf32>
    %808 = vector.broadcast %799 : f32 to vector<16x32xf32>
    %809 = arith.subf %806, %808 : vector<16x32xf32>
    %810 = vector.broadcast %807 : vector<1x32xf32> to vector<16x32xf32>
    %811 = arith.mulf %810, %809 : vector<16x32xf32>
    %812 = vector.broadcast %805 : f32 to vector<16x32xf32>
    %813 = arith.mulf %811, %812 : vector<16x32xf32>
    %814 = vector.extract_strided_slice %742 {offsets = [0, 32], sizes = [1, 32], strides = [1, 1]} : vector<1x64xf32> to vector<1x32xf32>
    %815 = vector.broadcast %814 : vector<1x32xf32> to vector<16x32xf32>
    %816 = arith.addf %813, %815 : vector<16x32xf32>
    %817 = tpu.concatenate %788, %816 in 1 : vector<16x32xf32>, vector<16x32xf32> -> vector<16x64xf32>
    %818 = vector.extract_strided_slice %757 {offsets = [16, 0], sizes = [16, 128], strides = [1, 1]} : vector<32x128xf32> to vector<16x128xf32>
    %cst_211 = arith.constant dense<0.000000e+00> : vector<128xf32>
    %819 = vector.multi_reduction <add>, %818, %cst_211 [0] : vector<16x128xf32> to vector<128xf32>
    %820 = vector.shape_cast %819 : vector<128xf32> to vector<1x128xf32>
    %821 = vector.extract_strided_slice %820 {offsets = [0, 0], sizes = [1, 32], strides = [1, 1]} : vector<1x128xf32> to vector<1x32xf32>
    %822 = vector.shape_cast %821 : vector<1x32xf32> to vector<1x1x32xf32>
    %cst_212 = arith.constant dense<0.000000e+00> : vector<1xf32>
    %823 = vector.multi_reduction <add>, %822, %cst_212 [1, 2] : vector<1x1x32xf32> to vector<1xf32>
    %824 = vector.shape_cast %823 : vector<1xf32> to vector<1x1x1xf32>
    %825 = vector.extract %824[0, 0, 0] : f32 from vector<1x1x1xf32>
    %826 = vector.extract_strided_slice %820 {offsets = [0, 64], sizes = [1, 32], strides = [1, 1]} : vector<1x128xf32> to vector<1x32xf32>
    %827 = vector.shape_cast %826 : vector<1x32xf32> to vector<1x1x32xf32>
    %cst_213 = arith.constant dense<0.000000e+00> : vector<1xf32>
    %828 = vector.multi_reduction <add>, %827, %cst_213 [1, 2] : vector<1x1x32xf32> to vector<1xf32>
    %829 = vector.shape_cast %828 : vector<1xf32> to vector<1x1x1xf32>
    %830 = vector.extract %829[0, 0, 0] : f32 from vector<1x1x1xf32>
    %cst_214 = arith.constant 0.001953125 : f32
    %831 = arith.mulf %825, %cst_214 : f32
    %cst_215 = arith.constant 0.001953125 : f32
    %832 = arith.mulf %830, %cst_215 : f32
    %833 = arith.mulf %831, %831 : f32
    %834 = arith.subf %832, %833 : f32
    %cst_216 = arith.constant 0.000000e+00 : f32
    %835 = arith.maximumf %834, %cst_216 : f32
    %cst_217 = arith.constant 9.99999974E-6 : f32
    %836 = arith.addf %835, %cst_217 : f32
    %837 = math.rsqrt %836 : f32
    %838 = vector.extract_strided_slice %755 {offsets = [16, 0], sizes = [16, 32], strides = [1, 1]} : vector<32x64xf32> to vector<16x32xf32>
    %839 = vector.extract_strided_slice %741 {offsets = [0, 0], sizes = [1, 32], strides = [1, 1]} : vector<1x64xf32> to vector<1x32xf32>
    %840 = vector.broadcast %831 : f32 to vector<16x32xf32>
    %841 = arith.subf %838, %840 : vector<16x32xf32>
    %842 = vector.broadcast %839 : vector<1x32xf32> to vector<16x32xf32>
    %843 = arith.mulf %842, %841 : vector<16x32xf32>
    %844 = vector.broadcast %837 : f32 to vector<16x32xf32>
    %845 = arith.mulf %843, %844 : vector<16x32xf32>
    %846 = vector.extract_strided_slice %742 {offsets = [0, 0], sizes = [1, 32], strides = [1, 1]} : vector<1x64xf32> to vector<1x32xf32>
    %847 = vector.broadcast %846 : vector<1x32xf32> to vector<16x32xf32>
    %848 = arith.addf %845, %847 : vector<16x32xf32>
    %849 = vector.extract_strided_slice %820 {offsets = [0, 32], sizes = [1, 32], strides = [1, 1]} : vector<1x128xf32> to vector<1x32xf32>
    %850 = vector.shape_cast %849 : vector<1x32xf32> to vector<1x1x32xf32>
    %cst_218 = arith.constant dense<0.000000e+00> : vector<1xf32>
    %851 = vector.multi_reduction <add>, %850, %cst_218 [1, 2] : vector<1x1x32xf32> to vector<1xf32>
    %852 = vector.shape_cast %851 : vector<1xf32> to vector<1x1x1xf32>
    %853 = vector.extract %852[0, 0, 0] : f32 from vector<1x1x1xf32>
    %854 = vector.extract_strided_slice %820 {offsets = [0, 96], sizes = [1, 32], strides = [1, 1]} : vector<1x128xf32> to vector<1x32xf32>
    %855 = vector.shape_cast %854 : vector<1x32xf32> to vector<1x1x32xf32>
    %cst_219 = arith.constant dense<0.000000e+00> : vector<1xf32>
    %856 = vector.multi_reduction <add>, %855, %cst_219 [1, 2] : vector<1x1x32xf32> to vector<1xf32>
    %857 = vector.shape_cast %856 : vector<1xf32> to vector<1x1x1xf32>
    %858 = vector.extract %857[0, 0, 0] : f32 from vector<1x1x1xf32>
    %cst_220 = arith.constant 0.001953125 : f32
    %859 = arith.mulf %853, %cst_220 : f32
    %cst_221 = arith.constant 0.001953125 : f32
    %860 = arith.mulf %858, %cst_221 : f32
    %861 = arith.mulf %859, %859 : f32
    %862 = arith.subf %860, %861 : f32
    %cst_222 = arith.constant 0.000000e+00 : f32
    %863 = arith.maximumf %862, %cst_222 : f32
    %cst_223 = arith.constant 9.99999974E-6 : f32
    %864 = arith.addf %863, %cst_223 : f32
    %865 = math.rsqrt %864 : f32
    %866 = vector.extract_strided_slice %755 {offsets = [16, 32], sizes = [16, 32], strides = [1, 1]} : vector<32x64xf32> to vector<16x32xf32>
    %867 = vector.extract_strided_slice %741 {offsets = [0, 32], sizes = [1, 32], strides = [1, 1]} : vector<1x64xf32> to vector<1x32xf32>
    %868 = vector.broadcast %859 : f32 to vector<16x32xf32>
    %869 = arith.subf %866, %868 : vector<16x32xf32>
    %870 = vector.broadcast %867 : vector<1x32xf32> to vector<16x32xf32>
    %871 = arith.mulf %870, %869 : vector<16x32xf32>
    %872 = vector.broadcast %865 : f32 to vector<16x32xf32>
    %873 = arith.mulf %871, %872 : vector<16x32xf32>
    %874 = vector.extract_strided_slice %742 {offsets = [0, 32], sizes = [1, 32], strides = [1, 1]} : vector<1x64xf32> to vector<1x32xf32>
    %875 = vector.broadcast %874 : vector<1x32xf32> to vector<16x32xf32>
    %876 = arith.addf %873, %875 : vector<16x32xf32>
    %877 = tpu.concatenate %848, %876 in 1 : vector<16x32xf32>, vector<16x32xf32> -> vector<16x64xf32>
    %878 = tpu.concatenate %817, %877 in 0 : vector<16x64xf32>, vector<16x64xf32> -> vector<32x64xf32>
    %879 = vector.extract_strided_slice %738 {offsets = [5, 0], sizes = [1, 64], strides = [1, 1]} : vector<12x64xf32> to vector<1x64xf32>
    %880 = vector.broadcast %879 : vector<1x64xf32> to vector<32x64xf32>
    %881 = arith.mulf %878, %880 : vector<32x64xf32>
    %882 = vector.broadcast %743 : vector<1x64xf32> to vector<32x64xf32>
    %883 = arith.addf %881, %882 : vector<32x64xf32>
    %c2_i32_224 = arith.constant 2 : i32
    %884 = tpu.dynamic_rotate %878 by %c2_i32_224 dim 0 : vector<32x64xf32>, i32 -> vector<32x64xf32>
    %885 = arith.mulf %884, %27 : vector<32x64xf32>
    %886 = vector.extract_strided_slice %738 {offsets = [4, 0], sizes = [1, 64], strides = [1, 1]} : vector<12x64xf32> to vector<1x64xf32>
    %887 = vector.broadcast %886 : vector<1x64xf32> to vector<32x64xf32>
    %888 = arith.mulf %885, %887 : vector<32x64xf32>
    %889 = arith.addf %883, %888 : vector<32x64xf32>
    %c30_i32_225 = arith.constant 30 : i32
    %890 = tpu.dynamic_rotate %878 by %c30_i32_225 dim 0 : vector<32x64xf32>, i32 -> vector<32x64xf32>
    %891 = arith.mulf %890, %63 : vector<32x64xf32>
    %892 = vector.extract_strided_slice %738 {offsets = [6, 0], sizes = [1, 64], strides = [1, 1]} : vector<12x64xf32> to vector<1x64xf32>
    %893 = vector.broadcast %892 : vector<1x64xf32> to vector<32x64xf32>
    %894 = arith.mulf %891, %893 : vector<32x64xf32>
    %895 = arith.addf %889, %894 : vector<32x64xf32>
    %cst_226 = arith.constant 0.000000e+00 : f32
    %896 = vector.broadcast %cst_226 : f32 to vector<32x64xf32>
    %897 = arith.cmpf oge, %895, %896 : vector<32x64xf32>
    %898 = vector.broadcast %744 : vector<1x64xf32> to vector<32x64xf32>
    %899 = arith.mulf %898, %895 : vector<32x64xf32>
    %900 = arith.select %897, %895, %899 : vector<32x64xi1>, vector<32x64xf32>
    %901 = arith.mulf %900, %900 : vector<32x64xf32>
    %902 = tpu.concatenate %900, %901 in 1 : vector<32x64xf32>, vector<32x64xf32> -> vector<32x128xf32>
    %903 = vector.extract_strided_slice %902 {offsets = [0, 0], sizes = [16, 128], strides = [1, 1]} : vector<32x128xf32> to vector<16x128xf32>
    %cst_227 = arith.constant dense<0.000000e+00> : vector<128xf32>
    %904 = vector.multi_reduction <add>, %903, %cst_227 [0] : vector<16x128xf32> to vector<128xf32>
    %905 = vector.shape_cast %904 : vector<128xf32> to vector<1x128xf32>
    %906 = vector.extract_strided_slice %905 {offsets = [0, 0], sizes = [1, 32], strides = [1, 1]} : vector<1x128xf32> to vector<1x32xf32>
    %907 = vector.shape_cast %906 : vector<1x32xf32> to vector<1x1x32xf32>
    %cst_228 = arith.constant dense<0.000000e+00> : vector<1xf32>
    %908 = vector.multi_reduction <add>, %907, %cst_228 [1, 2] : vector<1x1x32xf32> to vector<1xf32>
    %909 = vector.shape_cast %908 : vector<1xf32> to vector<1x1x1xf32>
    %910 = vector.extract %909[0, 0, 0] : f32 from vector<1x1x1xf32>
    %911 = vector.extract_strided_slice %905 {offsets = [0, 64], sizes = [1, 32], strides = [1, 1]} : vector<1x128xf32> to vector<1x32xf32>
    %912 = vector.shape_cast %911 : vector<1x32xf32> to vector<1x1x32xf32>
    %cst_229 = arith.constant dense<0.000000e+00> : vector<1xf32>
    %913 = vector.multi_reduction <add>, %912, %cst_229 [1, 2] : vector<1x1x32xf32> to vector<1xf32>
    %914 = vector.shape_cast %913 : vector<1xf32> to vector<1x1x1xf32>
    %915 = vector.extract %914[0, 0, 0] : f32 from vector<1x1x1xf32>
    %cst_230 = arith.constant 0.001953125 : f32
    %916 = arith.mulf %910, %cst_230 : f32
    %cst_231 = arith.constant 0.001953125 : f32
    %917 = arith.mulf %915, %cst_231 : f32
    %918 = arith.mulf %916, %916 : f32
    %919 = arith.subf %917, %918 : f32
    %cst_232 = arith.constant 0.000000e+00 : f32
    %920 = arith.maximumf %919, %cst_232 : f32
    %cst_233 = arith.constant 9.99999974E-6 : f32
    %921 = arith.addf %920, %cst_233 : f32
    %922 = math.rsqrt %921 : f32
    %923 = vector.extract_strided_slice %900 {offsets = [0, 0], sizes = [16, 32], strides = [1, 1]} : vector<32x64xf32> to vector<16x32xf32>
    %924 = vector.extract_strided_slice %745 {offsets = [0, 0], sizes = [1, 32], strides = [1, 1]} : vector<1x64xf32> to vector<1x32xf32>
    %925 = vector.broadcast %916 : f32 to vector<16x32xf32>
    %926 = arith.subf %923, %925 : vector<16x32xf32>
    %927 = vector.broadcast %924 : vector<1x32xf32> to vector<16x32xf32>
    %928 = arith.mulf %927, %926 : vector<16x32xf32>
    %929 = vector.broadcast %922 : f32 to vector<16x32xf32>
    %930 = arith.mulf %928, %929 : vector<16x32xf32>
    %931 = vector.extract_strided_slice %746 {offsets = [0, 0], sizes = [1, 32], strides = [1, 1]} : vector<1x64xf32> to vector<1x32xf32>
    %932 = vector.broadcast %931 : vector<1x32xf32> to vector<16x32xf32>
    %933 = arith.addf %930, %932 : vector<16x32xf32>
    %934 = vector.extract_strided_slice %905 {offsets = [0, 32], sizes = [1, 32], strides = [1, 1]} : vector<1x128xf32> to vector<1x32xf32>
    %935 = vector.shape_cast %934 : vector<1x32xf32> to vector<1x1x32xf32>
    %cst_234 = arith.constant dense<0.000000e+00> : vector<1xf32>
    %936 = vector.multi_reduction <add>, %935, %cst_234 [1, 2] : vector<1x1x32xf32> to vector<1xf32>
    %937 = vector.shape_cast %936 : vector<1xf32> to vector<1x1x1xf32>
    %938 = vector.extract %937[0, 0, 0] : f32 from vector<1x1x1xf32>
    %939 = vector.extract_strided_slice %905 {offsets = [0, 96], sizes = [1, 32], strides = [1, 1]} : vector<1x128xf32> to vector<1x32xf32>
    %940 = vector.shape_cast %939 : vector<1x32xf32> to vector<1x1x32xf32>
    %cst_235 = arith.constant dense<0.000000e+00> : vector<1xf32>
    %941 = vector.multi_reduction <add>, %940, %cst_235 [1, 2] : vector<1x1x32xf32> to vector<1xf32>
    %942 = vector.shape_cast %941 : vector<1xf32> to vector<1x1x1xf32>
    %943 = vector.extract %942[0, 0, 0] : f32 from vector<1x1x1xf32>
    %cst_236 = arith.constant 0.001953125 : f32
    %944 = arith.mulf %938, %cst_236 : f32
    %cst_237 = arith.constant 0.001953125 : f32
    %945 = arith.mulf %943, %cst_237 : f32
    %946 = arith.mulf %944, %944 : f32
    %947 = arith.subf %945, %946 : f32
    %cst_238 = arith.constant 0.000000e+00 : f32
    %948 = arith.maximumf %947, %cst_238 : f32
    %cst_239 = arith.constant 9.99999974E-6 : f32
    %949 = arith.addf %948, %cst_239 : f32
    %950 = math.rsqrt %949 : f32
    %951 = vector.extract_strided_slice %900 {offsets = [0, 32], sizes = [16, 32], strides = [1, 1]} : vector<32x64xf32> to vector<16x32xf32>
    %952 = vector.extract_strided_slice %745 {offsets = [0, 32], sizes = [1, 32], strides = [1, 1]} : vector<1x64xf32> to vector<1x32xf32>
    %953 = vector.broadcast %944 : f32 to vector<16x32xf32>
    %954 = arith.subf %951, %953 : vector<16x32xf32>
    %955 = vector.broadcast %952 : vector<1x32xf32> to vector<16x32xf32>
    %956 = arith.mulf %955, %954 : vector<16x32xf32>
    %957 = vector.broadcast %950 : f32 to vector<16x32xf32>
    %958 = arith.mulf %956, %957 : vector<16x32xf32>
    %959 = vector.extract_strided_slice %746 {offsets = [0, 32], sizes = [1, 32], strides = [1, 1]} : vector<1x64xf32> to vector<1x32xf32>
    %960 = vector.broadcast %959 : vector<1x32xf32> to vector<16x32xf32>
    %961 = arith.addf %958, %960 : vector<16x32xf32>
    %962 = tpu.concatenate %933, %961 in 1 : vector<16x32xf32>, vector<16x32xf32> -> vector<16x64xf32>
    %963 = vector.extract_strided_slice %902 {offsets = [16, 0], sizes = [16, 128], strides = [1, 1]} : vector<32x128xf32> to vector<16x128xf32>
    %cst_240 = arith.constant dense<0.000000e+00> : vector<128xf32>
    %964 = vector.multi_reduction <add>, %963, %cst_240 [0] : vector<16x128xf32> to vector<128xf32>
    %965 = vector.shape_cast %964 : vector<128xf32> to vector<1x128xf32>
    %966 = vector.extract_strided_slice %965 {offsets = [0, 0], sizes = [1, 32], strides = [1, 1]} : vector<1x128xf32> to vector<1x32xf32>
    %967 = vector.shape_cast %966 : vector<1x32xf32> to vector<1x1x32xf32>
    %cst_241 = arith.constant dense<0.000000e+00> : vector<1xf32>
    %968 = vector.multi_reduction <add>, %967, %cst_241 [1, 2] : vector<1x1x32xf32> to vector<1xf32>
    %969 = vector.shape_cast %968 : vector<1xf32> to vector<1x1x1xf32>
    %970 = vector.extract %969[0, 0, 0] : f32 from vector<1x1x1xf32>
    %971 = vector.extract_strided_slice %965 {offsets = [0, 64], sizes = [1, 32], strides = [1, 1]} : vector<1x128xf32> to vector<1x32xf32>
    %972 = vector.shape_cast %971 : vector<1x32xf32> to vector<1x1x32xf32>
    %cst_242 = arith.constant dense<0.000000e+00> : vector<1xf32>
    %973 = vector.multi_reduction <add>, %972, %cst_242 [1, 2] : vector<1x1x32xf32> to vector<1xf32>
    %974 = vector.shape_cast %973 : vector<1xf32> to vector<1x1x1xf32>
    %975 = vector.extract %974[0, 0, 0] : f32 from vector<1x1x1xf32>
    %cst_243 = arith.constant 0.001953125 : f32
    %976 = arith.mulf %970, %cst_243 : f32
    %cst_244 = arith.constant 0.001953125 : f32
    %977 = arith.mulf %975, %cst_244 : f32
    %978 = arith.mulf %976, %976 : f32
    %979 = arith.subf %977, %978 : f32
    %cst_245 = arith.constant 0.000000e+00 : f32
    %980 = arith.maximumf %979, %cst_245 : f32
    %cst_246 = arith.constant 9.99999974E-6 : f32
    %981 = arith.addf %980, %cst_246 : f32
    %982 = math.rsqrt %981 : f32
    %983 = vector.extract_strided_slice %900 {offsets = [16, 0], sizes = [16, 32], strides = [1, 1]} : vector<32x64xf32> to vector<16x32xf32>
    %984 = vector.extract_strided_slice %745 {offsets = [0, 0], sizes = [1, 32], strides = [1, 1]} : vector<1x64xf32> to vector<1x32xf32>
    %985 = vector.broadcast %976 : f32 to vector<16x32xf32>
    %986 = arith.subf %983, %985 : vector<16x32xf32>
    %987 = vector.broadcast %984 : vector<1x32xf32> to vector<16x32xf32>
    %988 = arith.mulf %987, %986 : vector<16x32xf32>
    %989 = vector.broadcast %982 : f32 to vector<16x32xf32>
    %990 = arith.mulf %988, %989 : vector<16x32xf32>
    %991 = vector.extract_strided_slice %746 {offsets = [0, 0], sizes = [1, 32], strides = [1, 1]} : vector<1x64xf32> to vector<1x32xf32>
    %992 = vector.broadcast %991 : vector<1x32xf32> to vector<16x32xf32>
    %993 = arith.addf %990, %992 : vector<16x32xf32>
    %994 = vector.extract_strided_slice %965 {offsets = [0, 32], sizes = [1, 32], strides = [1, 1]} : vector<1x128xf32> to vector<1x32xf32>
    %995 = vector.shape_cast %994 : vector<1x32xf32> to vector<1x1x32xf32>
    %cst_247 = arith.constant dense<0.000000e+00> : vector<1xf32>
    %996 = vector.multi_reduction <add>, %995, %cst_247 [1, 2] : vector<1x1x32xf32> to vector<1xf32>
    %997 = vector.shape_cast %996 : vector<1xf32> to vector<1x1x1xf32>
    %998 = vector.extract %997[0, 0, 0] : f32 from vector<1x1x1xf32>
    %999 = vector.extract_strided_slice %965 {offsets = [0, 96], sizes = [1, 32], strides = [1, 1]} : vector<1x128xf32> to vector<1x32xf32>
    %1000 = vector.shape_cast %999 : vector<1x32xf32> to vector<1x1x32xf32>
    %cst_248 = arith.constant dense<0.000000e+00> : vector<1xf32>
    %1001 = vector.multi_reduction <add>, %1000, %cst_248 [1, 2] : vector<1x1x32xf32> to vector<1xf32>
    %1002 = vector.shape_cast %1001 : vector<1xf32> to vector<1x1x1xf32>
    %1003 = vector.extract %1002[0, 0, 0] : f32 from vector<1x1x1xf32>
    %cst_249 = arith.constant 0.001953125 : f32
    %1004 = arith.mulf %998, %cst_249 : f32
    %cst_250 = arith.constant 0.001953125 : f32
    %1005 = arith.mulf %1003, %cst_250 : f32
    %1006 = arith.mulf %1004, %1004 : f32
    %1007 = arith.subf %1005, %1006 : f32
    %cst_251 = arith.constant 0.000000e+00 : f32
    %1008 = arith.maximumf %1007, %cst_251 : f32
    %cst_252 = arith.constant 9.99999974E-6 : f32
    %1009 = arith.addf %1008, %cst_252 : f32
    %1010 = math.rsqrt %1009 : f32
    %1011 = vector.extract_strided_slice %900 {offsets = [16, 32], sizes = [16, 32], strides = [1, 1]} : vector<32x64xf32> to vector<16x32xf32>
    %1012 = vector.extract_strided_slice %745 {offsets = [0, 32], sizes = [1, 32], strides = [1, 1]} : vector<1x64xf32> to vector<1x32xf32>
    %1013 = vector.broadcast %1004 : f32 to vector<16x32xf32>
    %1014 = arith.subf %1011, %1013 : vector<16x32xf32>
    %1015 = vector.broadcast %1012 : vector<1x32xf32> to vector<16x32xf32>
    %1016 = arith.mulf %1015, %1014 : vector<16x32xf32>
    %1017 = vector.broadcast %1010 : f32 to vector<16x32xf32>
    %1018 = arith.mulf %1016, %1017 : vector<16x32xf32>
    %1019 = vector.extract_strided_slice %746 {offsets = [0, 32], sizes = [1, 32], strides = [1, 1]} : vector<1x64xf32> to vector<1x32xf32>
    %1020 = vector.broadcast %1019 : vector<1x32xf32> to vector<16x32xf32>
    %1021 = arith.addf %1018, %1020 : vector<16x32xf32>
    %1022 = tpu.concatenate %993, %1021 in 1 : vector<16x32xf32>, vector<16x32xf32> -> vector<16x64xf32>
    %1023 = tpu.concatenate %962, %1022 in 0 : vector<16x64xf32>, vector<16x64xf32> -> vector<32x64xf32>
    %cst_253 = arith.constant dense<0.000000e+00> : vector<32x32xf32>
    %1024 = tpu.matmul %1023, %736, %cst_253 {dimension_numbers = #tpu.dot_dimension_numbers<[1], [0], [0], [1], [0, 0, 1, 1], [], []>} : vector<32x64xf32>, vector<64x32xf32>, vector<32x32xf32> -> vector<32x32xf32>
    %1025 = vector.broadcast %747 : vector<1x32xf32> to vector<32x32xf32>
    %1026 = arith.addf %1024, %1025 : vector<32x32xf32>
    %1027 = arith.addf %732, %1026 : vector<32x32xf32>
    %c0_254 = arith.constant 0 : index
    %c0_255 = arith.constant 0 : index
    %1028 = vector.load %arg10[%c0_254, %c0_255] : memref<32x32xf32, #tpu.memory_space<vmem>>, vector<32x32xf32>
    %cst_256 = arith.constant dense<0.000000e+00> : vector<32x32xf32>
    %1029 = tpu.matmul %1027, %1028, %cst_256 {dimension_numbers = #tpu.dot_dimension_numbers<[1], [0], [0], [1], [0, 0, 1, 1], [], []>} : vector<32x32xf32>, vector<32x32xf32>, vector<32x32xf32> -> vector<32x32xf32>
    %1030 = vector.broadcast %69 : vector<1x32xf32> to vector<32x32xf32>
    %1031 = arith.addf %1029, %1030 : vector<32x32xf32>
    %cst_257 = arith.constant 0.000000e+00 : f32
    %1032 = vector.broadcast %cst_257 : f32 to vector<32x32xf32>
    %1033 = arith.maximumf %1031, %1032 : vector<32x32xf32>
    %1034 = vector.extract_strided_slice %1033 {offsets = [0, 0], sizes = [32, 8], strides = [1, 1]} : vector<32x32xf32> to vector<32x8xf32>
    %1035 = vector.extract_strided_slice %1033 {offsets = [0, 8], sizes = [32, 8], strides = [1, 1]} : vector<32x32xf32> to vector<32x8xf32>
    %1036 = vector.extract_strided_slice %1033 {offsets = [0, 16], sizes = [32, 8], strides = [1, 1]} : vector<32x32xf32> to vector<32x8xf32>
    %1037 = vector.extract_strided_slice %1033 {offsets = [0, 24], sizes = [32, 8], strides = [1, 1]} : vector<32x32xf32> to vector<32x8xf32>
    %c0_258 = arith.constant 0 : index
    %c0_259 = arith.constant 0 : index
    %1038 = vector.load %arg3[%c0_258, %c0_259] : memref<32x32xf32, #tpu.memory_space<vmem>>, vector<32x32xf32>
    %1039 = vector.extract_strided_slice %1038 {offsets = [0, 0], sizes = [32, 16], strides = [1, 1]} : vector<32x32xf32> to vector<32x16xf32>
    %1040 = vector.extract_strided_slice %1038 {offsets = [0, 16], sizes = [32, 16], strides = [1, 1]} : vector<32x32xf32> to vector<32x16xf32>
    %1041 = tpu.concatenate %1034, %1034 in 1 : vector<32x8xf32>, vector<32x8xf32> -> vector<32x16xf32>
    %1042 = tpu.concatenate %1035, %1035 in 1 : vector<32x8xf32>, vector<32x8xf32> -> vector<32x16xf32>
    %1043 = tpu.concatenate %1036, %1036 in 1 : vector<32x8xf32>, vector<32x8xf32> -> vector<32x16xf32>
    %1044 = tpu.concatenate %1037, %1037 in 1 : vector<32x8xf32>, vector<32x8xf32> -> vector<32x16xf32>
    %1045 = arith.mulf %1041, %1039 : vector<32x16xf32>
    %1046 = arith.mulf %1042, %1040 : vector<32x16xf32>
    %1047 = arith.subf %1045, %1046 : vector<32x16xf32>
    %1048 = arith.mulf %1041, %1040 : vector<32x16xf32>
    %1049 = arith.mulf %1042, %1039 : vector<32x16xf32>
    %1050 = arith.addf %1048, %1049 : vector<32x16xf32>
    %cst_260 = arith.constant 1.000000e-10 : f32
    %1051 = vector.broadcast %cst_260 : f32 to vector<32x16xf32>
    %1052 = arith.addf %1050, %1051 : vector<32x16xf32>
    %1053 = arith.mulf %1043, %1039 : vector<32x16xf32>
    %1054 = arith.mulf %1044, %1040 : vector<32x16xf32>
    %1055 = arith.subf %1053, %1054 : vector<32x16xf32>
    %1056 = arith.mulf %1043, %1040 : vector<32x16xf32>
    %1057 = arith.mulf %1044, %1039 : vector<32x16xf32>
    %1058 = arith.addf %1056, %1057 : vector<32x16xf32>
    %cst_261 = arith.constant 1.000000e-10 : f32
    %1059 = vector.broadcast %cst_261 : f32 to vector<32x16xf32>
    %1060 = arith.addf %1058, %1059 : vector<32x16xf32>
    %1061 = vector.extract_strided_slice %1047 {offsets = [0, 0], sizes = [32, 8], strides = [1, 1]} : vector<32x16xf32> to vector<32x8xf32>
    %1062 = arith.mulf %1061, %1061 : vector<32x8xf32>
    %1063 = vector.extract_strided_slice %1052 {offsets = [0, 0], sizes = [32, 8], strides = [1, 1]} : vector<32x16xf32> to vector<32x8xf32>
    %1064 = arith.mulf %1063, %1063 : vector<32x8xf32>
    %1065 = arith.addf %1062, %1064 : vector<32x8xf32>
    %1066 = math.sqrt %1065 : vector<32x8xf32>
    %1067 = tpu.concatenate %1047, %1052, %1055, %1060, %1066 in 1 : vector<32x16xf32>, vector<32x16xf32>, vector<32x16xf32>, vector<32x16xf32>, vector<32x8xf32> -> vector<32x72xf32>
    %c0_262 = arith.constant 0 : index
    %c0_263 = arith.constant 0 : index
    %1068 = vector.load %arg18[%c0_262, %c0_263] : memref<32x72xf32, #tpu.memory_space<vmem>>, vector<32x72xf32>
    tpu.vector_store %arg18[%c0_262, %c0_263], %1067 {strides = array<i32>} : memref<32x72xf32, #tpu.memory_space<vmem>>, vector<32x72xf32>,
    return
  }
  func.func @transform_0(%arg0: i32) -> (i32, i32) {
    %c0_i32 = arith.constant 0 : i32
    %c0_i32_0 = arith.constant 0 : i32
    %c0_i32_1 = arith.constant 0 : i32
    return %c0_i32, %c0_i32_0 : i32, i32
  }
  func.func @transform_1(%arg0: i32) -> (i32, i32) {
    %c0_i32 = arith.constant 0 : i32
    %c0_i32_0 = arith.constant 0 : i32
    %c0_i32_1 = arith.constant 0 : i32
    return %c0_i32, %c0_i32_0 : i32, i32
  }
  func.func @transform_2(%arg0: i32) -> (i32, i32) {
    %c0_i32 = arith.constant 0 : i32
    %c0_i32_0 = arith.constant 0 : i32
    %c0_i32_1 = arith.constant 0 : i32
    return %c0_i32, %c0_i32_0 : i32, i32
  }
  func.func @transform_3(%arg0: i32) -> (i32, i32) {
    %c0_i32 = arith.constant 0 : i32
    %c0_i32_0 = arith.constant 0 : i32
    %c0_i32_1 = arith.constant 0 : i32
    return %c0_i32, %c0_i32_0 : i32, i32
  }
  func.func @transform_4(%arg0: i32) -> (i32, i32) {
    %c0_i32 = arith.constant 0 : i32
    %c0_i32_0 = arith.constant 0 : i32
    %c0_i32_1 = arith.constant 0 : i32
    return %c0_i32, %c0_i32_0 : i32, i32
  }
  func.func @transform_5(%arg0: i32) -> (i32, i32) {
    %c0_i32 = arith.constant 0 : i32
    %c0_i32_0 = arith.constant 0 : i32
    %c0_i32_1 = arith.constant 0 : i32
    return %c0_i32, %c0_i32_0 : i32, i32
  }
  func.func @transform_6(%arg0: i32) -> (i32, i32) {
    %c0_i32 = arith.constant 0 : i32
    %c0_i32_0 = arith.constant 0 : i32
    %c0_i32_1 = arith.constant 0 : i32
    return %c0_i32, %c0_i32_0 : i32, i32
  }
  func.func @transform_7(%arg0: i32) -> (i32, i32) {
    %c0_i32 = arith.constant 0 : i32
    %c0_i32_0 = arith.constant 0 : i32
    %c0_i32_1 = arith.constant 0 : i32
    return %c0_i32, %c0_i32_0 : i32, i32
  }
  func.func @transform_8(%arg0: i32) -> (i32, i32) {
    %c0_i32 = arith.constant 0 : i32
    %c0_i32_0 = arith.constant 0 : i32
    %c0_i32_1 = arith.constant 0 : i32
    return %c0_i32, %c0_i32_0 : i32, i32
  }
  func.func @transform_9(%arg0: i32) -> (i32, i32) {
    %c0_i32 = arith.constant 0 : i32
    %c0_i32_0 = arith.constant 0 : i32
    %c0_i32_1 = arith.constant 0 : i32
    return %c0_i32, %c0_i32_0 : i32, i32
  }
  func.func @transform_10(%arg0: i32) -> (i32, i32) {
    %c0_i32 = arith.constant 0 : i32
    %c0_i32_0 = arith.constant 0 : i32
    %c0_i32_1 = arith.constant 0 : i32
    return %c0_i32, %c0_i32_0 : i32, i32
  }
  func.func @transform_11(%arg0: i32) -> (i32, i32, i32) {
    %c0_i32 = arith.constant 0 : i32
    %c0_i32_0 = arith.constant 0 : i32
    %c0_i32_1 = arith.constant 0 : i32
    %c0_i32_2 = arith.constant 0 : i32
    return %c0_i32, %c0_i32_0, %c0_i32_1 : i32, i32, i32
  }
  func.func @transform_12(%arg0: i32) -> (i32, i32, i32) {
    %c0_i32 = arith.constant 0 : i32
    %c0_i32_0 = arith.constant 0 : i32
    %c0_i32_1 = arith.constant 0 : i32
    %c0_i32_2 = arith.constant 0 : i32
    return %c0_i32, %c0_i32_0, %c0_i32_1 : i32, i32, i32
  }
  func.func @transform_13(%arg0: i32) -> (i32, i32, i32) {
    %c0_i32 = arith.constant 0 : i32
    %c0_i32_0 = arith.constant 0 : i32
    %c0_i32_1 = arith.constant 0 : i32
    %c0_i32_2 = arith.constant 0 : i32
    return %c0_i32, %c0_i32_0, %c0_i32_1 : i32, i32, i32
  }
  func.func @transform_14(%arg0: i32) -> (i32, i32, i32) {
    %c0_i32 = arith.constant 0 : i32
    %c0_i32_0 = arith.constant 0 : i32
    %c0_i32_1 = arith.constant 0 : i32
    %c0_i32_2 = arith.constant 0 : i32
    return %c0_i32, %c0_i32_0, %c0_i32_1 : i32, i32, i32
  }
  func.func @transform_15(%arg0: i32) -> (i32, i32, i32) {
    %c0_i32 = arith.constant 0 : i32
    %c0_i32_0 = arith.constant 0 : i32
    %c0_i32_1 = arith.constant 0 : i32
    %c0_i32_2 = arith.constant 0 : i32
    return %c0_i32, %c0_i32_0, %c0_i32_1 : i32, i32, i32
  }
  func.func @transform_16(%arg0: i32) -> (i32, i32, i32) {
    %c0_i32 = arith.constant 0 : i32
    %c0_i32_0 = arith.constant 0 : i32
    %c0_i32_1 = arith.constant 0 : i32
    %c0_i32_2 = arith.constant 0 : i32
    return %c0_i32, %c0_i32_0, %c0_i32_1 : i32, i32, i32
  }
  func.func @transform_17(%arg0: i32) -> (i32, i32) {
    %c0_i32 = arith.constant 0 : i32
    %c0_i32_0 = arith.constant 0 : i32
    %c0_i32_1 = arith.constant 0 : i32
    return %c0_i32, %c0_i32_0 : i32, i32
  }
}

</mosaic_0001>

<llo_original>
// kernel: conv_tasnet_forward.1
$region0: #{conv_tasnet_forward.1}
  #allocation0 [shape = 'u32[]', space=smem, size = 0x4, offset = 0x4, fixed_abs, tag = 'smem constant byte address 0x4 - core index']
  #allocation1 [shape = 'u32[144,128]{1,0:T(1,128)}', space=vmem, size = 0x12000, scoped, tag = 'internal scratch']
  %s0 = inlined_call_operand.vmem [shape: f32[32,24], index: 0, kind: input, shape index: {}]
  %s1 = inlined_call_operand.vmem [shape: f32[16,190], index: 1, kind: input, shape index: {}]
  %s2 = inlined_call_operand.vmem [shape: f32[32,32], index: 2, kind: input, shape index: {}]
  %s3 = inlined_call_operand.vmem [shape: f32[32,16], index: 3, kind: input, shape index: {}]
  %s4 = inlined_call_operand.vmem [shape: f32[190,512], index: 4, kind: input, shape index: {}]
  %s5 = inlined_call_operand.vmem [shape: f32[1,512], index: 5, kind: input, shape index: {}]
  %s6 = inlined_call_operand.vmem [shape: f32[512,16], index: 6, kind: input, shape index: {}]
  %s7 = inlined_call_operand.vmem [shape: f32[24,16], index: 7, kind: input, shape index: {}]
  %s8 = inlined_call_operand.vmem [shape: f32[32,32], index: 8, kind: input, shape index: {}]
  %s9 = inlined_call_operand.vmem [shape: f32[32,32], index: 9, kind: input, shape index: {}]
  %s10 = inlined_call_operand.vmem [shape: f32[4,32], index: 10, kind: input, shape index: {}]
  %s11 = inlined_call_operand.vmem [shape: f32[2,16,32], index: 11, kind: input, shape index: {}]
  %s12 = inlined_call_operand.vmem [shape: f32[2,32,16], index: 12, kind: input, shape index: {}]
  %s13 = inlined_call_operand.vmem [shape: f32[2,12,32], index: 13, kind: input, shape index: {}]
  %s14 = inlined_call_operand.vmem [shape: f32[2,32,64], index: 14, kind: input, shape index: {}]
  %s15 = inlined_call_operand.vmem [shape: f32[2,64,32], index: 15, kind: input, shape index: {}]
  %s16 = inlined_call_operand.vmem [shape: f32[2,12,64], index: 16, kind: input, shape index: {}]
  %s17 = inlined_call_operand.vmem [shape: f32[32,72], index: 17, kind: output, shape index: {}]
  %s18 = sld [smem:[#allocation0]]
  $region78: #{conv_tasnet_forward.1} parent=0
    _
  %s20 = ssub.s32 1, %s18
  %s21 = scalar_select 0, %s20, %s18
  // Predicated region
  $region2: #{conv_tasnet_forward.1} parent=0 // pred_check
    _
  $region3: #{conv_tasnet_forward.1} parent=0 // pred_check_branch
    %23 = sbr.rel (0) target = $region5
  $region4: #{conv_tasnet_forward.1} parent=0 // pred_region
    _
  $region5: #{conv_tasnet_forward.1} parent=0 // pred_fallthru
    _
  // Predicated region
  $region6: #{conv_tasnet_forward.1} parent=0 // pred_check
    _
  $region7: #{conv_tasnet_forward.1} parent=0 // pred_check_branch
    %25 = sbr.rel (0) target = $region9
  $region8: #{conv_tasnet_forward.1} parent=0 // pred_region
    _
  $region9: #{conv_tasnet_forward.1} parent=0 // pred_fallthru
    _
  // Predicated region
  $region10: #{conv_tasnet_forward.1} parent=0 // pred_check
    _
  $region11: #{conv_tasnet_forward.1} parent=0 // pred_check_branch
    %27 = sbr.rel (0) target = $region13
  $region12: #{conv_tasnet_forward.1} parent=0 // pred_region
    _
  $region13: #{conv_tasnet_forward.1} parent=0 // pred_fallthru
    _
  // Predicated region
  $region14: #{conv_tasnet_forward.1} parent=0 // pred_check
    _
  $region15: #{conv_tasnet_forward.1} parent=0 // pred_check_branch
    %29 = sbr.rel (0) target = $region17
  $region16: #{conv_tasnet_forward.1} parent=0 // pred_region
    _
  $region17: #{conv_tasnet_forward.1} parent=0 // pred_fallthru
    _
  // Predicated region
  $region18: #{conv_tasnet_forward.1} parent=0 // pred_check
    _
  $region19: #{conv_tasnet_forward.1} parent=0 // pred_check_branch
    %31 = sbr.rel (0) target = $region21
  $region20: #{conv_tasnet_forward.1} parent=0 // pred_region
    _
  $region21: #{conv_tasnet_forward.1} parent=0 // pred_fallthru
    _
  // Predicated region
  $region22: #{conv_tasnet_forward.1} parent=0 // pred_check
    _
  $region23: #{conv_tasnet_forward.1} parent=0 // pred_check_branch
    %33 = sbr.rel (0) target = $region25
  $region24: #{conv_tasnet_forward.1} parent=0 // pred_region
    _
  $region25: #{conv_tasnet_forward.1} parent=0 // pred_fallthru
    _
  // Predicated region
  $region26: #{conv_tasnet_forward.1} parent=0 // pred_check
    _
  $region27: #{conv_tasnet_forward.1} parent=0 // pred_check_branch
    %35 = sbr.rel (0) target = $region29
  $region28: #{conv_tasnet_forward.1} parent=0 // pred_region
    _
  $region29: #{conv_tasnet_forward.1} parent=0 // pred_fallthru
    _
  // Predicated region
  $region30: #{conv_tasnet_forward.1} parent=0 // pred_check
    _
  $region31: #{conv_tasnet_forward.1} parent=0 // pred_check_branch
    %37 = sbr.rel (0) target = $region33
  $region32: #{conv_tasnet_forward.1} parent=0 // pred_region
    _
  $region33: #{conv_tasnet_forward.1} parent=0 // pred_fallthru
    _
  // Predicated region
  $region34: #{conv_tasnet_forward.1} parent=0 // pred_check
    _
  $region35: #{conv_tasnet_forward.1} parent=0 // pred_check_branch
    %39 = sbr.rel (0) target = $region37
  $region36: #{conv_tasnet_forward.1} parent=0 // pred_region
    _
  $region37: #{conv_tasnet_forward.1} parent=0 // pred_fallthru
    _
  // Predicated region
  $region38: #{conv_tasnet_forward.1} parent=0 // pred_check
    _
  $region39: #{conv_tasnet_forward.1} parent=0 // pred_check_branch
    %41 = sbr.rel (0) target = $region41
  $region40: #{conv_tasnet_forward.1} parent=0 // pred_region
    _
  $region41: #{conv_tasnet_forward.1} parent=0 // pred_fallthru
    _
  // Predicated region
  $region42: #{conv_tasnet_forward.1} parent=0 // pred_check
    _
  $region43: #{conv_tasnet_forward.1} parent=0 // pred_check_branch
    %43 = sbr.rel (0) target = $region45
  $region44: #{conv_tasnet_forward.1} parent=0 // pred_region
    _
  $region45: #{conv_tasnet_forward.1} parent=0 // pred_fallthru
    _
  // Predicated region
  $region46: #{conv_tasnet_forward.1} parent=0 // pred_check
    _
  $region47: #{conv_tasnet_forward.1} parent=0 // pred_check_branch
    %45 = sbr.rel (0) target = $region49
  $region48: #{conv_tasnet_forward.1} parent=0 // pred_region
    _
  $region49: #{conv_tasnet_forward.1} parent=0 // pred_fallthru
    _
  // Predicated region
  $region50: #{conv_tasnet_forward.1} parent=0 // pred_check
    _
  $region51: #{conv_tasnet_forward.1} parent=0 // pred_check_branch
    %47 = sbr.rel (0) target = $region53
  $region52: #{conv_tasnet_forward.1} parent=0 // pred_region
    _
  $region53: #{conv_tasnet_forward.1} parent=0 // pred_fallthru
    _
  // Predicated region
  $region54: #{conv_tasnet_forward.1} parent=0 // pred_check
    _
  $region55: #{conv_tasnet_forward.1} parent=0 // pred_check_branch
    %49 = sbr.rel (0) target = $region57
  $region56: #{conv_tasnet_forward.1} parent=0 // pred_region
    _
  $region57: #{conv_tasnet_forward.1} parent=0 // pred_fallthru
    _
  // Predicated region
  $region58: #{conv_tasnet_forward.1} parent=0 // pred_check
    _
  $region59: #{conv_tasnet_forward.1} parent=0 // pred_check_branch
    %51 = sbr.rel (0) target = $region61
  $region60: #{conv_tasnet_forward.1} parent=0 // pred_region
    _
  $region61: #{conv_tasnet_forward.1} parent=0 // pred_fallthru
    _
  // Predicated region
  $region62: #{conv_tasnet_forward.1} parent=0 // pred_check
    _
  $region63: #{conv_tasnet_forward.1} parent=0 // pred_check_branch
    %53 = sbr.rel (0) target = $region65
  $region64: #{conv_tasnet_forward.1} parent=0 // pred_region
    _
  $region65: #{conv_tasnet_forward.1} parent=0 // pred_fallthru
    _
  // Predicated region
  $region66: #{conv_tasnet_forward.1} parent=0 // pred_check
    _
  $region67: #{conv_tasnet_forward.1} parent=0 // pred_check_branch
    %55 = sbr.rel (0) target = $region69
  $region68: #{conv_tasnet_forward.1} parent=0 // pred_region
    _
  $region69: #{conv_tasnet_forward.1} parent=0 // pred_fallthru
    _
  %v56 = vlaneseq
  %v57 = vshrl.u32 %v56, 7
  %v58 = vadd.s32 %v57, 8
  %v59 = vadd.s32 %v57, 16
  %v60 = vadd.s32 %v57, 24
  %vm61 = vcmp.lt.s32.totalorder %v57, 0
  %v62 = vsub.s32 0, %v57
  %v63 = vsel %vm61, %v62, %v57
  %v64 = vshrl.u32 %v63, 4
  %v65 = vand.u32 %v63, 15
  %v66 = vsub.s32 0, %v65
  %v67 = vsel %vm61, %v66, %v65
  %vm68 = vcmp.lt.s32.totalorder %v58, 0
  %v69 = vsub.s32 0, %v58
  %v70 = vsel %vm68, %v69, %v58
  %v71 = vshrl.u32 %v70, 4
  %v72 = vand.u32 %v70, 15
  %v73 = vsub.s32 0, %v72
  %v74 = vsel %vm68, %v73, %v72
  %vm75 = vcmp.lt.s32.totalorder %v59, 0
  %v76 = vsub.s32 0, %v59
  %v77 = vsel %vm75, %v76, %v59
  %v78 = vshrl.u32 %v77, 4
  %v79 = vand.u32 %v77, 15
  %v80 = vsub.s32 0, %v79
  %v81 = vsel %vm75, %v80, %v79
  %vm82 = vcmp.lt.s32.totalorder %v60, 0
  %v83 = vsub.s32 0, %v60
  %v84 = vsel %vm82, %v83, %v60
  %v85 = vshrl.u32 %v84, 4
  %v86 = vand.u32 %v84, 15
  %v87 = vsub.s32 0, %v86
  %v88 = vsel %vm82, %v87, %v86
  %vm89 = vcmp.ne.s32.totalorder %v67, 0
  %vm90 = vcmp.ne.s32.totalorder %v74, 0
  %vm91 = vcmp.ne.s32.totalorder %v81, 0
  %vm92 = vcmp.ne.s32.totalorder %v88, 0
  %vm93 = vcmp.lt.s32.totalorder %v67, 0
  %vm94 = vcmp.lt.s32.totalorder %v74, 0
  %vm95 = vcmp.lt.s32.totalorder %v81, 0
  %vm96 = vcmp.lt.s32.totalorder %v88, 0
  %vm97 = vmand %vm93, %vm89
  %vm98 = vmand %vm94, %vm90
  %vm99 = vmand %vm95, %vm91
  %vm100 = vmand %vm96, %vm92
  %v101 = vadd.s32 %v67, 16
  %v102 = vadd.s32 %v74, 16
  %v103 = vadd.s32 %v81, 16
  %v104 = vadd.s32 %v88, 16
  %v105 = vsel %vm97, %v101, %v67
  %v106 = vsel %vm98, %v102, %v74
  %v107 = vsel %vm99, %v103, %v81
  %v108 = vsel %vm100, %v104, %v88
  %v109 = vadd.s32 %v105, 4294967294
  %v110 = vadd.s32 %v106, 4294967294
  %v111 = vadd.s32 %v107, 4294967294
  %v112 = vadd.s32 %v108, 4294967294
  %vm113 = vcmp.ge.s32.totalorder %v109, 0
  %vm114 = vcmp.ge.s32.totalorder %v110, 0
  %vm115 = vcmp.ge.s32.totalorder %v111, 0
  %vm116 = vcmp.ge.s32.totalorder %v112, 0
  %vm117 = vcmp.lt.s32.totalorder %v109, 16
  %vm118 = vcmp.lt.s32.totalorder %v110, 16
  %vm119 = vcmp.lt.s32.totalorder %v111, 16
  %vm120 = vcmp.lt.s32.totalorder %v112, 16
  %vm121 = vmand %vm113, %vm117
  %vm122 = vmand %vm114, %vm118
  %vm123 = vmand %vm115, %vm119
  %vm124 = vmand %vm116, %vm120
  %v125 = vsel %vm121, 1, 0
  %v126 = vsel %vm122, 1, 0
  %v127 = vsel %vm123, 1, 0
  %v128 = vsel %vm124, 1, 0
  %v129 = vcvt.s32.f32 %v125
  %v130 = vcvt.s32.f32 %v126
  %v131 = vcvt.s32.f32 %v127
  %v132 = vcvt.s32.f32 %v128
  %v133 = vadd.s32 %v105, 4294967295
  %v134 = vadd.s32 %v106, 4294967295
  %v135 = vadd.s32 %v107, 4294967295
  %v136 = vadd.s32 %v108, 4294967295
  %vm137 = vcmp.ge.s32.totalorder %v133, 0
  %vm138 = vcmp.ge.s32.totalorder %v134, 0
  %vm139 = vcmp.ge.s32.totalorder %v135, 0
  %vm140 = vcmp.ge.s32.totalorder %v136, 0
  %vm141 = vcmp.lt.s32.totalorder %v133, 16
  %vm142 = vcmp.lt.s32.totalorder %v134, 16
  %vm143 = vcmp.lt.s32.totalorder %v135, 16
  %vm144 = vcmp.lt.s32.totalorder %v136, 16
  %vm145 = vmand %vm137, %vm141
  %vm146 = vmand %vm138, %vm142
  %vm147 = vmand %vm139, %vm143
  %vm148 = vmand %vm140, %vm144
  %v149 = vsel %vm145, 1, 0
  %v150 = vsel %vm146, 1, 0
  %v151 = vsel %vm147, 1, 0
  %v152 = vsel %vm148, 1, 0
  %v153 = vcvt.s32.f32 %v149
  %v154 = vcvt.s32.f32 %v150
  %v155 = vcvt.s32.f32 %v151
  %v156 = vcvt.s32.f32 %v152
  %v157 = vadd.s32 %v105, 1
  %v158 = vadd.s32 %v106, 1
  %v159 = vadd.s32 %v107, 1
  %v160 = vadd.s32 %v108, 1
  %vm161 = vcmp.ge.s32.totalorder %v157, 0
  %vm162 = vcmp.ge.s32.totalorder %v158, 0
  %vm163 = vcmp.ge.s32.totalorder %v159, 0
  %vm164 = vcmp.ge.s32.totalorder %v160, 0
  %vm165 = vcmp.lt.s32.totalorder %v157, 16
  %vm166 = vcmp.lt.s32.totalorder %v158, 16
  %vm167 = vcmp.lt.s32.totalorder %v159, 16
  %vm168 = vcmp.lt.s32.totalorder %v160, 16
  %vm169 = vmand %vm161, %vm165
  %vm170 = vmand %vm162, %vm166
  %vm171 = vmand %vm163, %vm167
  %vm172 = vmand %vm164, %vm168
  %v173 = vsel %vm169, 1, 0
  %v174 = vsel %vm170, 1, 0
  %v175 = vsel %vm171, 1, 0
  %v176 = vsel %vm172, 1, 0
  %v177 = vcvt.s32.f32 %v173
  %v178 = vcvt.s32.f32 %v174
  %v179 = vcvt.s32.f32 %v175
  %v180 = vcvt.s32.f32 %v176
  %v181 = vadd.s32 %v105, 2
  %v182 = vadd.s32 %v106, 2
  %v183 = vadd.s32 %v107, 2
  %v184 = vadd.s32 %v108, 2
  %vm185 = vcmp.ge.s32.totalorder %v181, 0
  %vm186 = vcmp.ge.s32.totalorder %v182, 0
  %vm187 = vcmp.ge.s32.totalorder %v183, 0
  %vm188 = vcmp.ge.s32.totalorder %v184, 0
  %vm189 = vcmp.lt.s32.totalorder %v181, 16
  %vm190 = vcmp.lt.s32.totalorder %v182, 16
  %vm191 = vcmp.lt.s32.totalorder %v183, 16
  %vm192 = vcmp.lt.s32.totalorder %v184, 16
  %vm193 = vmand %vm185, %vm189
  %vm194 = vmand %vm186, %vm190
  %vm195 = vmand %vm187, %vm191
  %vm196 = vmand %vm188, %vm192
  %v197 = vsel %vm193, 1, 0
  %v198 = vsel %vm194, 1, 0
  %v199 = vsel %vm195, 1, 0
  %v200 = vsel %vm196, 1, 0
  %v201 = vcvt.s32.f32 %v197
  %v202 = vcvt.s32.f32 %v198
  %v203 = vcvt.s32.f32 %v199
  %v204 = vcvt.s32.f32 %v200
  %v205 = vld [vmem:[%s10] sm:$0xf]
  %v206 = vld [vmem:[%s0] sm:$0xff]
  %v207 = vld [vmem:[%s0 + $0x8] sm:$0xff]
  %v208 = vld [vmem:[%s0 + $0x10] sm:$0xff]
  %v209 = vld [vmem:[%s0 + $0x18] sm:$0xff]
  %v210 = vld [vmem:[%s7] sm:$0xff]
  %v211 = vld [vmem:[%s7 + $0x8] sm:$0xff]
  %v212 = vld [vmem:[%s7 + $0x10] sm:$0xff]
  %v213 = vlaneseq
  %v214 = vshrl.u32 %v213, 7
  %v215 = vsub.s32 1, %v214
  %v216 = vrot.slane %v205, %v215
  %vm217 = vcmask 195584
  %v219 = vsel %vm217, %v206, 0
  %v222 = vsel %vm217, %v207, 0
  %v225 = vsel %vm217, %v208, 0
  %v228 = vsel %vm217, %v209, 0
  %230 = vmatprep.subr.mxu0 0.0
  %231 = vmatpush1.msra.mxu0 0.0
  %232 = vmatprep.subr.mxu0 0.0
  %233 = vmatpush1.msra.mxu0 0.0
  %234 = vmatprep.subr.mxu0 0.0
  %235 = vmatpush1.msra.mxu0 0.0
  %236 = vmatprep.subr.mxu0 0.0
  %237 = vmatpush1.msra.mxu0 0.0
  %238 = vmatprep.subr.mxu0 0.0
  %239 = vmatpush1.msra.mxu0 0.0
  %240 = vmatprep.subr.mxu0 0.0
  %241 = vmatpush1.msra.mxu0 0.0
  %242 = vmatprep.subr.mxu0 0.0
  %243 = vmatpush1.msra.mxu0 0.0
  %244 = vmatprep.subr.mxu0 0.0
  %245 = vmatpush1.msra.mxu0 0.0
  %246 = vmatprep.subr.mxu0 0.0
  %247 = vmatpush1.msra.mxu0 0.0
  %248 = vmatprep.subr.mxu0 0.0
  %249 = vmatpush1.msra.mxu0 0.0
  %250 = vmatprep.subr.mxu0 0.0
  %251 = vmatpush1.msra.mxu0 0.0
  %252 = vmatprep.subr.mxu0 0.0
  %253 = vmatpush1.msra.mxu0 0.0
  %254 = vmatprep.subr.mxu0 0.0
  %255 = vmatpush1.msra.mxu0 0.0
  %256 = vmatprep.subr.mxu0 0.0
  %257 = vmatpush1.msra.mxu0 %v212
  %258 = vmatprep.subr.mxu0 0.0
  %259 = vmatpush1.msra.mxu0 %v211
  %260 = vmatprep.subr.mxu0 0.0
  %261 = vmatpush1.msra.mxu0 %v210
  %262 = vmatprep.subr.mxu0 0.0
  %263 = vmatpush2.msra.mxu0 0.0
  %264 = vmatprep.subr.mxu0 0.0
  %265 = vmatpush2.msra.mxu0 0.0
  %266 = vmatprep.subr.mxu0 0.0
  %267 = vmatpush2.msra.mxu0 0.0
  %268 = vmatprep.subr.mxu0 0.0
  %269 = vmatpush2.msra.mxu0 0.0
  %270 = vmatprep.subr.mxu0 0.0
  %271 = vmatpush2.msra.mxu0 0.0
  %272 = vmatprep.subr.mxu0 0.0
  %273 = vmatpush2.msra.mxu0 0.0
  %274 = vmatprep.subr.mxu0 0.0
  %275 = vmatpush2.msra.mxu0 0.0
  %276 = vmatprep.subr.mxu0 0.0
  %277 = vmatpush2.msra.mxu0 0.0
  %278 = vmatprep.subr.mxu0 0.0
  %279 = vmatpush2.msra.mxu0 0.0
  %280 = vmatprep.subr.mxu0 0.0
  %281 = vmatpush2.msra.mxu0 0.0
  %282 = vmatprep.subr.mxu0 0.0
  %283 = vmatpush2.msra.mxu0 0.0
  %284 = vmatprep.subr.mxu0 0.0
  %285 = vmatpush2.msra.mxu0 0.0
  %286 = vmatprep.subr.mxu0 0.0
  %287 = vmatpush2.msra.mxu0 0.0
  %288 = vmatprep.subr.mxu0 0.0
  %289 = vmatpush2.msra.mxu0 0.0
  %290 = vmatprep.subr.mxu0 0.0
  %291 = vmatpush2.msra.mxu0 0.0
  %292 = vmatprep.subr.mxu0 0.0
  %293 = vmatpush2.msra.mxu0 0.0
  %294 = vmatprep.mubr.f32.mxu0 0.0
  %295 = vmatmul.mubr.f32.gmra.mxu0 %v219
  %v296 = vpop.f32.mrf.mxu0
  %v297 = vadd.f32 %v216, %v296
  %v298 = vpop.f32.mrf.mxu0
  %299 = vmatprep.mubr.f32.mxu0 0.0
  %300 = vmatmul.mubr.f32.gmra.mxu0 %v222
  %v301 = vpop.f32.mrf.mxu0
  %v302 = vadd.f32 %v216, %v301
  %v303 = vpop.f32.mrf.mxu0
  %304 = vmatprep.mubr.f32.mxu0 0.0
  %305 = vmatmul.mubr.f32.gmra.mxu0 %v225
  %v306 = vpop.f32.mrf.mxu0
  %v307 = vadd.f32 %v216, %v306
  %v308 = vpop.f32.mrf.mxu0
  %309 = vmatprep.mubr.f32.mxu0 0.0
  %310 = vmatmul.mubr.f32.gmra.mxu0 %v228
  %v311 = vpop.f32.mrf.mxu0
  %v312 = vadd.f32 %v216, %v311
  %v313 = vpop.f32.mrf.mxu0
  %314 = vdwg.mxu0
  %v315 = vld [vmem:[%s11] sm:$0xff]
  %v316 = vld [vmem:[%s11 + $0x8] sm:$0xff]
  %v317 = vld [vmem:[%s12] sm:$0xff]
  %v318 = vld [vmem:[%s12 + $0x8] sm:$0xff]
  %v319 = vld [vmem:[%s12 + $0x10] sm:$0xff]
  %v320 = vld [vmem:[%s12 + $0x18] sm:$0xff]
  %v321 = vld [vmem:[%s13] sm:$0xff]
  %v322 = vld [vmem:[%s13 + $0x8] sm:$0xf]
  %v323 = vlaneseq
  %v324 = vshrl.u32 %v323, 7
  %v325 = vsub.s32 0, %v324
  %v326 = vrot.slane %v321, %v325
  %vm327 = vcmask 130048
  %v329 = vsel %vm327, %v297, 0
  %v332 = vsel %vm327, %v302, 0
  %v335 = vsel %vm327, %v307, 0
  %v338 = vsel %vm327, %v312, 0
  %340 = vmatprep.subr.mxu0 0.0
  %341 = vmatpush1.msra.mxu0 0.0
  %342 = vmatprep.subr.mxu0 0.0
  %343 = vmatpush1.msra.mxu0 0.0
  %344 = vmatprep.subr.mxu0 0.0
  %345 = vmatpush1.msra.mxu0 0.0
  %346 = vmatprep.subr.mxu0 0.0
  %347 = vmatpush1.msra.mxu0 0.0
  %348 = vmatprep.subr.mxu0 0.0
  %349 = vmatpush1.msra.mxu0 0.0
  %350 = vmatprep.subr.mxu0 0.0
  %351 = vmatpush1.msra.mxu0 0.0
  %352 = vmatprep.subr.mxu0 0.0
  %353 = vmatpush1.msra.mxu0 0.0
  %354 = vmatprep.subr.mxu0 0.0
  %355 = vmatpush1.msra.mxu0 0.0
  %356 = vmatprep.subr.mxu0 0.0
  %357 = vmatpush1.msra.mxu0 0.0
  %358 = vmatprep.subr.mxu0 0.0
  %359 = vmatpush1.msra.mxu0 0.0
  %360 = vmatprep.subr.mxu0 0.0
  %361 = vmatpush1.msra.mxu0 0.0
  %362 = vmatprep.subr.mxu0 0.0
  %363 = vmatpush1.msra.mxu0 0.0
  %364 = vmatprep.subr.mxu0 0.0
  %365 = vmatpush1.msra.mxu0 0.0
  %366 = vmatprep.subr.mxu0 0.0
  %367 = vmatpush1.msra.mxu0 0.0
  %368 = vmatprep.subr.mxu0 0.0
  %369 = vmatpush1.msra.mxu0 %v316
  %370 = vmatprep.subr.mxu0 0.0
  %371 = vmatpush1.msra.mxu0 %v315
  %372 = vmatprep.subr.mxu0 0.0
  %373 = vmatpush2.msra.mxu0 0.0
  %374 = vmatprep.subr.mxu0 0.0
  %375 = vmatpush2.msra.mxu0 0.0
  %376 = vmatprep.subr.mxu0 0.0
  %377 = vmatpush2.msra.mxu0 0.0
  %378 = vmatprep.subr.mxu0 0.0
  %379 = vmatpush2.msra.mxu0 0.0
  %380 = vmatprep.subr.mxu0 0.0
  %381 = vmatpush2.msra.mxu0 0.0
  %382 = vmatprep.subr.mxu0 0.0
  %383 = vmatpush2.msra.mxu0 0.0
  %384 = vmatprep.subr.mxu0 0.0
  %385 = vmatpush2.msra.mxu0 0.0
  %386 = vmatprep.subr.mxu0 0.0
  %387 = vmatpush2.msra.mxu0 0.0
  %388 = vmatprep.subr.mxu0 0.0
  %389 = vmatpush2.msra.mxu0 0.0
  %390 = vmatprep.subr.mxu0 0.0
  %391 = vmatpush2.msra.mxu0 0.0
  %392 = vmatprep.subr.mxu0 0.0
  %393 = vmatpush2.msra.mxu0 0.0
  %394 = vmatprep.subr.mxu0 0.0
  %395 = vmatpush2.msra.mxu0 0.0
  %396 = vmatprep.subr.mxu0 0.0
  %397 = vmatpush2.msra.mxu0 0.0
  %398 = vmatprep.subr.mxu0 0.0
  %399 = vmatpush2.msra.mxu0 0.0
  %400 = vmatprep.subr.mxu0 0.0
  %401 = vmatpush2.msra.mxu0 0.0
  %402 = vmatprep.subr.mxu0 0.0
  %403 = vmatpush2.msra.mxu0 0.0
  %404 = vmatprep.mubr.f32.mxu0 0.0
  %405 = vmatmul.mubr.f32.gmra.mxu0 %v329
  %v406 = vpop.f32.mrf.mxu0
  %v407 = vadd.f32 %v326, %v406
  %v408 = vpop.f32.mrf.mxu0
  %409 = vmatprep.mubr.f32.mxu0 0.0
  %410 = vmatmul.mubr.f32.gmra.mxu0 %v332
  %v411 = vpop.f32.mrf.mxu0
  %v412 = vadd.f32 %v326, %v411
  %v413 = vpop.f32.mrf.mxu0
  %414 = vmatprep.mubr.f32.mxu0 0.0
  %415 = vmatmul.mubr.f32.gmra.mxu0 %v335
  %v416 = vpop.f32.mrf.mxu0
  %v417 = vadd.f32 %v326, %v416
  %v418 = vpop.f32.mrf.mxu0
  %419 = vmatprep.mubr.f32.mxu0 0.0
  %420 = vmatmul.mubr.f32.gmra.mxu0 %v338
  %v421 = vpop.f32.mrf.mxu0
  %v422 = vadd.f32 %v326, %v421
  %v423 = vpop.f32.mrf.mxu0
  %424 = vdwg.mxu0
  %vm425 = vcmp.ge.f32.partialorder %v407, 0.0
  %vm426 = vcmp.ge.f32.partialorder %v412, 0.0
  %vm427 = vcmp.ge.f32.partialorder %v417, 0.0
  %vm428 = vcmp.ge.f32.partialorder %v422, 0.0
  %v429 = vlaneseq
  %v430 = vshrl.u32 %v429, 7
  %v431 = vsub.s32 1, %v430
  %v432 = vrot.slane %v321, %v431
  %v433 = vmul.f32 %v432, %v407
  %v434 = vmul.f32 %v432, %v412
  %v435 = vmul.f32 %v432, %v417
  %v436 = vmul.f32 %v432, %v422
  %v437 = vsel %vm425, %v407, %v433
  %v438 = vsel %vm426, %v412, %v434
  %v439 = vsel %vm427, %v417, %v435
  %v440 = vsel %vm428, %v422, %v436
  %v441 = vmul.f32 %v437, %v437
  %v442 = vmul.f32 %v438, %v438
  %v443 = vmul.f32 %v439, %v439
  %v444 = vmul.f32 %v440, %v440
  %449 = vrot.lane.b32.xlu0 %v441, 32
  %v450 = vpop.permute.xlu0 %449
  %451 = vrot.lane.b32.xlu0 %v442, 32
  %v452 = vpop.permute.xlu0 %451
  %453 = vrot.lane.b32.xlu0 %v443, 32
  %v454 = vpop.permute.xlu0 %453
  %455 = vrot.lane.b32.xlu0 %v444, 32
  %v456 = vpop.permute.xlu0 %455
  %vm461 = vcmask 261120
  %v462 = vsel %vm461, %v437, %v450
  %v463 = vsel %vm461, %v438, %v452
  %v464 = vsel %vm461, %v439, %v454
  %v465 = vsel %vm461, %v440, %v456
  %vm466 = vcmask 523264
  %v467 = vsel %vm466, %v462, 0.0
  %v468 = vsel %vm466, %v463, 0.0
  %v469 = vadd.f32 %v467, %v468
  %v470 = vrot.slane %v469, 4
  %v471 = vadd.f32 %v469, %v470
  %v472 = vrot.slane %v471, 2
  %v473 = vadd.f32 %v471, %v472
  %v474 = vrot.slane %v473, 1
  %v475 = vadd.f32 %v473, %v474
  %vm476 = vcmask 253952
  %v477 = vsel %vm476, %v475, 0.0
  %478 = vadd.xlane.f32.xlu0 %v477
  %v479 = vpop.xlane.xlu0 %478
  %v480 = vrot.slane %v479, 4
  %v481 = vadd.f32 %v479, %v480
  %v482 = vrot.slane %v481, 2
  %v483 = vadd.f32 %v481, %v482
  %v484 = vrot.slane %v483, 1
  %v485 = vadd.f32 %v483, %v484
  %s486 = vtos %v485
  %488 = vrot.lane.b32.xlu0 %v475, 96
  %v489 = vpop.permute.xlu0 %488
  %v491 = vsel %vm476, %v489, 0.0
  %492 = vadd.xlane.f32.xlu0 %v491
  %v493 = vpop.xlane.xlu0 %492
  %v494 = vrot.slane %v493, 4
  %v495 = vadd.f32 %v493, %v494
  %v496 = vrot.slane %v495, 2
  %v497 = vadd.f32 %v495, %v496
  %v498 = vrot.slane %v497, 1
  %v499 = vadd.f32 %v497, %v498
  %s500 = vtos %v499
  %s501 = smul.f32 %s486, 0.001953125
  %s502 = smul.f32 %s500, 0.001953125
  %s503 = smul.f32 %s501, %s501
  %s504 = ssub.f32 %s502, %s503
  %s505 = smax.f32 %s504, 0.0
  %s506 = sadd.f32 %s505, 1e-05
  %v507 = vstv %s506
  %v508 = vrsqrt.pop %v507
  %s509 = vtos %v508
  %v510 = vstv %s501
  %v511 = vsub.f32 %v437, %v510
  %v512 = vsub.f32 %v438, %v510
  %v513 = vlaneseq
  %v514 = vshrl.u32 %v513, 7
  %v515 = vsub.s32 2, %v514
  %v516 = vrot.slane %v321, %v515
  %v517 = vmul.f32 %v516, %v511
  %v518 = vmul.f32 %v516, %v512
  %v519 = vstv %s509
  %v520 = vmul.f32 %v517, %v519
  %v521 = vmul.f32 %v518, %v519
  %v522 = vlaneseq
  %v523 = vshrl.u32 %v522, 7
  %v524 = vsub.s32 3, %v523
  %v525 = vrot.slane %v321, %v524
  %v526 = vadd.f32 %v520, %v525
  %v527 = vadd.f32 %v521, %v525
  %v528 = vsel %vm466, %v464, 0.0
  %v529 = vsel %vm466, %v465, 0.0
  %v530 = vadd.f32 %v528, %v529
  %v531 = vrot.slane %v530, 4
  %v532 = vadd.f32 %v530, %v531
  %v533 = vrot.slane %v532, 2
  %v534 = vadd.f32 %v532, %v533
  %v535 = vrot.slane %v534, 1
  %v536 = vadd.f32 %v534, %v535
  %v537 = vsel %vm476, %v536, 0.0
  %538 = vadd.xlane.f32.xlu0 %v537
  %v539 = vpop.xlane.xlu0 %538
  %v540 = vrot.slane %v539, 4
  %v541 = vadd.f32 %v539, %v540
  %v542 = vrot.slane %v541, 2
  %v543 = vadd.f32 %v541, %v542
  %v544 = vrot.slane %v543, 1
  %v545 = vadd.f32 %v543, %v544
  %s546 = vtos %v545
  %548 = vrot.lane.b32.xlu0 %v536, 96
  %v549 = vpop.permute.xlu0 %548
  %v551 = vsel %vm476, %v549, 0.0
  %552 = vadd.xlane.f32.xlu0 %v551
  %v553 = vpop.xlane.xlu0 %552
  %v554 = vrot.slane %v553, 4
  %v555 = vadd.f32 %v553, %v554
  %v556 = vrot.slane %v555, 2
  %v557 = vadd.f32 %v555, %v556
  %v558 = vrot.slane %v557, 1
  %v559 = vadd.f32 %v557, %v558
  %s560 = vtos %v559
  %s561 = smul.f32 %s546, 0.001953125
  %s562 = smul.f32 %s560, 0.001953125
  %s563 = smul.f32 %s561, %s561
  %s564 = ssub.f32 %s562, %s563
  %s565 = smax.f32 %s564, 0.0
  %s566 = sadd.f32 %s565, 1e-05
  %v567 = vstv %s566
  %v568 = vrsqrt.pop %v567
  %s569 = vtos %v568
  %v570 = vstv %s561
  %v571 = vsub.f32 %v439, %v570
  %v572 = vsub.f32 %v440, %v570
  %v573 = vmul.f32 %v516, %v571
  %v574 = vmul.f32 %v516, %v572
  %v575 = vstv %s569
  %v576 = vmul.f32 %v573, %v575
  %v577 = vmul.f32 %v574, %v575
  %v578 = vadd.f32 %v576, %v525
  %v579 = vadd.f32 %v577, %v525
  %v580 = vlaneseq
  %v581 = vshrl.u32 %v580, 7
  %v582 = vsub.s32 5, %v581
  %v583 = vrot.slane %v321, %v582
  %v584 = vmul.f32 %v526, %v583
  %v585 = vmul.f32 %v527, %v583
  %v586 = vmul.f32 %v578, %v583
  %v587 = vmul.f32 %v579, %v583
  %v588 = vlaneseq
  %v589 = vshrl.u32 %v588, 7
  %v590 = vsub.s32 7, %v589
  %v591 = vrot.slane %v321, %v590
  %v592 = vadd.f32 %v584, %v591
  %v593 = vadd.f32 %v585, %v591
  %v594 = vadd.f32 %v586, %v591
  %v595 = vadd.f32 %v587, %v591
  %v596 = vrot.slane %v526, 7
  %v597 = vrot.slane %v527, 7
  %v598 = vrot.slane %v578, 7
  %v599 = vrot.slane %v579, 7
  %vm600 = vcmp.lt.s32.totalorder %v57, 1
  %v601 = vsel %vm600, %v598, %v599
  %v602 = vsel %vm600, %v597, %v598
  %v603 = vsel %vm600, %v596, %v597
  %v604 = vsel %vm600, %v599, %v596
  %v605 = vmul.f32 %v604, %v153
  %v606 = vmul.f32 %v603, %v154
  %v607 = vmul.f32 %v602, %v155
  %v608 = vmul.f32 %v601, %v156
  %v609 = vlaneseq
  %v610 = vshrl.u32 %v609, 7
  %v611 = vsub.s32 4, %v610
  %v612 = vrot.slane %v321, %v611
  %v613 = vmul.f32 %v605, %v612
  %v614 = vmul.f32 %v606, %v612
  %v615 = vmul.f32 %v607, %v612
  %v616 = vmul.f32 %v608, %v612
  %v617 = vadd.f32 %v592, %v613
  %v618 = vadd.f32 %v593, %v614
  %v619 = vadd.f32 %v594, %v615
  %v620 = vadd.f32 %v595, %v616
  %v621 = vrot.slane %v526, 1
  %v622 = vrot.slane %v527, 1
  %v623 = vrot.slane %v578, 1
  %v624 = vrot.slane %v579, 1
  %vm625 = vcmp.lt.s32.totalorder %v57, 7
  %v626 = vsel %vm625, %v623, %v624
  %v627 = vsel %vm625, %v622, %v623
  %v628 = vsel %vm625, %v621, %v622
  %v629 = vsel %vm625, %v624, %v621
  %v630 = vmul.f32 %v628, %v177
  %v631 = vmul.f32 %v627, %v178
  %v632 = vmul.f32 %v626, %v179
  %v633 = vmul.f32 %v629, %v180
  %v634 = vlaneseq
  %v635 = vshrl.u32 %v634, 7
  %v636 = vsub.s32 6, %v635
  %v637 = vrot.slane %v321, %v636
  %v638 = vmul.f32 %v630, %v637
  %v639 = vmul.f32 %v631, %v637
  %v640 = vmul.f32 %v632, %v637
  %v641 = vmul.f32 %v633, %v637
  %v642 = vadd.f32 %v617, %v638
  %v643 = vadd.f32 %v618, %v639
  %v644 = vadd.f32 %v619, %v640
  %v645 = vadd.f32 %v620, %v641
  %vm646 = vcmp.ge.f32.partialorder %v642, 0.0
  %vm647 = vcmp.ge.f32.partialorder %v643, 0.0
  %vm648 = vcmp.ge.f32.partialorder %v644, 0.0
  %vm649 = vcmp.ge.f32.partialorder %v645, 0.0
  %v650 = vlaneseq
  %v651 = vshrl.u32 %v650, 7
  %v652 = vsub.s32 0, %v651
  %v653 = vrot.slane %v322, %v652
  %v654 = vmul.f32 %v653, %v642
  %v655 = vmul.f32 %v653, %v643
  %v656 = vmul.f32 %v653, %v644
  %v657 = vmul.f32 %v653, %v645
  %v658 = vsel %vm646, %v642, %v654
  %v659 = vsel %vm647, %v643, %v655
  %v660 = vsel %vm648, %v644, %v656
  %v661 = vsel %vm649, %v645, %v657
  %v662 = vmul.f32 %v658, %v658
  %v663 = vmul.f32 %v659, %v659
  %v664 = vmul.f32 %v660, %v660
  %v665 = vmul.f32 %v661, %v661
  %670 = vrot.lane.b32.xlu0 %v662, 32
  %v671 = vpop.permute.xlu0 %670
  %672 = vrot.lane.b32.xlu0 %v663, 32
  %v673 = vpop.permute.xlu0 %672
  %674 = vrot.lane.b32.xlu0 %v664, 32
  %v675 = vpop.permute.xlu0 %674
  %676 = vrot.lane.b32.xlu0 %v665, 32
  %v677 = vpop.permute.xlu0 %676
  %v682 = vsel %vm461, %v658, %v671
  %v683 = vsel %vm461, %v659, %v673
  %v684 = vsel %vm461, %v660, %v675
  %v685 = vsel %vm461, %v661, %v677
  %v686 = vsel %vm466, %v682, 0.0
  %v687 = vsel %vm466, %v683, 0.0
  %v688 = vadd.f32 %v686, %v687
  %v689 = vrot.slane %v688, 4
  %v690 = vadd.f32 %v688, %v689
  %v691 = vrot.slane %v690, 2
  %v692 = vadd.f32 %v690, %v691
  %v693 = vrot.slane %v692, 1
  %v694 = vadd.f32 %v692, %v693
  %v695 = vsel %vm476, %v694, 0.0
  %696 = vadd.xlane.f32.xlu0 %v695
  %v697 = vpop.xlane.xlu0 %696
  %v698 = vrot.slane %v697, 4
  %v699 = vadd.f32 %v697, %v698
  %v700 = vrot.slane %v699, 2
  %v701 = vadd.f32 %v699, %v700
  %v702 = vrot.slane %v701, 1
  %v703 = vadd.f32 %v701, %v702
  %s704 = vtos %v703
  %706 = vrot.lane.b32.xlu0 %v694, 96
  %v707 = vpop.permute.xlu0 %706
  %v709 = vsel %vm476, %v707, 0.0
  %710 = vadd.xlane.f32.xlu0 %v709
  %v711 = vpop.xlane.xlu0 %710
  %v712 = vrot.slane %v711, 4
  %v713 = vadd.f32 %v711, %v712
  %v714 = vrot.slane %v713, 2
  %v715 = vadd.f32 %v713, %v714
  %v716 = vrot.slane %v715, 1
  %v717 = vadd.f32 %v715, %v716
  %s718 = vtos %v717
  %s719 = smul.f32 %s704, 0.001953125
  %s720 = smul.f32 %s718, 0.001953125
  %s721 = smul.f32 %s719, %s719
  %s722 = ssub.f32 %s720, %s721
  %s723 = smax.f32 %s722, 0.0
  %s724 = sadd.f32 %s723, 1e-05
  %v725 = vstv %s724
  %v726 = vrsqrt.pop %v725
  %s727 = vtos %v726
  %v728 = vstv %s719
  %v729 = vsub.f32 %v658, %v728
  %v730 = vsub.f32 %v659, %v728
  %v731 = vlaneseq
  %v732 = vshrl.u32 %v731, 7
  %v733 = vsub.s32 1, %v732
  %v734 = vrot.slane %v322, %v733
  %v735 = vmul.f32 %v734, %v729
  %v736 = vmul.f32 %v734, %v730
  %v737 = vstv %s727
  %v738 = vmul.f32 %v735, %v737
  %v739 = vmul.f32 %v736, %v737
  %v740 = vlaneseq
  %v741 = vshrl.u32 %v740, 7
  %v742 = vsub.s32 2, %v741
  %v743 = vrot.slane %v322, %v742
  %v744 = vadd.f32 %v738, %v743
  %v745 = vadd.f32 %v739, %v743
  %v746 = vsel %vm466, %v684, 0.0
  %v747 = vsel %vm466, %v685, 0.0
  %v748 = vadd.f32 %v746, %v747
  %v749 = vrot.slane %v748, 4
  %v750 = vadd.f32 %v748, %v749
  %v751 = vrot.slane %v750, 2
  %v752 = vadd.f32 %v750, %v751
  %v753 = vrot.slane %v752, 1
  %v754 = vadd.f32 %v752, %v753
  %v755 = vsel %vm476, %v754, 0.0
  %756 = vadd.xlane.f32.xlu0 %v755
  %v757 = vpop.xlane.xlu0 %756
  %v758 = vrot.slane %v757, 4
  %v759 = vadd.f32 %v757, %v758
  %v760 = vrot.slane %v759, 2
  %v761 = vadd.f32 %v759, %v760
  %v762 = vrot.slane %v761, 1
  %v763 = vadd.f32 %v761, %v762
  %s764 = vtos %v763
  %766 = vrot.lane.b32.xlu0 %v754, 96
  %v767 = vpop.permute.xlu0 %766
  %v769 = vsel %vm476, %v767, 0.0
  %770 = vadd.xlane.f32.xlu0 %v769
  %v771 = vpop.xlane.xlu0 %770
  %v772 = vrot.slane %v771, 4
  %v773 = vadd.f32 %v771, %v772
  %v774 = vrot.slane %v773, 2
  %v775 = vadd.f32 %v773, %v774
  %v776 = vrot.slane %v775, 1
  %v777 = vadd.f32 %v775, %v776
  %s778 = vtos %v777
  %s779 = smul.f32 %s764, 0.001953125
  %s780 = smul.f32 %s778, 0.001953125
  %s781 = smul.f32 %s779, %s779
  %s782 = ssub.f32 %s780, %s781
  %s783 = smax.f32 %s782, 0.0
  %s784 = sadd.f32 %s783, 1e-05
  %v785 = vstv %s784
  %v786 = vrsqrt.pop %v785
  %s787 = vtos %v786
  %v788 = vstv %s779
  %v789 = vsub.f32 %v660, %v788
  %v790 = vsub.f32 %v661, %v788
  %v791 = vmul.f32 %v734, %v789
  %v792 = vmul.f32 %v734, %v790
  %v793 = vstv %s787
  %v794 = vmul.f32 %v791, %v793
  %v795 = vmul.f32 %v792, %v793
  %v796 = vadd.f32 %v794, %v743
  %v797 = vadd.f32 %v795, %v743
  %v798 = vlaneseq
  %v799 = vshrl.u32 %v798, 7
  %v800 = vsub.s32 3, %v799
  %v801 = vrot.slane %v322, %v800
  %v803 = vsel %vm461, %v744, 0
  %v806 = vsel %vm461, %v745, 0
  %v809 = vsel %vm461, %v796, 0
  %v812 = vsel %vm461, %v797, 0
  %814 = vmatprep.subr.mxu0 0.0
  %815 = vmatpush1.msra.mxu0 0.0
  %816 = vmatprep.subr.mxu0 0.0
  %817 = vmatpush1.msra.mxu0 0.0
  %818 = vmatprep.subr.mxu0 0.0
  %819 = vmatpush1.msra.mxu0 0.0
  %820 = vmatprep.subr.mxu0 0.0
  %821 = vmatpush1.msra.mxu0 0.0
  %822 = vmatprep.subr.mxu0 0.0
  %823 = vmatpush1.msra.mxu0 0.0
  %824 = vmatprep.subr.mxu0 0.0
  %825 = vmatpush1.msra.mxu0 0.0
  %826 = vmatprep.subr.mxu0 0.0
  %827 = vmatpush1.msra.mxu0 0.0
  %828 = vmatprep.subr.mxu0 0.0
  %829 = vmatpush1.msra.mxu0 0.0
  %830 = vmatprep.subr.mxu0 0.0
  %831 = vmatpush1.msra.mxu0 0.0
  %832 = vmatprep.subr.mxu0 0.0
  %833 = vmatpush1.msra.mxu0 0.0
  %834 = vmatprep.subr.mxu0 0.0
  %835 = vmatpush1.msra.mxu0 0.0
  %836 = vmatprep.subr.mxu0 0.0
  %837 = vmatpush1.msra.mxu0 0.0
  %838 = vmatprep.subr.mxu0 0.0
  %839 = vmatpush1.msra.mxu0 %v320
  %840 = vmatprep.subr.mxu0 0.0
  %841 = vmatpush1.msra.mxu0 %v319
  %842 = vmatprep.subr.mxu0 0.0
  %843 = vmatpush1.msra.mxu0 %v318
  %844 = vmatprep.subr.mxu0 0.0
  %845 = vmatpush1.msra.mxu0 %v317
  %846 = vmatprep.subr.mxu0 0.0
  %847 = vmatpush2.msra.mxu0 0.0
  %848 = vmatprep.subr.mxu0 0.0
  %849 = vmatpush2.msra.mxu0 0.0
  %850 = vmatprep.subr.mxu0 0.0
  %851 = vmatpush2.msra.mxu0 0.0
  %852 = vmatprep.subr.mxu0 0.0
  %853 = vmatpush2.msra.mxu0 0.0
  %854 = vmatprep.subr.mxu0 0.0
  %855 = vmatpush2.msra.mxu0 0.0
  %856 = vmatprep.subr.mxu0 0.0
  %857 = vmatpush2.msra.mxu0 0.0
  %858 = vmatprep.subr.mxu0 0.0
  %859 = vmatpush2.msra.mxu0 0.0
  %860 = vmatprep.subr.mxu0 0.0
  %861 = vmatpush2.msra.mxu0 0.0
  %862 = vmatprep.subr.mxu0 0.0
  %863 = vmatpush2.msra.mxu0 0.0
  %864 = vmatprep.subr.mxu0 0.0
  %865 = vmatpush2.msra.mxu0 0.0
  %866 = vmatprep.subr.mxu0 0.0
  %867 = vmatpush2.msra.mxu0 0.0
  %868 = vmatprep.subr.mxu0 0.0
  %869 = vmatpush2.msra.mxu0 0.0
  %870 = vmatprep.subr.mxu0 0.0
  %871 = vmatpush2.msra.mxu0 0.0
  %872 = vmatprep.subr.mxu0 0.0
  %873 = vmatpush2.msra.mxu0 0.0
  %874 = vmatprep.subr.mxu0 0.0
  %875 = vmatpush2.msra.mxu0 0.0
  %876 = vmatprep.subr.mxu0 0.0
  %877 = vmatpush2.msra.mxu0 0.0
  %878 = vmatprep.mubr.f32.mxu0 0.0
  %879 = vmatmul.mubr.f32.gmra.mxu0 %v803
  %v880 = vpop.f32.mrf.mxu0
  %v881 = vadd.f32 %v801, %v880
  %v882 = vpop.f32.mrf.mxu0
  %883 = vmatprep.mubr.f32.mxu0 0.0
  %884 = vmatmul.mubr.f32.gmra.mxu0 %v806
  %v885 = vpop.f32.mrf.mxu0
  %v886 = vadd.f32 %v801, %v885
  %v887 = vpop.f32.mrf.mxu0
  %888 = vmatprep.mubr.f32.mxu0 0.0
  %889 = vmatmul.mubr.f32.gmra.mxu0 %v809
  %v890 = vpop.f32.mrf.mxu0
  %v891 = vadd.f32 %v801, %v890
  %v892 = vpop.f32.mrf.mxu0
  %893 = vmatprep.mubr.f32.mxu0 0.0
  %894 = vmatmul.mubr.f32.gmra.mxu0 %v812
  %v895 = vpop.f32.mrf.mxu0
  %v896 = vadd.f32 %v801, %v895
  %v897 = vpop.f32.mrf.mxu0
  %898 = vdwg.mxu0
  %v899 = vadd.f32 %v297, %v881
  %v900 = vadd.f32 %v302, %v886
  %v901 = vadd.f32 %v307, %v891
  %v902 = vadd.f32 %v312, %v896
  %s903 = scalar_lea.vmem %s11, 16
  %v904 = vld [vmem:[%s903] sm:$0xff]
  %v905 = vld [vmem:[%s903 + $0x8] sm:$0xff]
  %s906 = scalar_lea.vmem %s12, 32
  %v907 = vld [vmem:[%s906] sm:$0xff]
  %v908 = vld [vmem:[%s906 + $0x8] sm:$0xff]
  %v909 = vld [vmem:[%s906 + $0x10] sm:$0xff]
  %v910 = vld [vmem:[%s906 + $0x18] sm:$0xff]
  %s911 = scalar_lea.vmem %s13, 16
  %v912 = vld [vmem:[%s911] sm:$0xff]
  %v913 = vld [vmem:[%s911 + $0x8] sm:$0xf]
  %v914 = vlaneseq
  %v915 = vshrl.u32 %v914, 7
  %v916 = vsub.s32 0, %v915
  %v917 = vrot.slane %v912, %v916
  %v919 = vsel %vm327, %v899, 0
  %v922 = vsel %vm327, %v900, 0
  %v925 = vsel %vm327, %v901, 0
  %v928 = vsel %vm327, %v902, 0
  %930 = vmatprep.subr.mxu0 0.0
  %931 = vmatpush1.msra.mxu0 0.0
  %932 = vmatprep.subr.mxu0 0.0
  %933 = vmatpush1.msra.mxu0 0.0
  %934 = vmatprep.subr.mxu0 0.0
  %935 = vmatpush1.msra.mxu0 0.0
  %936 = vmatprep.subr.mxu0 0.0
  %937 = vmatpush1.msra.mxu0 0.0
  %938 = vmatprep.subr.mxu0 0.0
  %939 = vmatpush1.msra.mxu0 0.0
  %940 = vmatprep.subr.mxu0 0.0
  %941 = vmatpush1.msra.mxu0 0.0
  %942 = vmatprep.subr.mxu0 0.0
  %943 = vmatpush1.msra.mxu0 0.0
  %944 = vmatprep.subr.mxu0 0.0
  %945 = vmatpush1.msra.mxu0 0.0
  %946 = vmatprep.subr.mxu0 0.0
  %947 = vmatpush1.msra.mxu0 0.0
  %948 = vmatprep.subr.mxu0 0.0
  %949 = vmatpush1.msra.mxu0 0.0
  %950 = vmatprep.subr.mxu0 0.0
  %951 = vmatpush1.msra.mxu0 0.0
  %952 = vmatprep.subr.mxu0 0.0
  %953 = vmatpush1.msra.mxu0 0.0
  %954 = vmatprep.subr.mxu0 0.0
  %955 = vmatpush1.msra.mxu0 0.0
  %956 = vmatprep.subr.mxu0 0.0
  %957 = vmatpush1.msra.mxu0 0.0
  %958 = vmatprep.subr.mxu0 0.0
  %959 = vmatpush1.msra.mxu0 %v905
  %960 = vmatprep.subr.mxu0 0.0
  %961 = vmatpush1.msra.mxu0 %v904
  %962 = vmatprep.subr.mxu0 0.0
  %963 = vmatpush2.msra.mxu0 0.0
  %964 = vmatprep.subr.mxu0 0.0
  %965 = vmatpush2.msra.mxu0 0.0
  %966 = vmatprep.subr.mxu0 0.0
  %967 = vmatpush2.msra.mxu0 0.0
  %968 = vmatprep.subr.mxu0 0.0
  %969 = vmatpush2.msra.mxu0 0.0
  %970 = vmatprep.subr.mxu0 0.0
  %971 = vmatpush2.msra.mxu0 0.0
  %972 = vmatprep.subr.mxu0 0.0
  %973 = vmatpush2.msra.mxu0 0.0
  %974 = vmatprep.subr.mxu0 0.0
  %975 = vmatpush2.msra.mxu0 0.0
  %976 = vmatprep.subr.mxu0 0.0
  %977 = vmatpush2.msra.mxu0 0.0
  %978 = vmatprep.subr.mxu0 0.0
  %979 = vmatpush2.msra.mxu0 0.0
  %980 = vmatprep.subr.mxu0 0.0
  %981 = vmatpush2.msra.mxu0 0.0
  %982 = vmatprep.subr.mxu0 0.0
  %983 = vmatpush2.msra.mxu0 0.0
  %984 = vmatprep.subr.mxu0 0.0
  %985 = vmatpush2.msra.mxu0 0.0
  %986 = vmatprep.subr.mxu0 0.0
  %987 = vmatpush2.msra.mxu0 0.0
  %988 = vmatprep.subr.mxu0 0.0
  %989 = vmatpush2.msra.mxu0 0.0
  %990 = vmatprep.subr.mxu0 0.0
  %991 = vmatpush2.msra.mxu0 0.0
  %992 = vmatprep.subr.mxu0 0.0
  %993 = vmatpush2.msra.mxu0 0.0
  %994 = vmatprep.mubr.f32.mxu0 0.0
  %995 = vmatmul.mubr.f32.gmra.mxu0 %v919
  %v996 = vpop.f32.mrf.mxu0
  %v997 = vadd.f32 %v917, %v996
  %v998 = vpop.f32.mrf.mxu0
  %999 = vmatprep.mubr.f32.mxu0 0.0
  %1000 = vmatmul.mubr.f32.gmra.mxu0 %v922
  %v1001 = vpop.f32.mrf.mxu0
  %v1002 = vadd.f32 %v917, %v1001
  %v1003 = vpop.f32.mrf.mxu0
  %1004 = vmatprep.mubr.f32.mxu0 0.0
  %1005 = vmatmul.mubr.f32.gmra.mxu0 %v925
  %v1006 = vpop.f32.mrf.mxu0
  %v1007 = vadd.f32 %v917, %v1006
  %v1008 = vpop.f32.mrf.mxu0
  %1009 = vmatprep.mubr.f32.mxu0 0.0
  %1010 = vmatmul.mubr.f32.gmra.mxu0 %v928
  %v1011 = vpop.f32.mrf.mxu0
  %v1012 = vadd.f32 %v917, %v1011
  %v1013 = vpop.f32.mrf.mxu0
  %1014 = vdwg.mxu0
  %vm1015 = vcmp.ge.f32.partialorder %v997, 0.0
  %vm1016 = vcmp.ge.f32.partialorder %v1002, 0.0
  %vm1017 = vcmp.ge.f32.partialorder %v1007, 0.0
  %vm1018 = vcmp.ge.f32.partialorder %v1012, 0.0
  %v1019 = vlaneseq
  %v1020 = vshrl.u32 %v1019, 7
  %v1021 = vsub.s32 1, %v1020
  %v1022 = vrot.slane %v912, %v1021
  %v1023 = vmul.f32 %v1022, %v997
  %v1024 = vmul.f32 %v1022, %v1002
  %v1025 = vmul.f32 %v1022, %v1007
  %v1026 = vmul.f32 %v1022, %v1012
  %v1027 = vsel %vm1015, %v997, %v1023
  %v1028 = vsel %vm1016, %v1002, %v1024
  %v1029 = vsel %vm1017, %v1007, %v1025
  %v1030 = vsel %vm1018, %v1012, %v1026
  %v1031 = vmul.f32 %v1027, %v1027
  %v1032 = vmul.f32 %v1028, %v1028
  %v1033 = vmul.f32 %v1029, %v1029
  %v1034 = vmul.f32 %v1030, %v1030
  %1039 = vrot.lane.b32.xlu0 %v1031, 32
  %v1040 = vpop.permute.xlu0 %1039
  %1041 = vrot.lane.b32.xlu0 %v1032, 32
  %v1042 = vpop.permute.xlu0 %1041
  %1043 = vrot.lane.b32.xlu0 %v1033, 32
  %v1044 = vpop.permute.xlu0 %1043
  %1045 = vrot.lane.b32.xlu0 %v1034, 32
  %v1046 = vpop.permute.xlu0 %1045
  %v1051 = vsel %vm461, %v1027, %v1040
  %v1052 = vsel %vm461, %v1028, %v1042
  %v1053 = vsel %vm461, %v1029, %v1044
  %v1054 = vsel %vm461, %v1030, %v1046
  %v1055 = vsel %vm466, %v1051, 0.0
  %v1056 = vsel %vm466, %v1052, 0.0
  %v1057 = vadd.f32 %v1055, %v1056
  %v1058 = vrot.slane %v1057, 4
  %v1059 = vadd.f32 %v1057, %v1058
  %v1060 = vrot.slane %v1059, 2
  %v1061 = vadd.f32 %v1059, %v1060
  %v1062 = vrot.slane %v1061, 1
  %v1063 = vadd.f32 %v1061, %v1062
  %v1064 = vsel %vm476, %v1063, 0.0
  %1065 = vadd.xlane.f32.xlu0 %v1064
  %v1066 = vpop.xlane.xlu0 %1065
  %v1067 = vrot.slane %v1066, 4
  %v1068 = vadd.f32 %v1066, %v1067
  %v1069 = vrot.slane %v1068, 2
  %v1070 = vadd.f32 %v1068, %v1069
  %v1071 = vrot.slane %v1070, 1
  %v1072 = vadd.f32 %v1070, %v1071
  %s1073 = vtos %v1072
  %1075 = vrot.lane.b32.xlu0 %v1063, 96
  %v1076 = vpop.permute.xlu0 %1075
  %v1078 = vsel %vm476, %v1076, 0.0
  %1079 = vadd.xlane.f32.xlu0 %v1078
  %v1080 = vpop.xlane.xlu0 %1079
  %v1081 = vrot.slane %v1080, 4
  %v1082 = vadd.f32 %v1080, %v1081
  %v1083 = vrot.slane %v1082, 2
  %v1084 = vadd.f32 %v1082, %v1083
  %v1085 = vrot.slane %v1084, 1
  %v1086 = vadd.f32 %v1084, %v1085
  %s1087 = vtos %v1086
  %s1088 = smul.f32 %s1073, 0.001953125
  %s1089 = smul.f32 %s1087, 0.001953125
  %s1090 = smul.f32 %s1088, %s1088
  %s1091 = ssub.f32 %s1089, %s1090
  %s1092 = smax.f32 %s1091, 0.0
  %s1093 = sadd.f32 %s1092, 1e-05
  %v1094 = vstv %s1093
  %v1095 = vrsqrt.pop %v1094
  %s1096 = vtos %v1095
  %v1097 = vstv %s1088
  %v1098 = vsub.f32 %v1027, %v1097
  %v1099 = vsub.f32 %v1028, %v1097
  %v1100 = vlaneseq
  %v1101 = vshrl.u32 %v1100, 7
  %v1102 = vsub.s32 2, %v1101
  %v1103 = vrot.slane %v912, %v1102
  %v1104 = vmul.f32 %v1103, %v1098
  %v1105 = vmul.f32 %v1103, %v1099
  %v1106 = vstv %s1096
  %v1107 = vmul.f32 %v1104, %v1106
  %v1108 = vmul.f32 %v1105, %v1106
  %v1109 = vlaneseq
  %v1110 = vshrl.u32 %v1109, 7
  %v1111 = vsub.s32 3, %v1110
  %v1112 = vrot.slane %v912, %v1111
  %v1113 = vadd.f32 %v1107, %v1112
  %v1114 = vadd.f32 %v1108, %v1112
  %v1115 = vsel %vm466, %v1053, 0.0
  %v1116 = vsel %vm466, %v1054, 0.0
  %v1117 = vadd.f32 %v1115, %v1116
  %v1118 = vrot.slane %v1117, 4
  %v1119 = vadd.f32 %v1117, %v1118
  %v1120 = vrot.slane %v1119, 2
  %v1121 = vadd.f32 %v1119, %v1120
  %v1122 = vrot.slane %v1121, 1
  %v1123 = vadd.f32 %v1121, %v1122
  %v1124 = vsel %vm476, %v1123, 0.0
  %1125 = vadd.xlane.f32.xlu0 %v1124
  %v1126 = vpop.xlane.xlu0 %1125
  %v1127 = vrot.slane %v1126, 4
  %v1128 = vadd.f32 %v1126, %v1127
  %v1129 = vrot.slane %v1128, 2
  %v1130 = vadd.f32 %v1128, %v1129
  %v1131 = vrot.slane %v1130, 1
  %v1132 = vadd.f32 %v1130, %v1131
  %s1133 = vtos %v1132
  %1135 = vrot.lane.b32.xlu0 %v1123, 96
  %v1136 = vpop.permute.xlu0 %1135
  %v1138 = vsel %vm476, %v1136, 0.0
  %1139 = vadd.xlane.f32.xlu0 %v1138
  %v1140 = vpop.xlane.xlu0 %1139
  %v1141 = vrot.slane %v1140, 4
  %v1142 = vadd.f32 %v1140, %v1141
  %v1143 = vrot.slane %v1142, 2
  %v1144 = vadd.f32 %v1142, %v1143
  %v1145 = vrot.slane %v1144, 1
  %v1146 = vadd.f32 %v1144, %v1145
  %s1147 = vtos %v1146
  %s1148 = smul.f32 %s1133, 0.001953125
  %s1149 = smul.f32 %s1147, 0.001953125
  %s1150 = smul.f32 %s1148, %s1148
  %s1151 = ssub.f32 %s1149, %s1150
  %s1152 = smax.f32 %s1151, 0.0
  %s1153 = sadd.f32 %s1152, 1e-05
  %v1154 = vstv %s1153
  %v1155 = vrsqrt.pop %v1154
  %s1156 = vtos %v1155
  %v1157 = vstv %s1148
  %v1158 = vsub.f32 %v1029, %v1157
  %v1159 = vsub.f32 %v1030, %v1157
  %v1160 = vmul.f32 %v1103, %v1158
  %v1161 = vmul.f32 %v1103, %v1159
  %v1162 = vstv %s1156
  %v1163 = vmul.f32 %v1160, %v1162
  %v1164 = vmul.f32 %v1161, %v1162
  %v1165 = vadd.f32 %v1163, %v1112
  %v1166 = vadd.f32 %v1164, %v1112
  %v1167 = vlaneseq
  %v1168 = vshrl.u32 %v1167, 7
  %v1169 = vsub.s32 5, %v1168
  %v1170 = vrot.slane %v912, %v1169
  %v1171 = vmul.f32 %v1113, %v1170
  %v1172 = vmul.f32 %v1114, %v1170
  %v1173 = vmul.f32 %v1165, %v1170
  %v1174 = vmul.f32 %v1166, %v1170
  %v1175 = vlaneseq
  %v1176 = vshrl.u32 %v1175, 7
  %v1177 = vsub.s32 7, %v1176
  %v1178 = vrot.slane %v912, %v1177
  %v1179 = vadd.f32 %v1171, %v1178
  %v1180 = vadd.f32 %v1172, %v1178
  %v1181 = vadd.f32 %v1173, %v1178
  %v1182 = vadd.f32 %v1174, %v1178
  %v1183 = vrot.slane %v1113, 6
  %v1184 = vrot.slane %v1114, 6
  %v1185 = vrot.slane %v1165, 6
  %v1186 = vrot.slane %v1166, 6
  %vm1187 = vcmp.lt.s32.totalorder %v57, 2
  %v1188 = vsel %vm1187, %v1185, %v1186
  %v1189 = vsel %vm1187, %v1184, %v1185
  %v1190 = vsel %vm1187, %v1183, %v1184
  %v1191 = vsel %vm1187, %v1186, %v1183
  %v1192 = vmul.f32 %v1191, %v129
  %v1193 = vmul.f32 %v1190, %v130
  %v1194 = vmul.f32 %v1189, %v131
  %v1195 = vmul.f32 %v1188, %v132
  %v1196 = vlaneseq
  %v1197 = vshrl.u32 %v1196, 7
  %v1198 = vsub.s32 4, %v1197
  %v1199 = vrot.slane %v912, %v1198
  %v1200 = vmul.f32 %v1192, %v1199
  %v1201 = vmul.f32 %v1193, %v1199
  %v1202 = vmul.f32 %v1194, %v1199
  %v1203 = vmul.f32 %v1195, %v1199
  %v1204 = vadd.f32 %v1179, %v1200
  %v1205 = vadd.f32 %v1180, %v1201
  %v1206 = vadd.f32 %v1181, %v1202
  %v1207 = vadd.f32 %v1182, %v1203
  %v1208 = vrot.slane %v1113, 2
  %v1209 = vrot.slane %v1114, 2
  %v1210 = vrot.slane %v1165, 2
  %v1211 = vrot.slane %v1166, 2
  %vm1212 = vcmp.lt.s32.totalorder %v57, 6
  %v1213 = vsel %vm1212, %v1210, %v1211
  %v1214 = vsel %vm1212, %v1209, %v1210
  %v1215 = vsel %vm1212, %v1208, %v1209
  %v1216 = vsel %vm1212, %v1211, %v1208
  %v1217 = vmul.f32 %v1215, %v201
  %v1218 = vmul.f32 %v1214, %v202
  %v1219 = vmul.f32 %v1213, %v203
  %v1220 = vmul.f32 %v1216, %v204
  %v1221 = vlaneseq
  %v1222 = vshrl.u32 %v1221, 7
  %v1223 = vsub.s32 6, %v1222
  %v1224 = vrot.slane %v912, %v1223
  %v1225 = vmul.f32 %v1217, %v1224
  %v1226 = vmul.f32 %v1218, %v1224
  %v1227 = vmul.f32 %v1219, %v1224
  %v1228 = vmul.f32 %v1220, %v1224
  %v1229 = vadd.f32 %v1204, %v1225
  %v1230 = vadd.f32 %v1205, %v1226
  %v1231 = vadd.f32 %v1206, %v1227
  %v1232 = vadd.f32 %v1207, %v1228
  %vm1233 = vcmp.ge.f32.partialorder %v1229, 0.0
  %vm1234 = vcmp.ge.f32.partialorder %v1230, 0.0
  %vm1235 = vcmp.ge.f32.partialorder %v1231, 0.0
  %vm1236 = vcmp.ge.f32.partialorder %v1232, 0.0
  %v1237 = vlaneseq
  %v1238 = vshrl.u32 %v1237, 7
  %v1239 = vsub.s32 0, %v1238
  %v1240 = vrot.slane %v913, %v1239
  %v1241 = vmul.f32 %v1240, %v1229
  %v1242 = vmul.f32 %v1240, %v1230
  %v1243 = vmul.f32 %v1240, %v1231
  %v1244 = vmul.f32 %v1240, %v1232
  %v1245 = vsel %vm1233, %v1229, %v1241
  %v1246 = vsel %vm1234, %v1230, %v1242
  %v1247 = vsel %vm1235, %v1231, %v1243
  %v1248 = vsel %vm1236, %v1232, %v1244
  %v1249 = vmul.f32 %v1245, %v1245
  %v1250 = vmul.f32 %v1246, %v1246
  %v1251 = vmul.f32 %v1247, %v1247
  %v1252 = vmul.f32 %v1248, %v1248
  %1257 = vrot.lane.b32.xlu0 %v1249, 32
  %v1258 = vpop.permute.xlu0 %1257
  %1259 = vrot.lane.b32.xlu0 %v1250, 32
  %v1260 = vpop.permute.xlu0 %1259
  %1261 = vrot.lane.b32.xlu0 %v1251, 32
  %v1262 = vpop.permute.xlu0 %1261
  %1263 = vrot.lane.b32.xlu0 %v1252, 32
  %v1264 = vpop.permute.xlu0 %1263
  %v1269 = vsel %vm461, %v1245, %v1258
  %v1270 = vsel %vm461, %v1246, %v1260
  %v1271 = vsel %vm461, %v1247, %v1262
  %v1272 = vsel %vm461, %v1248, %v1264
  %v1273 = vsel %vm466, %v1269, 0.0
  %v1274 = vsel %vm466, %v1270, 0.0
  %v1275 = vadd.f32 %v1273, %v1274
  %v1276 = vrot.slane %v1275, 4
  %v1277 = vadd.f32 %v1275, %v1276
  %v1278 = vrot.slane %v1277, 2
  %v1279 = vadd.f32 %v1277, %v1278
  %v1280 = vrot.slane %v1279, 1
  %v1281 = vadd.f32 %v1279, %v1280
  %v1282 = vsel %vm476, %v1281, 0.0
  %1283 = vadd.xlane.f32.xlu0 %v1282
  %v1284 = vpop.xlane.xlu0 %1283
  %v1285 = vrot.slane %v1284, 4
  %v1286 = vadd.f32 %v1284, %v1285
  %v1287 = vrot.slane %v1286, 2
  %v1288 = vadd.f32 %v1286, %v1287
  %v1289 = vrot.slane %v1288, 1
  %v1290 = vadd.f32 %v1288, %v1289
  %s1291 = vtos %v1290
  %1293 = vrot.lane.b32.xlu0 %v1281, 96
  %v1294 = vpop.permute.xlu0 %1293
  %v1296 = vsel %vm476, %v1294, 0.0
  %1297 = vadd.xlane.f32.xlu0 %v1296
  %v1298 = vpop.xlane.xlu0 %1297
  %v1299 = vrot.slane %v1298, 4
  %v1300 = vadd.f32 %v1298, %v1299
  %v1301 = vrot.slane %v1300, 2
  %v1302 = vadd.f32 %v1300, %v1301
  %v1303 = vrot.slane %v1302, 1
  %v1304 = vadd.f32 %v1302, %v1303
  %s1305 = vtos %v1304
  %s1306 = smul.f32 %s1291, 0.001953125
  %s1307 = smul.f32 %s1305, 0.001953125
  %s1308 = smul.f32 %s1306, %s1306
  %s1309 = ssub.f32 %s1307, %s1308
  %s1310 = smax.f32 %s1309, 0.0
  %s1311 = sadd.f32 %s1310, 1e-05
  %v1312 = vstv %s1311
  %v1313 = vrsqrt.pop %v1312
  %s1314 = vtos %v1313
  %v1315 = vstv %s1306
  %v1316 = vsub.f32 %v1245, %v1315
  %v1317 = vsub.f32 %v1246, %v1315
  %v1318 = vlaneseq
  %v1319 = vshrl.u32 %v1318, 7
  %v1320 = vsub.s32 1, %v1319
  %v1321 = vrot.slane %v913, %v1320
  %v1322 = vmul.f32 %v1321, %v1316
  %v1323 = vmul.f32 %v1321, %v1317
  %v1324 = vstv %s1314
  %v1325 = vmul.f32 %v1322, %v1324
  %v1326 = vmul.f32 %v1323, %v1324
  %v1327 = vlaneseq
  %v1328 = vshrl.u32 %v1327, 7
  %v1329 = vsub.s32 2, %v1328
  %v1330 = vrot.slane %v913, %v1329
  %v1331 = vadd.f32 %v1325, %v1330
  %v1332 = vadd.f32 %v1326, %v1330
  %v1333 = vsel %vm466, %v1271, 0.0
  %v1334 = vsel %vm466, %v1272, 0.0
  %v1335 = vadd.f32 %v1333, %v1334
  %v1336 = vrot.slane %v1335, 4
  %v1337 = vadd.f32 %v1335, %v1336
  %v1338 = vrot.slane %v1337, 2
  %v1339 = vadd.f32 %v1337, %v1338
  %v1340 = vrot.slane %v1339, 1
  %v1341 = vadd.f32 %v1339, %v1340
  %v1342 = vsel %vm476, %v1341, 0.0
  %1343 = vadd.xlane.f32.xlu0 %v1342
  %v1344 = vpop.xlane.xlu0 %1343
  %v1345 = vrot.slane %v1344, 4
  %v1346 = vadd.f32 %v1344, %v1345
  %v1347 = vrot.slane %v1346, 2
  %v1348 = vadd.f32 %v1346, %v1347
  %v1349 = vrot.slane %v1348, 1
  %v1350 = vadd.f32 %v1348, %v1349
  %s1351 = vtos %v1350
  %1353 = vrot.lane.b32.xlu0 %v1341, 96
  %v1354 = vpop.permute.xlu0 %1353
  %v1356 = vsel %vm476, %v1354, 0.0
  %1357 = vadd.xlane.f32.xlu0 %v1356
  %v1358 = vpop.xlane.xlu0 %1357
  %v1359 = vrot.slane %v1358, 4
  %v1360 = vadd.f32 %v1358, %v1359
  %v1361 = vrot.slane %v1360, 2
  %v1362 = vadd.f32 %v1360, %v1361
  %v1363 = vrot.slane %v1362, 1
  %v1364 = vadd.f32 %v1362, %v1363
  %s1365 = vtos %v1364
  %s1366 = smul.f32 %s1351, 0.001953125
  %s1367 = smul.f32 %s1365, 0.001953125
  %s1368 = smul.f32 %s1366, %s1366
  %s1369 = ssub.f32 %s1367, %s1368
  %s1370 = smax.f32 %s1369, 0.0
  %s1371 = sadd.f32 %s1370, 1e-05
  %v1372 = vstv %s1371
  %v1373 = vrsqrt.pop %v1372
  %s1374 = vtos %v1373
  %v1375 = vstv %s1366
  %v1376 = vsub.f32 %v1247, %v1375
  %v1377 = vsub.f32 %v1248, %v1375
  %v1378 = vmul.f32 %v1321, %v1376
  %v1379 = vmul.f32 %v1321, %v1377
  %v1380 = vstv %s1374
  %v1381 = vmul.f32 %v1378, %v1380
  %v1382 = vmul.f32 %v1379, %v1380
  %v1383 = vadd.f32 %v1381, %v1330
  %v1384 = vadd.f32 %v1382, %v1330
  %v1385 = vlaneseq
  %v1386 = vshrl.u32 %v1385, 7
  %v1387 = vsub.s32 3, %v1386
  %v1388 = vrot.slane %v913, %v1387
  %v1390 = vsel %vm461, %v1331, 0
  %v1393 = vsel %vm461, %v1332, 0
  %v1396 = vsel %vm461, %v1383, 0
  %v1399 = vsel %vm461, %v1384, 0
  %1401 = vmatprep.subr.mxu0 0.0
  %1402 = vmatpush1.msra.mxu0 0.0
  %1403 = vmatprep.subr.mxu0 0.0
  %1404 = vmatpush1.msra.mxu0 0.0
  %1405 = vmatprep.subr.mxu0 0.0
  %1406 = vmatpush1.msra.mxu0 0.0
  %1407 = vmatprep.subr.mxu0 0.0
  %1408 = vmatpush1.msra.mxu0 0.0
  %1409 = vmatprep.subr.mxu0 0.0
  %1410 = vmatpush1.msra.mxu0 0.0
  %1411 = vmatprep.subr.mxu0 0.0
  %1412 = vmatpush1.msra.mxu0 0.0
  %1413 = vmatprep.subr.mxu0 0.0
  %1414 = vmatpush1.msra.mxu0 0.0
  %1415 = vmatprep.subr.mxu0 0.0
  %1416 = vmatpush1.msra.mxu0 0.0
  %1417 = vmatprep.subr.mxu0 0.0
  %1418 = vmatpush1.msra.mxu0 0.0
  %1419 = vmatprep.subr.mxu0 0.0
  %1420 = vmatpush1.msra.mxu0 0.0
  %1421 = vmatprep.subr.mxu0 0.0
  %1422 = vmatpush1.msra.mxu0 0.0
  %1423 = vmatprep.subr.mxu0 0.0
  %1424 = vmatpush1.msra.mxu0 0.0
  %1425 = vmatprep.subr.mxu0 0.0
  %1426 = vmatpush1.msra.mxu0 %v910
  %1427 = vmatprep.subr.mxu0 0.0
  %1428 = vmatpush1.msra.mxu0 %v909
  %1429 = vmatprep.subr.mxu0 0.0
  %1430 = vmatpush1.msra.mxu0 %v908
  %1431 = vmatprep.subr.mxu0 0.0
  %1432 = vmatpush1.msra.mxu0 %v907
  %1433 = vmatprep.subr.mxu0 0.0
  %1434 = vmatpush2.msra.mxu0 0.0
  %1435 = vmatprep.subr.mxu0 0.0
  %1436 = vmatpush2.msra.mxu0 0.0
  %1437 = vmatprep.subr.mxu0 0.0
  %1438 = vmatpush2.msra.mxu0 0.0
  %1439 = vmatprep.subr.mxu0 0.0
  %1440 = vmatpush2.msra.mxu0 0.0
  %1441 = vmatprep.subr.mxu0 0.0
  %1442 = vmatpush2.msra.mxu0 0.0
  %1443 = vmatprep.subr.mxu0 0.0
  %1444 = vmatpush2.msra.mxu0 0.0
  %1445 = vmatprep.subr.mxu0 0.0
  %1446 = vmatpush2.msra.mxu0 0.0
  %1447 = vmatprep.subr.mxu0 0.0
  %1448 = vmatpush2.msra.mxu0 0.0
  %1449 = vmatprep.subr.mxu0 0.0
  %1450 = vmatpush2.msra.mxu0 0.0
  %1451 = vmatprep.subr.mxu0 0.0
  %1452 = vmatpush2.msra.mxu0 0.0
  %1453 = vmatprep.subr.mxu0 0.0
  %1454 = vmatpush2.msra.mxu0 0.0
  %1455 = vmatprep.subr.mxu0 0.0
  %1456 = vmatpush2.msra.mxu0 0.0
  %1457 = vmatprep.subr.mxu0 0.0
  %1458 = vmatpush2.msra.mxu0 0.0
  %1459 = vmatprep.subr.mxu0 0.0
  %1460 = vmatpush2.msra.mxu0 0.0
  %1461 = vmatprep.subr.mxu0 0.0
  %1462 = vmatpush2.msra.mxu0 0.0
  %1463 = vmatprep.subr.mxu0 0.0
  %1464 = vmatpush2.msra.mxu0 0.0
  %1465 = vmatprep.mubr.f32.mxu0 0.0
  %1466 = vmatmul.mubr.f32.gmra.mxu0 %v1390
  %v1467 = vpop.f32.mrf.mxu0
  %v1468 = vadd.f32 %v1388, %v1467
  %v1469 = vpop.f32.mrf.mxu0
  %1470 = vmatprep.mubr.f32.mxu0 0.0
  %1471 = vmatmul.mubr.f32.gmra.mxu0 %v1393
  %v1472 = vpop.f32.mrf.mxu0
  %v1473 = vadd.f32 %v1388, %v1472
  %v1474 = vpop.f32.mrf.mxu0
  %1475 = vmatprep.mubr.f32.mxu0 0.0
  %1476 = vmatmul.mubr.f32.gmra.mxu0 %v1396
  %v1477 = vpop.f32.mrf.mxu0
  %v1478 = vadd.f32 %v1388, %v1477
  %v1479 = vpop.f32.mrf.mxu0
  %1480 = vmatprep.mubr.f32.mxu0 0.0
  %1481 = vmatmul.mubr.f32.gmra.mxu0 %v1399
  %v1482 = vpop.f32.mrf.mxu0
  %v1483 = vadd.f32 %v1388, %v1482
  %v1484 = vpop.f32.mrf.mxu0
  %1485 = vdwg.mxu0
  %v1486 = vadd.f32 %v899, %v1468
  %v1487 = vadd.f32 %v900, %v1473
  %v1488 = vadd.f32 %v901, %v1478
  %v1489 = vadd.f32 %v902, %v1483
  %v1490 = vld [vmem:[%s1] sm:$0xff]
  %v1491 = vld [vmem:[%s1 + $0x8] sm:$0xff]
  %v1492 = vld [vmem:[%s1 + $0x10] sm:$0xff]
  %v1493 = vld [vmem:[%s1 + $0x18] sm:$0xff]
  %v1494 = vld [vmem:[%s4] sm:$0xff]
  %v1495 = vld [vmem:[%s4 + $0x8] sm:$0xff]
  %v1496 = vld [vmem:[%s4 + $0x10] sm:$0xff]
  %v1497 = vld [vmem:[%s4 + $0x18] sm:$0xff]
  %v1498 = vld [vmem:[%s4 + $0x20] sm:$0xff]
  %v1499 = vld [vmem:[%s4 + $0x28] sm:$0xff]
  %v1500 = vld [vmem:[%s4 + $0x30] sm:$0xff]
  %v1501 = vld [vmem:[%s4 + $0x38] sm:$0xff]
  %v1502 = vld [vmem:[%s4 + $0x40] sm:$0xff]
  %v1503 = vld [vmem:[%s4 + $0x48] sm:$0xff]
  %v1504 = vld [vmem:[%s4 + $0x50] sm:$0xff]
  %v1505 = vld [vmem:[%s4 + $0x58] sm:$0xff]
  %v1506 = vld [vmem:[%s4 + $0x60] sm:$0xff]
  %v1507 = vld [vmem:[%s4 + $0x68] sm:$0xff]
  %v1508 = vld [vmem:[%s4 + $0x70] sm:$0xff]
  %v1509 = vld [vmem:[%s4 + $0x78] sm:$0xff]
  %v1510 = vld [vmem:[%s4 + $0x80] sm:$0xff]
  %v1511 = vld [vmem:[%s4 + $0x88] sm:$0xff]
  %v1512 = vld [vmem:[%s4 + $0x90] sm:$0xff]
  %v1513 = vld [vmem:[%s4 + $0x98] sm:$0xff]
  %v1514 = vld [vmem:[%s4 + $0xa0] sm:$0xff]
  %v1515 = vld [vmem:[%s4 + $0xa8] sm:$0xff]
  %v1516 = vld [vmem:[%s4 + $0xb0] sm:$0xff]
  %v1517 = vld [vmem:[%s4 + $0xb8] sm:$0xff]
  %v1518 = vld [vmem:[%s4 + $0xc0] sm:$0xff]
  %v1519 = vld [vmem:[%s4 + $0xc8] sm:$0xff]
  %v1520 = vld [vmem:[%s4 + $0xd0] sm:$0xff]
  %v1521 = vld [vmem:[%s4 + $0xd8] sm:$0xff]
  %v1522 = vld [vmem:[%s4 + $0xe0] sm:$0xff]
  %v1523 = vld [vmem:[%s4 + $0xe8] sm:$0xff]
  %v1524 = vld [vmem:[%s4 + $0xf0] sm:$0xff]
  %v1525 = vld [vmem:[%s4 + $0xf8] sm:$0xff]
  %v1526 = vld [vmem:[%s4 + $0x100] sm:$0xff]
  %v1527 = vld [vmem:[%s4 + $0x108] sm:$0xff]
  %v1528 = vld [vmem:[%s4 + $0x110] sm:$0xff]
  %v1529 = vld [vmem:[%s4 + $0x118] sm:$0xff]
  %v1530 = vld [vmem:[%s4 + $0x120] sm:$0xff]
  %v1531 = vld [vmem:[%s4 + $0x128] sm:$0xff]
  %v1532 = vld [vmem:[%s4 + $0x130] sm:$0xff]
  %v1533 = vld [vmem:[%s4 + $0x138] sm:$0xff]
  %v1534 = vld [vmem:[%s4 + $0x140] sm:$0xff]
  %v1535 = vld [vmem:[%s4 + $0x148] sm:$0xff]
  %v1536 = vld [vmem:[%s4 + $0x150] sm:$0xff]
  %v1537 = vld [vmem:[%s4 + $0x158] sm:$0xff]
  %v1538 = vld [vmem:[%s4 + $0x160] sm:$0xff]
  %v1539 = vld [vmem:[%s4 + $0x168] sm:$0xff]
  %v1540 = vld [vmem:[%s4 + $0x170] sm:$0xff]
  %v1541 = vld [vmem:[%s4 + $0x178] sm:$0xff]
  %v1542 = vld [vmem:[%s4 + $0x180] sm:$0xff]
  %v1543 = vld [vmem:[%s4 + $0x188] sm:$0xff]
  %v1544 = vld [vmem:[%s4 + $0x190] sm:$0xff]
  %v1545 = vld [vmem:[%s4 + $0x198] sm:$0xff]
  %v1546 = vld [vmem:[%s4 + $0x1a0] sm:$0xff]
  %v1547 = vld [vmem:[%s4 + $0x1a8] sm:$0xff]
  %v1548 = vld [vmem:[%s4 + $0x1b0] sm:$0xff]
  %v1549 = vld [vmem:[%s4 + $0x1b8] sm:$0xff]
  %v1550 = vld [vmem:[%s4 + $0x1c0] sm:$0xff]
  %v1551 = vld [vmem:[%s4 + $0x1c8] sm:$0xff]
  %v1552 = vld [vmem:[%s4 + $0x1d0] sm:$0xff]
  %v1553 = vld [vmem:[%s4 + $0x1d8] sm:$0xff]
  %v1554 = vld [vmem:[%s4 + $0x1e0] sm:$0xff]
  %v1555 = vld [vmem:[%s4 + $0x1e8] sm:$0xff]
  %v1556 = vld [vmem:[%s4 + $0x1f0] sm:$0xff]
  %v1557 = vld [vmem:[%s4 + $0x1f8] sm:$0xff]
  %v1558 = vld [vmem:[%s4 + $0x200] sm:$0xff]
  %v1559 = vld [vmem:[%s4 + $0x208] sm:$0xff]
  %v1560 = vld [vmem:[%s4 + $0x210] sm:$0xff]
  %v1561 = vld [vmem:[%s4 + $0x218] sm:$0xff]
  %v1562 = vld [vmem:[%s4 + $0x220] sm:$0xff]
  %v1563 = vld [vmem:[%s4 + $0x228] sm:$0xff]
  %v1564 = vld [vmem:[%s4 + $0x230] sm:$0xff]
  %v1565 = vld [vmem:[%s4 + $0x238] sm:$0xff]
  %v1566 = vld [vmem:[%s4 + $0x240] sm:$0xff]
  %v1567 = vld [vmem:[%s4 + $0x248] sm:$0xff]
  %v1568 = vld [vmem:[%s4 + $0x250] sm:$0xff]
  %v1569 = vld [vmem:[%s4 + $0x258] sm:$0xff]
  %v1570 = vld [vmem:[%s4 + $0x260] sm:$0xff]
  %v1571 = vld [vmem:[%s4 + $0x268] sm:$0xff]
  %v1572 = vld [vmem:[%s4 + $0x270] sm:$0xff]
  %v1573 = vld [vmem:[%s4 + $0x278] sm:$0xff]
  %v1574 = vld [vmem:[%s4 + $0x280] sm:$0xff]
  %v1575 = vld [vmem:[%s4 + $0x288] sm:$0xff]
  %v1576 = vld [vmem:[%s4 + $0x290] sm:$0xff]
  %v1577 = vld [vmem:[%s4 + $0x298] sm:$0xff]
  %v1578 = vld [vmem:[%s4 + $0x2a0] sm:$0xff]
  %v1579 = vld [vmem:[%s4 + $0x2a8] sm:$0xff]
  %v1580 = vld [vmem:[%s4 + $0x2b0] sm:$0xff]
  %v1581 = vld [vmem:[%s4 + $0x2b8] sm:$0xff]
  %v1582 = vld [vmem:[%s4 + $0x2c0] sm:$0xff]
  %v1583 = vld [vmem:[%s4 + $0x2c8] sm:$0xff]
  %v1584 = vld [vmem:[%s4 + $0x2d0] sm:$0xff]
  %v1585 = vld [vmem:[%s4 + $0x2d8] sm:$0xff]
  %v1586 = vld [vmem:[%s4 + $0x2e0] sm:$0x3f]
  %v1587 = vld [vmem:[%s4 + $0x2e8] sm:$0x3f]
  %v1588 = vld [vmem:[%s4 + $0x2f0] sm:$0x3f]
  %v1589 = vld [vmem:[%s4 + $0x2f8] sm:$0x3f]
  %v1590 = vld [vmem:[%s5] sm:$0xf]
  %v1592 = vlaneseq
  %v1593 = vshrl.u32 %v1592, 7
  %v1594 = vsub.s32 0, %v1593
  %v1595 = vrot.slane %v1590, %v1594
  %v1596 = vlaneseq
  %v1597 = vshrl.u32 %v1596, 7
  %v1598 = vsub.s32 1, %v1597
  %v1599 = vrot.slane %v1590, %v1598
  %v1600 = vlaneseq
  %v1601 = vshrl.u32 %v1600, 7
  %v1602 = vsub.s32 2, %v1601
  %v1603 = vrot.slane %v1590, %v1602
  %v1604 = vlaneseq
  %v1605 = vshrl.u32 %v1604, 7
  %v1606 = vsub.s32 3, %v1605
  %v1607 = vrot.slane %v1590, %v1606
  %vm1612 = vcmask 506880
  %v1614 = vsel %vm1612, %v1491, 0
  %v1617 = vsel %vm1612, %v1493, 0
  %vm1619 = vcmask 1045504
  %v1621 = vsel %vm1619, %v1586, 0
  %v1624 = vsel %vm1619, %v1587, 0
  %v1627 = vsel %vm1619, %v1588, 0
  %v1630 = vsel %vm1619, %v1589, 0
  %1632 = vmatprep.subr.mxu0 %v1555
  %1633 = vmatpush1.msra.mxu0 %v1554
  %1634 = vmatprep.subr.mxu0 %v1551
  %1635 = vmatpush1.msra.mxu0 %v1550
  %1636 = vmatprep.subr.mxu0 %v1547
  %1637 = vmatpush1.msra.mxu0 %v1546
  %1638 = vmatprep.subr.mxu0 %v1543
  %1639 = vmatpush1.msra.mxu0 %v1542
  %1640 = vmatprep.subr.mxu0 %v1539
  %1641 = vmatpush1.msra.mxu0 %v1538
  %1642 = vmatprep.subr.mxu0 %v1535
  %1643 = vmatpush1.msra.mxu0 %v1534
  %1644 = vmatprep.subr.mxu0 %v1531
  %1645 = vmatpush1.msra.mxu0 %v1530
  %1646 = vmatprep.subr.mxu0 %v1527
  %1647 = vmatpush1.msra.mxu0 %v1526
  %1648 = vmatprep.subr.mxu0 %v1523
  %1649 = vmatpush1.msra.mxu0 %v1522
  %1650 = vmatprep.subr.mxu0 %v1519
  %1651 = vmatpush1.msra.mxu0 %v1518
  %1652 = vmatprep.subr.mxu0 %v1515
  %1653 = vmatpush1.msra.mxu0 %v1514
  %1654 = vmatprep.subr.mxu0 %v1511
  %1655 = vmatpush1.msra.mxu0 %v1510
  %1656 = vmatprep.subr.mxu0 %v1507
  %1657 = vmatpush1.msra.mxu0 %v1506
  %1658 = vmatprep.subr.mxu0 %v1503
  %1659 = vmatpush1.msra.mxu0 %v1502
  %1660 = vmatprep.subr.mxu0 %v1499
  %1661 = vmatpush1.msra.mxu0 %v1498
  %1662 = vmatprep.subr.mxu0 %v1495
  %1663 = vmatpush1.msra.mxu0 %v1494
  %1664 = vmatprep.subr.mxu0 0.0
  %1665 = vmatpush2.msra.mxu0 0.0
  %1666 = vmatprep.subr.mxu0 0.0
  %1667 = vmatpush2.msra.mxu0 0.0
  %1668 = vmatprep.subr.mxu0 0.0
  %1669 = vmatpush2.msra.mxu0 0.0
  %1670 = vmatprep.subr.mxu0 0.0
  %1671 = vmatpush2.msra.mxu0 0.0
  %1672 = vmatprep.subr.mxu0 0.0
  %1673 = vmatpush2.msra.mxu0 0.0
  %1674 = vmatprep.subr.mxu0 0.0
  %1675 = vmatpush2.msra.mxu0 0.0
  %1676 = vmatprep.subr.mxu0 0.0
  %1677 = vmatpush2.msra.mxu0 0.0
  %1678 = vmatprep.subr.mxu0 0.0
  %1679 = vmatpush2.msra.mxu0 0.0
  %1680 = vmatprep.subr.mxu0 %v1624
  %1681 = vmatpush2.msra.mxu0 %v1621
  %1682 = vmatprep.subr.mxu0 %v1583
  %1683 = vmatpush2.msra.mxu0 %v1582
  %1684 = vmatprep.subr.mxu0 %v1579
  %1685 = vmatpush2.msra.mxu0 %v1578
  %1686 = vmatprep.subr.mxu0 %v1575
  %1687 = vmatpush2.msra.mxu0 %v1574
  %1688 = vmatprep.subr.mxu0 %v1571
  %1689 = vmatpush2.msra.mxu0 %v1570
  %1690 = vmatprep.subr.mxu0 %v1567
  %1691 = vmatpush2.msra.mxu0 %v1566
  %1692 = vmatprep.subr.mxu0 %v1563
  %1693 = vmatpush2.msra.mxu0 %v1562
  %1694 = vmatprep.subr.mxu0 %v1559
  %1695 = vmatpush2.msra.mxu0 %v1558
  %1696 = vmatprep.mubr.f32.mxu0 %v1614
  %1697 = vmatmul.mubr.f32.gmra.mxu0 %v1490
  %v1698 = vpop.f32.mrf.mxu0
  %v1699 = vadd.f32 %v1595, %v1698
  %v1700 = vpop.f32.mrf.mxu0
  %v1701 = vadd.f32 %v1599, %v1700
  %1702 = vmatprep.mubr.f32.mxu0 %v1617
  %1703 = vmatmul.mubr.f32.gmra.mxu0 %v1492
  %v1704 = vpop.f32.mrf.mxu0
  %v1705 = vadd.f32 %v1595, %v1704
  %v1706 = vpop.f32.mrf.mxu0
  %v1707 = vadd.f32 %v1599, %v1706
  %1708 = vdwg.mxu0
  %1709 = vmatprep.subr.mxu0 %v1557
  %1710 = vmatpush1.msra.mxu0 %v1556
  %1711 = vmatprep.subr.mxu0 %v1553
  %1712 = vmatpush1.msra.mxu0 %v1552
  %1713 = vmatprep.subr.mxu0 %v1549
  %1714 = vmatpush1.msra.mxu0 %v1548
  %1715 = vmatprep.subr.mxu0 %v1545
  %1716 = vmatpush1.msra.mxu0 %v1544
  %1717 = vmatprep.subr.mxu0 %v1541
  %1718 = vmatpush1.msra.mxu0 %v1540
  %1719 = vmatprep.subr.mxu0 %v1537
  %1720 = vmatpush1.msra.mxu0 %v1536
  %1721 = vmatprep.subr.mxu0 %v1533
  %1722 = vmatpush1.msra.mxu0 %v1532
  %1723 = vmatprep.subr.mxu0 %v1529
  %1724 = vmatpush1.msra.mxu0 %v1528
  %1725 = vmatprep.subr.mxu0 %v1525
  %1726 = vmatpush1.msra.mxu0 %v1524
  %1727 = vmatprep.subr.mxu0 %v1521
  %1728 = vmatpush1.msra.mxu0 %v1520
  %1729 = vmatprep.subr.mxu0 %v1517
  %1730 = vmatpush1.msra.mxu0 %v1516
  %1731 = vmatprep.subr.mxu0 %v1513
  %1732 = vmatpush1.msra.mxu0 %v1512
  %1733 = vmatprep.subr.mxu0 %v1509
  %1734 = vmatpush1.msra.mxu0 %v1508
  %1735 = vmatprep.subr.mxu0 %v1505
  %1736 = vmatpush1.msra.mxu0 %v1504
  %1737 = vmatprep.subr.mxu0 %v1501
  %1738 = vmatpush1.msra.mxu0 %v1500
  %1739 = vmatprep.subr.mxu0 %v1497
  %1740 = vmatpush1.msra.mxu0 %v1496
  %1741 = vmatprep.subr.mxu0 0.0
  %1742 = vmatpush2.msra.mxu0 0.0
  %1743 = vmatprep.subr.mxu0 0.0
  %1744 = vmatpush2.msra.mxu0 0.0
  %1745 = vmatprep.subr.mxu0 0.0
  %1746 = vmatpush2.msra.mxu0 0.0
  %1747 = vmatprep.subr.mxu0 0.0
  %1748 = vmatpush2.msra.mxu0 0.0
  %1749 = vmatprep.subr.mxu0 0.0
  %1750 = vmatpush2.msra.mxu0 0.0
  %1751 = vmatprep.subr.mxu0 0.0
  %1752 = vmatpush2.msra.mxu0 0.0
  %1753 = vmatprep.subr.mxu0 0.0
  %1754 = vmatpush2.msra.mxu0 0.0
  %1755 = vmatprep.subr.mxu0 0.0
  %1756 = vmatpush2.msra.mxu0 0.0
  %1757 = vmatprep.subr.mxu0 %v1630
  %1758 = vmatpush2.msra.mxu0 %v1627
  %1759 = vmatprep.subr.mxu0 %v1585
  %1760 = vmatpush2.msra.mxu0 %v1584
  %1761 = vmatprep.subr.mxu0 %v1581
  %1762 = vmatpush2.msra.mxu0 %v1580
  %1763 = vmatprep.subr.mxu0 %v1577
  %1764 = vmatpush2.msra.mxu0 %v1576
  %1765 = vmatprep.subr.mxu0 %v1573
  %1766 = vmatpush2.msra.mxu0 %v1572
  %1767 = vmatprep.subr.mxu0 %v1569
  %1768 = vmatpush2.msra.mxu0 %v1568
  %1769 = vmatprep.subr.mxu0 %v1565
  %1770 = vmatpush2.msra.mxu0 %v1564
  %1771 = vmatprep.subr.mxu0 %v1561
  %1772 = vmatpush2.msra.mxu0 %v1560
  %1773 = vmatprep.mubr.f32.mxu0 %v1614
  %1774 = vmatmul.mubr.f32.gmra.mxu0 %v1490
  %v1775 = vpop.f32.mrf.mxu0
  %v1776 = vadd.f32 %v1603, %v1775
  %v1777 = vpop.f32.mrf.mxu0
  %v1778 = vadd.f32 %v1607, %v1777
  %1779 = vmatprep.mubr.f32.mxu0 %v1617
  %1780 = vmatmul.mubr.f32.gmra.mxu0 %v1492
  %v1781 = vpop.f32.mrf.mxu0
  %v1782 = vadd.f32 %v1603, %v1781
  %v1783 = vpop.f32.mrf.mxu0
  %v1784 = vadd.f32 %v1607, %v1783
  %1785 = vdwg.mxu0
  %v1786 = vld [vmem:[%s6] sm:$0xff]
  %v1787 = vld [vmem:[%s6 + $0x8] sm:$0xff]
  %v1788 = vld [vmem:[%s6 + $0x10] sm:$0xff]
  %v1789 = vld [vmem:[%s6 + $0x18] sm:$0xff]
  %v1790 = vld [vmem:[%s6 + $0x20] sm:$0xff]
  %v1791 = vld [vmem:[%s6 + $0x28] sm:$0xff]
  %v1792 = vld [vmem:[%s6 + $0x30] sm:$0xff]
  %v1793 = vld [vmem:[%s6 + $0x38] sm:$0xff]
  %v1794 = vld [vmem:[%s6 + $0x40] sm:$0xff]
  %v1795 = vld [vmem:[%s6 + $0x48] sm:$0xff]
  %v1796 = vld [vmem:[%s6 + $0x50] sm:$0xff]
  %v1797 = vld [vmem:[%s6 + $0x58] sm:$0xff]
  %v1798 = vld [vmem:[%s6 + $0x60] sm:$0xff]
  %v1799 = vld [vmem:[%s6 + $0x68] sm:$0xff]
  %v1800 = vld [vmem:[%s6 + $0x70] sm:$0xff]
  %v1801 = vld [vmem:[%s6 + $0x78] sm:$0xff]
  %v1802 = vld [vmem:[%s6 + $0x80] sm:$0xff]
  %v1803 = vld [vmem:[%s6 + $0x88] sm:$0xff]
  %v1804 = vld [vmem:[%s6 + $0x90] sm:$0xff]
  %v1805 = vld [vmem:[%s6 + $0x98] sm:$0xff]
  %v1806 = vld [vmem:[%s6 + $0xa0] sm:$0xff]
  %v1807 = vld [vmem:[%s6 + $0xa8] sm:$0xff]
  %v1808 = vld [vmem:[%s6 + $0xb0] sm:$0xff]
  %v1809 = vld [vmem:[%s6 + $0xb8] sm:$0xff]
  %v1810 = vld [vmem:[%s6 + $0xc0] sm:$0xff]
  %v1811 = vld [vmem:[%s6 + $0xc8] sm:$0xff]
  %v1812 = vld [vmem:[%s6 + $0xd0] sm:$0xff]
  %v1813 = vld [vmem:[%s6 + $0xd8] sm:$0xff]
  %v1814 = vld [vmem:[%s6 + $0xe0] sm:$0xff]
  %v1815 = vld [vmem:[%s6 + $0xe8] sm:$0xff]
  %v1816 = vld [vmem:[%s6 + $0xf0] sm:$0xff]
  %v1817 = vld [vmem:[%s6 + $0xf8] sm:$0xff]
  %v1818 = vld [vmem:[%s6 + $0x100] sm:$0xff]
  %v1819 = vld [vmem:[%s6 + $0x108] sm:$0xff]
  %v1820 = vld [vmem:[%s6 + $0x110] sm:$0xff]
  %v1821 = vld [vmem:[%s6 + $0x118] sm:$0xff]
  %v1822 = vld [vmem:[%s6 + $0x120] sm:$0xff]
  %v1823 = vld [vmem:[%s6 + $0x128] sm:$0xff]
  %v1824 = vld [vmem:[%s6 + $0x130] sm:$0xff]
  %v1825 = vld [vmem:[%s6 + $0x138] sm:$0xff]
  %v1826 = vld [vmem:[%s6 + $0x140] sm:$0xff]
  %v1827 = vld [vmem:[%s6 + $0x148] sm:$0xff]
  %v1828 = vld [vmem:[%s6 + $0x150] sm:$0xff]
  %v1829 = vld [vmem:[%s6 + $0x158] sm:$0xff]
  %v1830 = vld [vmem:[%s6 + $0x160] sm:$0xff]
  %v1831 = vld [vmem:[%s6 + $0x168] sm:$0xff]
  %v1832 = vld [vmem:[%s6 + $0x170] sm:$0xff]
  %v1833 = vld [vmem:[%s6 + $0x178] sm:$0xff]
  %v1834 = vld [vmem:[%s6 + $0x180] sm:$0xff]
  %v1835 = vld [vmem:[%s6 + $0x188] sm:$0xff]
  %v1836 = vld [vmem:[%s6 + $0x190] sm:$0xff]
  %v1837 = vld [vmem:[%s6 + $0x198] sm:$0xff]
  %v1838 = vld [vmem:[%s6 + $0x1a0] sm:$0xff]
  %v1839 = vld [vmem:[%s6 + $0x1a8] sm:$0xff]
  %v1840 = vld [vmem:[%s6 + $0x1b0] sm:$0xff]
  %v1841 = vld [vmem:[%s6 + $0x1b8] sm:$0xff]
  %v1842 = vld [vmem:[%s6 + $0x1c0] sm:$0xff]
  %v1843 = vld [vmem:[%s6 + $0x1c8] sm:$0xff]
  %v1844 = vld [vmem:[%s6 + $0x1d0] sm:$0xff]
  %v1845 = vld [vmem:[%s6 + $0x1d8] sm:$0xff]
  %v1846 = vld [vmem:[%s6 + $0x1e0] sm:$0xff]
  %v1847 = vld [vmem:[%s6 + $0x1e8] sm:$0xff]
  %v1848 = vld [vmem:[%s6 + $0x1f0] sm:$0xff]
  %v1849 = vld [vmem:[%s6 + $0x1f8] sm:$0xff]
  %v1850 = vlaneseq
  %v1851 = vshrl.u32 %v1850, 7
  %v1852 = vsub.s32 0, %v1851
  %v1853 = vrot.slane %v205, %v1852
  %1854 = vmatprep.subr.mxu0 0.0
  %1855 = vmatpush1.msra.mxu0 %v1801
  %1856 = vmatprep.subr.mxu0 0.0
  %1857 = vmatpush1.msra.mxu0 %v1800
  %1858 = vmatprep.subr.mxu0 0.0
  %1859 = vmatpush1.msra.mxu0 %v1799
  %1860 = vmatprep.subr.mxu0 0.0
  %1861 = vmatpush1.msra.mxu0 %v1798
  %1862 = vmatprep.subr.mxu0 0.0
  %1863 = vmatpush1.msra.mxu0 %v1797
  %1864 = vmatprep.subr.mxu0 0.0
  %1865 = vmatpush1.msra.mxu0 %v1796
  %1866 = vmatprep.subr.mxu0 0.0
  %1867 = vmatpush1.msra.mxu0 %v1795
  %1868 = vmatprep.subr.mxu0 0.0
  %1869 = vmatpush1.msra.mxu0 %v1794
  %1870 = vmatprep.subr.mxu0 0.0
  %1871 = vmatpush1.msra.mxu0 %v1793
  %1872 = vmatprep.subr.mxu0 0.0
  %1873 = vmatpush1.msra.mxu0 %v1792
  %1874 = vmatprep.subr.mxu0 0.0
  %1875 = vmatpush1.msra.mxu0 %v1791
  %1876 = vmatprep.subr.mxu0 0.0
  %1877 = vmatpush1.msra.mxu0 %v1790
  %1878 = vmatprep.subr.mxu0 0.0
  %1879 = vmatpush1.msra.mxu0 %v1789
  %1880 = vmatprep.subr.mxu0 0.0
  %1881 = vmatpush1.msra.mxu0 %v1788
  %1882 = vmatprep.subr.mxu0 0.0
  %1883 = vmatpush1.msra.mxu0 %v1787
  %1884 = vmatprep.subr.mxu0 0.0
  %1885 = vmatpush1.msra.mxu0 %v1786
  %1886 = vmatprep.subr.mxu0 0.0
  %1887 = vmatpush2.msra.mxu0 %v1817
  %1888 = vmatprep.subr.mxu0 0.0
  %1889 = vmatpush2.msra.mxu0 %v1816
  %1890 = vmatprep.subr.mxu0 0.0
  %1891 = vmatpush2.msra.mxu0 %v1815
  %1892 = vmatprep.subr.mxu0 0.0
  %1893 = vmatpush2.msra.mxu0 %v1814
  %1894 = vmatprep.subr.mxu0 0.0
  %1895 = vmatpush2.msra.mxu0 %v1813
  %1896 = vmatprep.subr.mxu0 0.0
  %1897 = vmatpush2.msra.mxu0 %v1812
  %1898 = vmatprep.subr.mxu0 0.0
  %1899 = vmatpush2.msra.mxu0 %v1811
  %1900 = vmatprep.subr.mxu0 0.0
  %1901 = vmatpush2.msra.mxu0 %v1810
  %1902 = vmatprep.subr.mxu0 0.0
  %1903 = vmatpush2.msra.mxu0 %v1809
  %1904 = vmatprep.subr.mxu0 0.0
  %1905 = vmatpush2.msra.mxu0 %v1808
  %1906 = vmatprep.subr.mxu0 0.0
  %1907 = vmatpush2.msra.mxu0 %v1807
  %1908 = vmatprep.subr.mxu0 0.0
  %1909 = vmatpush2.msra.mxu0 %v1806
  %1910 = vmatprep.subr.mxu0 0.0
  %1911 = vmatpush2.msra.mxu0 %v1805
  %1912 = vmatprep.subr.mxu0 0.0
  %1913 = vmatpush2.msra.mxu0 %v1804
  %1914 = vmatprep.subr.mxu0 0.0
  %1915 = vmatpush2.msra.mxu0 %v1803
  %1916 = vmatprep.subr.mxu0 0.0
  %1917 = vmatpush2.msra.mxu0 %v1802
  %1918 = vmatprep.mubr.f32.mxu0 %v1701
  %1919 = vmatmul.mubr.f32.gmra.mxu0 %v1699
  %v1920 = vpop.f32.mrf.mxu0
  %v1921 = vadd.f32 %v1853, %v1920
  %v1922 = vpop.f32.mrf.mxu0
  %1923 = vmatprep.mubr.f32.mxu0 %v1707
  %1924 = vmatmul.mubr.f32.gmra.mxu0 %v1705
  %v1925 = vpop.f32.mrf.mxu0
  %v1926 = vadd.f32 %v1853, %v1925
  %v1927 = vpop.f32.mrf.mxu0
  %1928 = vdwg.mxu0
  %1929 = vmatprep.subr.mxu0 0.0
  %1930 = vmatpush1.msra.mxu0 %v1833
  %1931 = vmatprep.subr.mxu0 0.0
  %1932 = vmatpush1.msra.mxu0 %v1832
  %1933 = vmatprep.subr.mxu0 0.0
  %1934 = vmatpush1.msra.mxu0 %v1831
  %1935 = vmatprep.subr.mxu0 0.0
  %1936 = vmatpush1.msra.mxu0 %v1830
  %1937 = vmatprep.subr.mxu0 0.0
  %1938 = vmatpush1.msra.mxu0 %v1829
  %1939 = vmatprep.subr.mxu0 0.0
  %1940 = vmatpush1.msra.mxu0 %v1828
  %1941 = vmatprep.subr.mxu0 0.0
  %1942 = vmatpush1.msra.mxu0 %v1827
  %1943 = vmatprep.subr.mxu0 0.0
  %1944 = vmatpush1.msra.mxu0 %v1826
  %1945 = vmatprep.subr.mxu0 0.0
  %1946 = vmatpush1.msra.mxu0 %v1825
  %1947 = vmatprep.subr.mxu0 0.0
  %1948 = vmatpush1.msra.mxu0 %v1824
  %1949 = vmatprep.subr.mxu0 0.0
  %1950 = vmatpush1.msra.mxu0 %v1823
  %1951 = vmatprep.subr.mxu0 0.0
  %1952 = vmatpush1.msra.mxu0 %v1822
  %1953 = vmatprep.subr.mxu0 0.0
  %1954 = vmatpush1.msra.mxu0 %v1821
  %1955 = vmatprep.subr.mxu0 0.0
  %1956 = vmatpush1.msra.mxu0 %v1820
  %1957 = vmatprep.subr.mxu0 0.0
  %1958 = vmatpush1.msra.mxu0 %v1819
  %1959 = vmatprep.subr.mxu0 0.0
  %1960 = vmatpush1.msra.mxu0 %v1818
  %1961 = vmatprep.subr.mxu0 0.0
  %1962 = vmatpush2.msra.mxu0 %v1849
  %1963 = vmatprep.subr.mxu0 0.0
  %1964 = vmatpush2.msra.mxu0 %v1848
  %1965 = vmatprep.subr.mxu0 0.0
  %1966 = vmatpush2.msra.mxu0 %v1847
  %1967 = vmatprep.subr.mxu0 0.0
  %1968 = vmatpush2.msra.mxu0 %v1846
  %1969 = vmatprep.subr.mxu0 0.0
  %1970 = vmatpush2.msra.mxu0 %v1845
  %1971 = vmatprep.subr.mxu0 0.0
  %1972 = vmatpush2.msra.mxu0 %v1844
  %1973 = vmatprep.subr.mxu0 0.0
  %1974 = vmatpush2.msra.mxu0 %v1843
  %1975 = vmatprep.subr.mxu0 0.0
  %1976 = vmatpush2.msra.mxu0 %v1842
  %1977 = vmatprep.subr.mxu0 0.0
  %1978 = vmatpush2.msra.mxu0 %v1841
  %1979 = vmatprep.subr.mxu0 0.0
  %1980 = vmatpush2.msra.mxu0 %v1840
  %1981 = vmatprep.subr.mxu0 0.0
  %1982 = vmatpush2.msra.mxu0 %v1839
  %1983 = vmatprep.subr.mxu0 0.0
  %1984 = vmatpush2.msra.mxu0 %v1838
  %1985 = vmatprep.subr.mxu0 0.0
  %1986 = vmatpush2.msra.mxu0 %v1837
  %1987 = vmatprep.subr.mxu0 0.0
  %1988 = vmatpush2.msra.mxu0 %v1836
  %1989 = vmatprep.subr.mxu0 0.0
  %1990 = vmatpush2.msra.mxu0 %v1835
  %1991 = vmatprep.subr.mxu0 0.0
  %1992 = vmatpush2.msra.mxu0 %v1834
  %1993 = vmatprep.mubr.f32.mxu0 %v1778
  %1994 = vmatmul.mubr.f32.gmra.mxu0 %v1776
  %v1995 = vpop.f32.mrf.mxu0
  %v1996 = vadd.f32 %v1921, %v1995
  %v1997 = vpop.f32.mrf.mxu0
  %1998 = vmatprep.mubr.f32.mxu0 %v1784
  %1999 = vmatmul.mubr.f32.gmra.mxu0 %v1782
  %v2000 = vpop.f32.mrf.mxu0
  %v2001 = vadd.f32 %v1926, %v2000
  %v2002 = vpop.f32.mrf.mxu0
  %2003 = vdwg.mxu0
  %v2004 = vld [vmem:[%s3] sm:$0xff]
  %v2005 = vld [vmem:[%s3 + $0x8] sm:$0xff]
  %v2006 = vld [vmem:[%s3 + $0x10] sm:$0xff]
  %v2007 = vld [vmem:[%s3 + $0x18] sm:$0xff]
  %v2009 = vsel %vm327, %v2004, 0
  %v2012 = vsel %vm327, %v2005, 0
  %v2015 = vsel %vm327, %v2006, 0
  %v2018 = vsel %vm327, %v2007, 0
  %2020 = vmatprep.subr.mxu0 0.0
  %2021 = vmatpush1.msra.mxu0 0.0
  %2022 = vmatprep.subr.mxu0 0.0
  %2023 = vmatpush1.msra.mxu0 0.0
  %2024 = vmatprep.subr.mxu0 0.0
  %2025 = vmatpush1.msra.mxu0 0.0
  %2026 = vmatprep.subr.mxu0 0.0
  %2027 = vmatpush1.msra.mxu0 0.0
  %2028 = vmatprep.subr.mxu0 0.0
  %2029 = vmatpush1.msra.mxu0 0.0
  %2030 = vmatprep.subr.mxu0 0.0
  %2031 = vmatpush1.msra.mxu0 0.0
  %2032 = vmatprep.subr.mxu0 0.0
  %2033 = vmatpush1.msra.mxu0 0.0
  %2034 = vmatprep.subr.mxu0 0.0
  %2035 = vmatpush1.msra.mxu0 0.0
  %2036 = vmatprep.subr.mxu0 0.0
  %2037 = vmatpush1.msra.mxu0 0.0
  %2038 = vmatprep.subr.mxu0 0.0
  %2039 = vmatpush1.msra.mxu0 0.0
  %2040 = vmatprep.subr.mxu0 0.0
  %2041 = vmatpush1.msra.mxu0 0.0
  %2042 = vmatprep.subr.mxu0 0.0
  %2043 = vmatpush1.msra.mxu0 0.0
  %2044 = vmatprep.subr.mxu0 0.0
  %2045 = vmatpush1.msra.mxu0 0.0
  %2046 = vmatprep.subr.mxu0 0.0
  %2047 = vmatpush1.msra.mxu0 0.0
  %2048 = vmatprep.subr.mxu0 0.0
  %2049 = vmatpush1.msra.mxu0 %v2001
  %2050 = vmatprep.subr.mxu0 0.0
  %2051 = vmatpush1.msra.mxu0 %v1996
  %2052 = vmatprep.subr.mxu0 0.0
  %2053 = vmatpush2.msra.mxu0 0.0
  %2054 = vmatprep.subr.mxu0 0.0
  %2055 = vmatpush2.msra.mxu0 0.0
  %2056 = vmatprep.subr.mxu0 0.0
  %2057 = vmatpush2.msra.mxu0 0.0
  %2058 = vmatprep.subr.mxu0 0.0
  %2059 = vmatpush2.msra.mxu0 0.0
  %2060 = vmatprep.subr.mxu0 0.0
  %2061 = vmatpush2.msra.mxu0 0.0
  %2062 = vmatprep.subr.mxu0 0.0
  %2063 = vmatpush2.msra.mxu0 0.0
  %2064 = vmatprep.subr.mxu0 0.0
  %2065 = vmatpush2.msra.mxu0 0.0
  %2066 = vmatprep.subr.mxu0 0.0
  %2067 = vmatpush2.msra.mxu0 0.0
  %2068 = vmatprep.subr.mxu0 0.0
  %2069 = vmatpush2.msra.mxu0 0.0
  %2070 = vmatprep.subr.mxu0 0.0
  %2071 = vmatpush2.msra.mxu0 0.0
  %2072 = vmatprep.subr.mxu0 0.0
  %2073 = vmatpush2.msra.mxu0 0.0
  %2074 = vmatprep.subr.mxu0 0.0
  %2075 = vmatpush2.msra.mxu0 0.0
  %2076 = vmatprep.subr.mxu0 0.0
  %2077 = vmatpush2.msra.mxu0 0.0
  %2078 = vmatprep.subr.mxu0 0.0
  %2079 = vmatpush2.msra.mxu0 0.0
  %2080 = vmatprep.subr.mxu0 0.0
  %2081 = vmatpush2.msra.mxu0 0.0
  %2082 = vmatprep.subr.mxu0 0.0
  %2083 = vmatpush2.msra.mxu0 0.0
  %2084 = vmatprep.mubr.f32.mxu0 0.0
  %2085 = vmatmul.mubr.f32.gmra.mxu0 %v2009
  %v2086 = vpop.f32.mrf.mxu0
  %v2087 = vadd.f32 0.0, %v2086
  %v2088 = vpop.f32.mrf.mxu0
  %2089 = vmatprep.mubr.f32.mxu0 0.0
  %2090 = vmatmul.mubr.f32.gmra.mxu0 %v2012
  %v2091 = vpop.f32.mrf.mxu0
  %v2092 = vadd.f32 0.0, %v2091
  %v2093 = vpop.f32.mrf.mxu0
  %2094 = vmatprep.mubr.f32.mxu0 0.0
  %2095 = vmatmul.mubr.f32.gmra.mxu0 %v2015
  %v2096 = vpop.f32.mrf.mxu0
  %v2097 = vadd.f32 0.0, %v2096
  %v2098 = vpop.f32.mrf.mxu0
  %2099 = vmatprep.mubr.f32.mxu0 0.0
  %2100 = vmatmul.mubr.f32.gmra.mxu0 %v2018
  %v2101 = vpop.f32.mrf.mxu0
  %v2102 = vadd.f32 0.0, %v2101
  %v2103 = vpop.f32.mrf.mxu0
  %2104 = vdwg.mxu0
  %2109 = vrot.lane.b32.xlu0 %v2087, 16
  %v2110 = vpop.permute.xlu0 %2109
  %2111 = vrot.lane.b32.xlu0 %v2092, 16
  %v2112 = vpop.permute.xlu0 %2111
  %2113 = vrot.lane.b32.xlu0 %v2097, 16
  %v2114 = vpop.permute.xlu0 %2113
  %2115 = vrot.lane.b32.xlu0 %v2102, 16
  %v2116 = vpop.permute.xlu0 %2115
  %v2121 = vsel %vm327, %v1486, %v2110
  %v2122 = vsel %vm327, %v1487, %v2112
  %v2123 = vsel %vm327, %v1488, %v2114
  %v2124 = vsel %vm327, %v1489, %v2116
  %v2125 = vld [vmem:[%s8] sm:$0xff]
  %v2126 = vld [vmem:[%s8 + $0x8] sm:$0xff]
  %v2127 = vld [vmem:[%s8 + $0x10] sm:$0xff]
  %v2128 = vld [vmem:[%s8 + $0x18] sm:$0xff]
  %v2130 = vsel %vm461, %v2121, 0
  %v2133 = vsel %vm461, %v2122, 0
  %v2136 = vsel %vm461, %v2123, 0
  %v2139 = vsel %vm461, %v2124, 0
  %2141 = vmatprep.subr.mxu0 0.0
  %2142 = vmatpush1.msra.mxu0 0.0
  %2143 = vmatprep.subr.mxu0 0.0
  %2144 = vmatpush1.msra.mxu0 0.0
  %2145 = vmatprep.subr.mxu0 0.0
  %2146 = vmatpush1.msra.mxu0 0.0
  %2147 = vmatprep.subr.mxu0 0.0
  %2148 = vmatpush1.msra.mxu0 0.0
  %2149 = vmatprep.subr.mxu0 0.0
  %2150 = vmatpush1.msra.mxu0 0.0
  %2151 = vmatprep.subr.mxu0 0.0
  %2152 = vmatpush1.msra.mxu0 0.0
  %2153 = vmatprep.subr.mxu0 0.0
  %2154 = vmatpush1.msra.mxu0 0.0
  %2155 = vmatprep.subr.mxu0 0.0
  %2156 = vmatpush1.msra.mxu0 0.0
  %2157 = vmatprep.subr.mxu0 0.0
  %2158 = vmatpush1.msra.mxu0 0.0
  %2159 = vmatprep.subr.mxu0 0.0
  %2160 = vmatpush1.msra.mxu0 0.0
  %2161 = vmatprep.subr.mxu0 0.0
  %2162 = vmatpush1.msra.mxu0 0.0
  %2163 = vmatprep.subr.mxu0 0.0
  %2164 = vmatpush1.msra.mxu0 0.0
  %2165 = vmatprep.subr.mxu0 0.0
  %2166 = vmatpush1.msra.mxu0 %v2128
  %2167 = vmatprep.subr.mxu0 0.0
  %2168 = vmatpush1.msra.mxu0 %v2127
  %2169 = vmatprep.subr.mxu0 0.0
  %2170 = vmatpush1.msra.mxu0 %v2126
  %2171 = vmatprep.subr.mxu0 0.0
  %2172 = vmatpush1.msra.mxu0 %v2125
  %2173 = vmatprep.subr.mxu0 0.0
  %2174 = vmatpush2.msra.mxu0 0.0
  %2175 = vmatprep.subr.mxu0 0.0
  %2176 = vmatpush2.msra.mxu0 0.0
  %2177 = vmatprep.subr.mxu0 0.0
  %2178 = vmatpush2.msra.mxu0 0.0
  %2179 = vmatprep.subr.mxu0 0.0
  %2180 = vmatpush2.msra.mxu0 0.0
  %2181 = vmatprep.subr.mxu0 0.0
  %2182 = vmatpush2.msra.mxu0 0.0
  %2183 = vmatprep.subr.mxu0 0.0
  %2184 = vmatpush2.msra.mxu0 0.0
  %2185 = vmatprep.subr.mxu0 0.0
  %2186 = vmatpush2.msra.mxu0 0.0
  %2187 = vmatprep.subr.mxu0 0.0
  %2188 = vmatpush2.msra.mxu0 0.0
  %2189 = vmatprep.subr.mxu0 0.0
  %2190 = vmatpush2.msra.mxu0 0.0
  %2191 = vmatprep.subr.mxu0 0.0
  %2192 = vmatpush2.msra.mxu0 0.0
  %2193 = vmatprep.subr.mxu0 0.0
  %2194 = vmatpush2.msra.mxu0 0.0
  %2195 = vmatprep.subr.mxu0 0.0
  %2196 = vmatpush2.msra.mxu0 0.0
  %2197 = vmatprep.subr.mxu0 0.0
  %2198 = vmatpush2.msra.mxu0 0.0
  %2199 = vmatprep.subr.mxu0 0.0
  %2200 = vmatpush2.msra.mxu0 0.0
  %2201 = vmatprep.subr.mxu0 0.0
  %2202 = vmatpush2.msra.mxu0 0.0
  %2203 = vmatprep.subr.mxu0 0.0
  %2204 = vmatpush2.msra.mxu0 0.0
  %2205 = vmatprep.mubr.f32.mxu0 0.0
  %2206 = vmatmul.mubr.f32.gmra.mxu0 %v2130
  %v2207 = vpop.f32.mrf.mxu0
  %v2208 = vadd.f32 0.0, %v2207
  %v2209 = vpop.f32.mrf.mxu0
  %2210 = vmatprep.mubr.f32.mxu0 0.0
  %2211 = vmatmul.mubr.f32.gmra.mxu0 %v2133
  %v2212 = vpop.f32.mrf.mxu0
  %v2213 = vadd.f32 0.0, %v2212
  %v2214 = vpop.f32.mrf.mxu0
  %2215 = vmatprep.mubr.f32.mxu0 0.0
  %2216 = vmatmul.mubr.f32.gmra.mxu0 %v2136
  %v2217 = vpop.f32.mrf.mxu0
  %v2218 = vadd.f32 0.0, %v2217
  %v2219 = vpop.f32.mrf.mxu0
  %2220 = vmatprep.mubr.f32.mxu0 0.0
  %2221 = vmatmul.mubr.f32.gmra.mxu0 %v2139
  %v2222 = vpop.f32.mrf.mxu0
  %v2223 = vadd.f32 0.0, %v2222
  %v2224 = vpop.f32.mrf.mxu0
  %2225 = vdwg.mxu0
  %2230 = vrot.lane.b32.xlu0 %v2208, 112
  %v2231 = vpop.permute.xlu0 %2230
  %2232 = vrot.lane.b32.xlu0 %v2213, 112
  %v2233 = vpop.permute.xlu0 %2232
  %2234 = vrot.lane.b32.xlu0 %v2218, 112
  %v2235 = vpop.permute.xlu0 %2234
  %2236 = vrot.lane.b32.xlu0 %v2223, 112
  %v2237 = vpop.permute.xlu0 %2236
  %v2242 = vmul.f32 %v2208, %v2231
  %v2243 = vmul.f32 %v2213, %v2233
  %v2244 = vmul.f32 %v2218, %v2235
  %v2245 = vmul.f32 %v2223, %v2237
  %v2246 = vlaneseq
  %v2247 = vshrl.u32 %v2246, 7
  %v2248 = vsub.s32 2, %v2247
  %v2249 = vrot.slane %v205, %v2248
  %v2250 = vadd.f32 %v2242, %v2249
  %v2251 = vadd.f32 %v2243, %v2249
  %v2252 = vadd.f32 %v2244, %v2249
  %v2253 = vadd.f32 %v2245, %v2249
  %2258 = vrot.lane.b32.xlu0 %v2250, 16
  %v2259 = vpop.permute.xlu0 %2258
  %2260 = vrot.lane.b32.xlu0 %v2251, 16
  %v2261 = vpop.permute.xlu0 %2260
  %2262 = vrot.lane.b32.xlu0 %v2252, 16
  %v2263 = vpop.permute.xlu0 %2262
  %2264 = vrot.lane.b32.xlu0 %v2253, 16
  %v2265 = vpop.permute.xlu0 %2264
  %v2270 = vsel %vm327, %v2250, %v2259
  %v2271 = vsel %vm327, %v2251, %v2261
  %v2272 = vsel %vm327, %v2252, %v2263
  %v2273 = vsel %vm327, %v2253, %v2265
  %v2274 = vld [vmem:[%s14] sm:$0xff]
  %v2275 = vld [vmem:[%s14 + $0x8] sm:$0xff]
  %v2276 = vld [vmem:[%s14 + $0x10] sm:$0xff]
  %v2277 = vld [vmem:[%s14 + $0x18] sm:$0xff]
  %v2278 = vld [vmem:[%s15] sm:$0xff]
  %v2279 = vld [vmem:[%s15 + $0x8] sm:$0xff]
  %v2280 = vld [vmem:[%s15 + $0x10] sm:$0xff]
  %v2281 = vld [vmem:[%s15 + $0x18] sm:$0xff]
  %v2282 = vld [vmem:[%s15 + $0x20] sm:$0xff]
  %v2283 = vld [vmem:[%s15 + $0x28] sm:$0xff]
  %v2284 = vld [vmem:[%s15 + $0x30] sm:$0xff]
  %v2285 = vld [vmem:[%s15 + $0x38] sm:$0xff]
  %v2286 = vld [vmem:[%s16] sm:$0xff]
  %v2287 = vld [vmem:[%s16 + $0x8] sm:$0xf]
  %v2288 = vlaneseq
  %v2289 = vshrl.u32 %v2288, 7
  %v2290 = vsub.s32 0, %v2289
  %v2291 = vrot.slane %v2286, %v2290
  %v2293 = vsel %vm461, %v2270, 0
  %v2296 = vsel %vm461, %v2271, 0
  %v2299 = vsel %vm461, %v2272, 0
  %v2302 = vsel %vm461, %v2273, 0
  %2304 = vmatprep.subr.mxu0 0.0
  %2305 = vmatpush1.msra.mxu0 0.0
  %2306 = vmatprep.subr.mxu0 0.0
  %2307 = vmatpush1.msra.mxu0 0.0
  %2308 = vmatprep.subr.mxu0 0.0
  %2309 = vmatpush1.msra.mxu0 0.0
  %2310 = vmatprep.subr.mxu0 0.0
  %2311 = vmatpush1.msra.mxu0 0.0
  %2312 = vmatprep.subr.mxu0 0.0
  %2313 = vmatpush1.msra.mxu0 0.0
  %2314 = vmatprep.subr.mxu0 0.0
  %2315 = vmatpush1.msra.mxu0 0.0
  %2316 = vmatprep.subr.mxu0 0.0
  %2317 = vmatpush1.msra.mxu0 0.0
  %2318 = vmatprep.subr.mxu0 0.0
  %2319 = vmatpush1.msra.mxu0 0.0
  %2320 = vmatprep.subr.mxu0 0.0
  %2321 = vmatpush1.msra.mxu0 0.0
  %2322 = vmatprep.subr.mxu0 0.0
  %2323 = vmatpush1.msra.mxu0 0.0
  %2324 = vmatprep.subr.mxu0 0.0
  %2325 = vmatpush1.msra.mxu0 0.0
  %2326 = vmatprep.subr.mxu0 0.0
  %2327 = vmatpush1.msra.mxu0 0.0
  %2328 = vmatprep.subr.mxu0 0.0
  %2329 = vmatpush1.msra.mxu0 %v2277
  %2330 = vmatprep.subr.mxu0 0.0
  %2331 = vmatpush1.msra.mxu0 %v2276
  %2332 = vmatprep.subr.mxu0 0.0
  %2333 = vmatpush1.msra.mxu0 %v2275
  %2334 = vmatprep.subr.mxu0 0.0
  %2335 = vmatpush1.msra.mxu0 %v2274
  %2336 = vmatprep.subr.mxu0 0.0
  %2337 = vmatpush2.msra.mxu0 0.0
  %2338 = vmatprep.subr.mxu0 0.0
  %2339 = vmatpush2.msra.mxu0 0.0
  %2340 = vmatprep.subr.mxu0 0.0
  %2341 = vmatpush2.msra.mxu0 0.0
  %2342 = vmatprep.subr.mxu0 0.0
  %2343 = vmatpush2.msra.mxu0 0.0
  %2344 = vmatprep.subr.mxu0 0.0
  %2345 = vmatpush2.msra.mxu0 0.0
  %2346 = vmatprep.subr.mxu0 0.0
  %2347 = vmatpush2.msra.mxu0 0.0
  %2348 = vmatprep.subr.mxu0 0.0
  %2349 = vmatpush2.msra.mxu0 0.0
  %2350 = vmatprep.subr.mxu0 0.0
  %2351 = vmatpush2.msra.mxu0 0.0
  %2352 = vmatprep.subr.mxu0 0.0
  %2353 = vmatpush2.msra.mxu0 0.0
  %2354 = vmatprep.subr.mxu0 0.0
  %2355 = vmatpush2.msra.mxu0 0.0
  %2356 = vmatprep.subr.mxu0 0.0
  %2357 = vmatpush2.msra.mxu0 0.0
  %2358 = vmatprep.subr.mxu0 0.0
  %2359 = vmatpush2.msra.mxu0 0.0
  %2360 = vmatprep.subr.mxu0 0.0
  %2361 = vmatpush2.msra.mxu0 0.0
  %2362 = vmatprep.subr.mxu0 0.0
  %2363 = vmatpush2.msra.mxu0 0.0
  %2364 = vmatprep.subr.mxu0 0.0
  %2365 = vmatpush2.msra.mxu0 0.0
  %2366 = vmatprep.subr.mxu0 0.0
  %2367 = vmatpush2.msra.mxu0 0.0
  %2368 = vmatprep.mubr.f32.mxu0 0.0
  %2369 = vmatmul.mubr.f32.gmra.mxu0 %v2293
  %v2370 = vpop.f32.mrf.mxu0
  %v2371 = vadd.f32 %v2291, %v2370
  %v2372 = vpop.f32.mrf.mxu0
  %2373 = vmatprep.mubr.f32.mxu0 0.0
  %2374 = vmatmul.mubr.f32.gmra.mxu0 %v2296
  %v2375 = vpop.f32.mrf.mxu0
  %v2376 = vadd.f32 %v2291, %v2375
  %v2377 = vpop.f32.mrf.mxu0
  %2378 = vmatprep.mubr.f32.mxu0 0.0
  %2379 = vmatmul.mubr.f32.gmra.mxu0 %v2299
  %v2380 = vpop.f32.mrf.mxu0
  %v2381 = vadd.f32 %v2291, %v2380
  %v2382 = vpop.f32.mrf.mxu0
  %2383 = vmatprep.mubr.f32.mxu0 0.0
  %2384 = vmatmul.mubr.f32.gmra.mxu0 %v2302
  %v2385 = vpop.f32.mrf.mxu0
  %v2386 = vadd.f32 %v2291, %v2385
  %v2387 = vpop.f32.mrf.mxu0
  %2388 = vdwg.mxu0
  %vm2389 = vcmp.ge.f32.partialorder %v2371, 0.0
  %vm2390 = vcmp.ge.f32.partialorder %v2376, 0.0
  %vm2391 = vcmp.ge.f32.partialorder %v2381, 0.0
  %vm2392 = vcmp.ge.f32.partialorder %v2386, 0.0
  %v2393 = vlaneseq
  %v2394 = vshrl.u32 %v2393, 7
  %v2395 = vsub.s32 1, %v2394
  %v2396 = vrot.slane %v2286, %v2395
  %v2397 = vmul.f32 %v2396, %v2371
  %v2398 = vmul.f32 %v2396, %v2376
  %v2399 = vmul.f32 %v2396, %v2381
  %v2400 = vmul.f32 %v2396, %v2386
  %v2401 = vsel %vm2389, %v2371, %v2397
  %v2402 = vsel %vm2390, %v2376, %v2398
  %v2403 = vsel %vm2391, %v2381, %v2399
  %v2404 = vsel %vm2392, %v2386, %v2400
  %v2405 = vmul.f32 %v2401, %v2401
  %v2406 = vmul.f32 %v2402, %v2402
  %v2407 = vmul.f32 %v2403, %v2403
  %v2408 = vmul.f32 %v2404, %v2404
  %2413 = vrot.lane.b32.xlu0 %v2405, 64
  %v2414 = vpop.permute.xlu0 %2413
  %2415 = vrot.lane.b32.xlu0 %v2406, 64
  %v2416 = vpop.permute.xlu0 %2415
  %2417 = vrot.lane.b32.xlu0 %v2407, 64
  %v2418 = vpop.permute.xlu0 %2417
  %2419 = vrot.lane.b32.xlu0 %v2408, 64
  %v2420 = vpop.permute.xlu0 %2419
  %v2425 = vsel %vm466, %v2401, %v2414
  %v2426 = vsel %vm466, %v2402, %v2416
  %v2427 = vsel %vm466, %v2403, %v2418
  %v2428 = vsel %vm466, %v2404, %v2420
  %v2429 = vadd.f32 %v2425, %v2426
  %v2430 = vrot.slane %v2429, 4
  %v2431 = vadd.f32 %v2429, %v2430
  %v2432 = vrot.slane %v2431, 2
  %v2433 = vadd.f32 %v2431, %v2432
  %v2434 = vrot.slane %v2433, 1
  %v2435 = vadd.f32 %v2433, %v2434
  %v2436 = vsel %vm476, %v2435, 0.0
  %2437 = vadd.xlane.f32.xlu0 %v2436
  %v2438 = vpop.xlane.xlu0 %2437
  %v2439 = vrot.slane %v2438, 4
  %v2440 = vadd.f32 %v2438, %v2439
  %v2441 = vrot.slane %v2440, 2
  %v2442 = vadd.f32 %v2440, %v2441
  %v2443 = vrot.slane %v2442, 1
  %v2444 = vadd.f32 %v2442, %v2443
  %s2445 = vtos %v2444
  %2447 = vrot.lane.b32.xlu0 %v2435, 64
  %v2448 = vpop.permute.xlu0 %2447
  %v2450 = vsel %vm476, %v2448, 0.0
  %2451 = vadd.xlane.f32.xlu0 %v2450
  %v2452 = vpop.xlane.xlu0 %2451
  %v2453 = vrot.slane %v2452, 4
  %v2454 = vadd.f32 %v2452, %v2453
  %v2455 = vrot.slane %v2454, 2
  %v2456 = vadd.f32 %v2454, %v2455
  %v2457 = vrot.slane %v2456, 1
  %v2458 = vadd.f32 %v2456, %v2457
  %s2459 = vtos %v2458
  %s2460 = smul.f32 %s2445, 0.001953125
  %s2461 = smul.f32 %s2459, 0.001953125
  %s2462 = smul.f32 %s2460, %s2460
  %s2463 = ssub.f32 %s2461, %s2462
  %s2464 = smax.f32 %s2463, 0.0
  %s2465 = sadd.f32 %s2464, 1e-05
  %v2466 = vstv %s2465
  %v2467 = vrsqrt.pop %v2466
  %s2468 = vtos %v2467
  %v2469 = vstv %s2460
  %v2470 = vsub.f32 %v2401, %v2469
  %v2471 = vsub.f32 %v2402, %v2469
  %v2472 = vlaneseq
  %v2473 = vshrl.u32 %v2472, 7
  %v2474 = vsub.s32 2, %v2473
  %v2475 = vrot.slane %v2286, %v2474
  %v2476 = vmul.f32 %v2475, %v2470
  %v2477 = vmul.f32 %v2475, %v2471
  %v2478 = vstv %s2468
  %v2479 = vmul.f32 %v2476, %v2478
  %v2480 = vmul.f32 %v2477, %v2478
  %v2481 = vlaneseq
  %v2482 = vshrl.u32 %v2481, 7
  %v2483 = vsub.s32 3, %v2482
  %v2484 = vrot.slane %v2286, %v2483
  %v2485 = vadd.f32 %v2479, %v2484
  %v2486 = vadd.f32 %v2480, %v2484
  %2487 = vrot.lane.b32.xlu0 %v2435, 96
  %v2488 = vpop.permute.xlu0 %2487
  %v2490 = vsel %vm476, %v2488, 0.0
  %2491 = vadd.xlane.f32.xlu0 %v2490
  %v2492 = vpop.xlane.xlu0 %2491
  %v2493 = vrot.slane %v2492, 4
  %v2494 = vadd.f32 %v2492, %v2493
  %v2495 = vrot.slane %v2494, 2
  %v2496 = vadd.f32 %v2494, %v2495
  %v2497 = vrot.slane %v2496, 1
  %v2498 = vadd.f32 %v2496, %v2497
  %s2499 = vtos %v2498
  %2500 = vrot.lane.b32.xlu0 %v2435, 32
  %v2501 = vpop.permute.xlu0 %2500
  %v2503 = vsel %vm476, %v2501, 0.0
  %2504 = vadd.xlane.f32.xlu0 %v2503
  %v2505 = vpop.xlane.xlu0 %2504
  %v2506 = vrot.slane %v2505, 4
  %v2507 = vadd.f32 %v2505, %v2506
  %v2508 = vrot.slane %v2507, 2
  %v2509 = vadd.f32 %v2507, %v2508
  %v2510 = vrot.slane %v2509, 1
  %v2511 = vadd.f32 %v2509, %v2510
  %s2512 = vtos %v2511
  %s2513 = smul.f32 %s2499, 0.001953125
  %s2514 = smul.f32 %s2512, 0.001953125
  %s2515 = smul.f32 %s2513, %s2513
  %s2516 = ssub.f32 %s2514, %s2515
  %s2517 = smax.f32 %s2516, 0.0
  %s2518 = sadd.f32 %s2517, 1e-05
  %v2519 = vstv %s2518
  %v2520 = vrsqrt.pop %v2519
  %s2521 = vtos %v2520
  %v2522 = vstv %s2513
  %v2523 = vsub.f32 %v2401, %v2522
  %v2524 = vsub.f32 %v2402, %v2522
  %v2525 = vmul.f32 %v2475, %v2523
  %v2526 = vmul.f32 %v2475, %v2524
  %v2527 = vstv %s2521
  %v2528 = vmul.f32 %v2525, %v2527
  %v2529 = vmul.f32 %v2526, %v2527
  %v2530 = vadd.f32 %v2528, %v2484
  %v2531 = vadd.f32 %v2529, %v2484
  %v2532 = vsel %vm461, %v2485, %v2530
  %v2533 = vsel %vm461, %v2486, %v2531
  %v2534 = vadd.f32 %v2427, %v2428
  %v2535 = vrot.slane %v2534, 4
  %v2536 = vadd.f32 %v2534, %v2535
  %v2537 = vrot.slane %v2536, 2
  %v2538 = vadd.f32 %v2536, %v2537
  %v2539 = vrot.slane %v2538, 1
  %v2540 = vadd.f32 %v2538, %v2539
  %v2541 = vsel %vm476, %v2540, 0.0
  %2542 = vadd.xlane.f32.xlu0 %v2541
  %v2543 = vpop.xlane.xlu0 %2542
  %v2544 = vrot.slane %v2543, 4
  %v2545 = vadd.f32 %v2543, %v2544
  %v2546 = vrot.slane %v2545, 2
  %v2547 = vadd.f32 %v2545, %v2546
  %v2548 = vrot.slane %v2547, 1
  %v2549 = vadd.f32 %v2547, %v2548
  %s2550 = vtos %v2549
  %2552 = vrot.lane.b32.xlu0 %v2540, 64
  %v2553 = vpop.permute.xlu0 %2552
  %v2555 = vsel %vm476, %v2553, 0.0
  %2556 = vadd.xlane.f32.xlu0 %v2555
  %v2557 = vpop.xlane.xlu0 %2556
  %v2558 = vrot.slane %v2557, 4
  %v2559 = vadd.f32 %v2557, %v2558
  %v2560 = vrot.slane %v2559, 2
  %v2561 = vadd.f32 %v2559, %v2560
  %v2562 = vrot.slane %v2561, 1
  %v2563 = vadd.f32 %v2561, %v2562
  %s2564 = vtos %v2563
  %s2565 = smul.f32 %s2550, 0.001953125
  %s2566 = smul.f32 %s2564, 0.001953125
  %s2567 = smul.f32 %s2565, %s2565
  %s2568 = ssub.f32 %s2566, %s2567
  %s2569 = smax.f32 %s2568, 0.0
  %s2570 = sadd.f32 %s2569, 1e-05
  %v2571 = vstv %s2570
  %v2572 = vrsqrt.pop %v2571
  %s2573 = vtos %v2572
  %v2574 = vstv %s2565
  %v2575 = vsub.f32 %v2403, %v2574
  %v2576 = vsub.f32 %v2404, %v2574
  %v2577 = vmul.f32 %v2475, %v2575
  %v2578 = vmul.f32 %v2475, %v2576
  %v2579 = vstv %s2573
  %v2580 = vmul.f32 %v2577, %v2579
  %v2581 = vmul.f32 %v2578, %v2579
  %v2582 = vadd.f32 %v2580, %v2484
  %v2583 = vadd.f32 %v2581, %v2484
  %2584 = vrot.lane.b32.xlu0 %v2540, 96
  %v2585 = vpop.permute.xlu0 %2584
  %v2587 = vsel %vm476, %v2585, 0.0
  %2588 = vadd.xlane.f32.xlu0 %v2587
  %v2589 = vpop.xlane.xlu0 %2588
  %v2590 = vrot.slane %v2589, 4
  %v2591 = vadd.f32 %v2589, %v2590
  %v2592 = vrot.slane %v2591, 2
  %v2593 = vadd.f32 %v2591, %v2592
  %v2594 = vrot.slane %v2593, 1
  %v2595 = vadd.f32 %v2593, %v2594
  %s2596 = vtos %v2595
  %2597 = vrot.lane.b32.xlu0 %v2540, 32
  %v2598 = vpop.permute.xlu0 %2597
  %v2600 = vsel %vm476, %v2598, 0.0
  %2601 = vadd.xlane.f32.xlu0 %v2600
  %v2602 = vpop.xlane.xlu0 %2601
  %v2603 = vrot.slane %v2602, 4
  %v2604 = vadd.f32 %v2602, %v2603
  %v2605 = vrot.slane %v2604, 2
  %v2606 = vadd.f32 %v2604, %v2605
  %v2607 = vrot.slane %v2606, 1
  %v2608 = vadd.f32 %v2606, %v2607
  %s2609 = vtos %v2608
  %s2610 = smul.f32 %s2596, 0.001953125
  %s2611 = smul.f32 %s2609, 0.001953125
  %s2612 = smul.f32 %s2610, %s2610
  %s2613 = ssub.f32 %s2611, %s2612
  %s2614 = smax.f32 %s2613, 0.0
  %s2615 = sadd.f32 %s2614, 1e-05
  %v2616 = vstv %s2615
  %v2617 = vrsqrt.pop %v2616
  %s2618 = vtos %v2617
  %v2619 = vstv %s2610
  %v2620 = vsub.f32 %v2403, %v2619
  %v2621 = vsub.f32 %v2404, %v2619
  %v2622 = vmul.f32 %v2475, %v2620
  %v2623 = vmul.f32 %v2475, %v2621
  %v2624 = vstv %s2618
  %v2625 = vmul.f32 %v2622, %v2624
  %v2626 = vmul.f32 %v2623, %v2624
  %v2627 = vadd.f32 %v2625, %v2484
  %v2628 = vadd.f32 %v2626, %v2484
  %v2629 = vsel %vm461, %v2582, %v2627
  %v2630 = vsel %vm461, %v2583, %v2628
  %v2631 = vlaneseq
  %v2632 = vshrl.u32 %v2631, 7
  %v2633 = vsub.s32 5, %v2632
  %v2634 = vrot.slane %v2286, %v2633
  %v2635 = vmul.f32 %v2532, %v2634
  %v2636 = vmul.f32 %v2533, %v2634
  %v2637 = vmul.f32 %v2629, %v2634
  %v2638 = vmul.f32 %v2630, %v2634
  %v2639 = vlaneseq
  %v2640 = vshrl.u32 %v2639, 7
  %v2641 = vsub.s32 7, %v2640
  %v2642 = vrot.slane %v2286, %v2641
  %v2643 = vadd.f32 %v2635, %v2642
  %v2644 = vadd.f32 %v2636, %v2642
  %v2645 = vadd.f32 %v2637, %v2642
  %v2646 = vadd.f32 %v2638, %v2642
  %v2647 = vrot.slane %v2532, 7
  %v2648 = vrot.slane %v2533, 7
  %v2649 = vrot.slane %v2629, 7
  %v2650 = vrot.slane %v2630, 7
  %v2651 = vsel %vm600, %v2649, %v2650
  %v2652 = vsel %vm600, %v2648, %v2649
  %v2653 = vsel %vm600, %v2647, %v2648
  %v2654 = vsel %vm600, %v2650, %v2647
  %v2655 = vmul.f32 %v2654, %v153
  %v2656 = vmul.f32 %v2653, %v154
  %v2657 = vmul.f32 %v2652, %v155
  %v2658 = vmul.f32 %v2651, %v156
  %v2659 = vlaneseq
  %v2660 = vshrl.u32 %v2659, 7
  %v2661 = vsub.s32 4, %v2660
  %v2662 = vrot.slane %v2286, %v2661
  %v2663 = vmul.f32 %v2655, %v2662
  %v2664 = vmul.f32 %v2656, %v2662
  %v2665 = vmul.f32 %v2657, %v2662
  %v2666 = vmul.f32 %v2658, %v2662
  %v2667 = vadd.f32 %v2643, %v2663
  %v2668 = vadd.f32 %v2644, %v2664
  %v2669 = vadd.f32 %v2645, %v2665
  %v2670 = vadd.f32 %v2646, %v2666
  %v2671 = vrot.slane %v2532, 1
  %v2672 = vrot.slane %v2533, 1
  %v2673 = vrot.slane %v2629, 1
  %v2674 = vrot.slane %v2630, 1
  %v2675 = vsel %vm625, %v2673, %v2674
  %v2676 = vsel %vm625, %v2672, %v2673
  %v2677 = vsel %vm625, %v2671, %v2672
  %v2678 = vsel %vm625, %v2674, %v2671
  %v2679 = vmul.f32 %v2677, %v177
  %v2680 = vmul.f32 %v2676, %v178
  %v2681 = vmul.f32 %v2675, %v179
  %v2682 = vmul.f32 %v2678, %v180
  %v2683 = vlaneseq
  %v2684 = vshrl.u32 %v2683, 7
  %v2685 = vsub.s32 6, %v2684
  %v2686 = vrot.slane %v2286, %v2685
  %v2687 = vmul.f32 %v2679, %v2686
  %v2688 = vmul.f32 %v2680, %v2686
  %v2689 = vmul.f32 %v2681, %v2686
  %v2690 = vmul.f32 %v2682, %v2686
  %v2691 = vadd.f32 %v2667, %v2687
  %v2692 = vadd.f32 %v2668, %v2688
  %v2693 = vadd.f32 %v2669, %v2689
  %v2694 = vadd.f32 %v2670, %v2690
  %vm2695 = vcmp.ge.f32.partialorder %v2691, 0.0
  %vm2696 = vcmp.ge.f32.partialorder %v2692, 0.0
  %vm2697 = vcmp.ge.f32.partialorder %v2693, 0.0
  %vm2698 = vcmp.ge.f32.partialorder %v2694, 0.0
  %v2699 = vlaneseq
  %v2700 = vshrl.u32 %v2699, 7
  %v2701 = vsub.s32 0, %v2700
  %v2702 = vrot.slane %v2287, %v2701
  %v2703 = vmul.f32 %v2702, %v2691
  %v2704 = vmul.f32 %v2702, %v2692
  %v2705 = vmul.f32 %v2702, %v2693
  %v2706 = vmul.f32 %v2702, %v2694
  %v2707 = vsel %vm2695, %v2691, %v2703
  %v2708 = vsel %vm2696, %v2692, %v2704
  %v2709 = vsel %vm2697, %v2693, %v2705
  %v2710 = vsel %vm2698, %v2694, %v2706
  %v2711 = vmul.f32 %v2707, %v2707
  %v2712 = vmul.f32 %v2708, %v2708
  %v2713 = vmul.f32 %v2709, %v2709
  %v2714 = vmul.f32 %v2710, %v2710
  %2719 = vrot.lane.b32.xlu0 %v2711, 64
  %v2720 = vpop.permute.xlu0 %2719
  %2721 = vrot.lane.b32.xlu0 %v2712, 64
  %v2722 = vpop.permute.xlu0 %2721
  %2723 = vrot.lane.b32.xlu0 %v2713, 64
  %v2724 = vpop.permute.xlu0 %2723
  %2725 = vrot.lane.b32.xlu0 %v2714, 64
  %v2726 = vpop.permute.xlu0 %2725
  %v2731 = vsel %vm466, %v2707, %v2720
  %v2732 = vsel %vm466, %v2708, %v2722
  %v2733 = vsel %vm466, %v2709, %v2724
  %v2734 = vsel %vm466, %v2710, %v2726
  %v2735 = vadd.f32 %v2731, %v2732
  %v2736 = vrot.slane %v2735, 4
  %v2737 = vadd.f32 %v2735, %v2736
  %v2738 = vrot.slane %v2737, 2
  %v2739 = vadd.f32 %v2737, %v2738
  %v2740 = vrot.slane %v2739, 1
  %v2741 = vadd.f32 %v2739, %v2740
  %v2742 = vsel %vm476, %v2741, 0.0
  %2743 = vadd.xlane.f32.xlu0 %v2742
  %v2744 = vpop.xlane.xlu0 %2743
  %v2745 = vrot.slane %v2744, 4
  %v2746 = vadd.f32 %v2744, %v2745
  %v2747 = vrot.slane %v2746, 2
  %v2748 = vadd.f32 %v2746, %v2747
  %v2749 = vrot.slane %v2748, 1
  %v2750 = vadd.f32 %v2748, %v2749
  %s2751 = vtos %v2750
  %2753 = vrot.lane.b32.xlu0 %v2741, 64
  %v2754 = vpop.permute.xlu0 %2753
  %v2756 = vsel %vm476, %v2754, 0.0
  %2757 = vadd.xlane.f32.xlu0 %v2756
  %v2758 = vpop.xlane.xlu0 %2757
  %v2759 = vrot.slane %v2758, 4
  %v2760 = vadd.f32 %v2758, %v2759
  %v2761 = vrot.slane %v2760, 2
  %v2762 = vadd.f32 %v2760, %v2761
  %v2763 = vrot.slane %v2762, 1
  %v2764 = vadd.f32 %v2762, %v2763
  %s2765 = vtos %v2764
  %s2766 = smul.f32 %s2751, 0.001953125
  %s2767 = smul.f32 %s2765, 0.001953125
  %s2768 = smul.f32 %s2766, %s2766
  %s2769 = ssub.f32 %s2767, %s2768
  %s2770 = smax.f32 %s2769, 0.0
  %s2771 = sadd.f32 %s2770, 1e-05
  %v2772 = vstv %s2771
  %v2773 = vrsqrt.pop %v2772
  %s2774 = vtos %v2773
  %v2775 = vstv %s2766
  %v2776 = vsub.f32 %v2707, %v2775
  %v2777 = vsub.f32 %v2708, %v2775
  %v2778 = vlaneseq
  %v2779 = vshrl.u32 %v2778, 7
  %v2780 = vsub.s32 1, %v2779
  %v2781 = vrot.slane %v2287, %v2780
  %v2782 = vmul.f32 %v2781, %v2776
  %v2783 = vmul.f32 %v2781, %v2777
  %v2784 = vstv %s2774
  %v2785 = vmul.f32 %v2782, %v2784
  %v2786 = vmul.f32 %v2783, %v2784
  %v2787 = vlaneseq
  %v2788 = vshrl.u32 %v2787, 7
  %v2789 = vsub.s32 2, %v2788
  %v2790 = vrot.slane %v2287, %v2789
  %v2791 = vadd.f32 %v2785, %v2790
  %v2792 = vadd.f32 %v2786, %v2790
  %2793 = vrot.lane.b32.xlu0 %v2741, 96
  %v2794 = vpop.permute.xlu0 %2793
  %v2796 = vsel %vm476, %v2794, 0.0
  %2797 = vadd.xlane.f32.xlu0 %v2796
  %v2798 = vpop.xlane.xlu0 %2797
  %v2799 = vrot.slane %v2798, 4
  %v2800 = vadd.f32 %v2798, %v2799
  %v2801 = vrot.slane %v2800, 2
  %v2802 = vadd.f32 %v2800, %v2801
  %v2803 = vrot.slane %v2802, 1
  %v2804 = vadd.f32 %v2802, %v2803
  %s2805 = vtos %v2804
  %2806 = vrot.lane.b32.xlu0 %v2741, 32
  %v2807 = vpop.permute.xlu0 %2806
  %v2809 = vsel %vm476, %v2807, 0.0
  %2810 = vadd.xlane.f32.xlu0 %v2809
  %v2811 = vpop.xlane.xlu0 %2810
  %v2812 = vrot.slane %v2811, 4
  %v2813 = vadd.f32 %v2811, %v2812
  %v2814 = vrot.slane %v2813, 2
  %v2815 = vadd.f32 %v2813, %v2814
  %v2816 = vrot.slane %v2815, 1
  %v2817 = vadd.f32 %v2815, %v2816
  %s2818 = vtos %v2817
  %s2819 = smul.f32 %s2805, 0.001953125
  %s2820 = smul.f32 %s2818, 0.001953125
  %s2821 = smul.f32 %s2819, %s2819
  %s2822 = ssub.f32 %s2820, %s2821
  %s2823 = smax.f32 %s2822, 0.0
  %s2824 = sadd.f32 %s2823, 1e-05
  %v2825 = vstv %s2824
  %v2826 = vrsqrt.pop %v2825
  %s2827 = vtos %v2826
  %v2828 = vstv %s2819
  %v2829 = vsub.f32 %v2707, %v2828
  %v2830 = vsub.f32 %v2708, %v2828
  %v2831 = vmul.f32 %v2781, %v2829
  %v2832 = vmul.f32 %v2781, %v2830
  %v2833 = vstv %s2827
  %v2834 = vmul.f32 %v2831, %v2833
  %v2835 = vmul.f32 %v2832, %v2833
  %v2836 = vadd.f32 %v2834, %v2790
  %v2837 = vadd.f32 %v2835, %v2790
  %v2838 = vsel %vm461, %v2791, %v2836
  %v2839 = vsel %vm461, %v2792, %v2837
  %v2840 = vadd.f32 %v2733, %v2734
  %v2841 = vrot.slane %v2840, 4
  %v2842 = vadd.f32 %v2840, %v2841
  %v2843 = vrot.slane %v2842, 2
  %v2844 = vadd.f32 %v2842, %v2843
  %v2845 = vrot.slane %v2844, 1
  %v2846 = vadd.f32 %v2844, %v2845
  %v2847 = vsel %vm476, %v2846, 0.0
  %2848 = vadd.xlane.f32.xlu0 %v2847
  %v2849 = vpop.xlane.xlu0 %2848
  %v2850 = vrot.slane %v2849, 4
  %v2851 = vadd.f32 %v2849, %v2850
  %v2852 = vrot.slane %v2851, 2
  %v2853 = vadd.f32 %v2851, %v2852
  %v2854 = vrot.slane %v2853, 1
  %v2855 = vadd.f32 %v2853, %v2854
  %s2856 = vtos %v2855
  %2858 = vrot.lane.b32.xlu0 %v2846, 64
  %v2859 = vpop.permute.xlu0 %2858
  %v2861 = vsel %vm476, %v2859, 0.0
  %2862 = vadd.xlane.f32.xlu0 %v2861
  %v2863 = vpop.xlane.xlu0 %2862
  %v2864 = vrot.slane %v2863, 4
  %v2865 = vadd.f32 %v2863, %v2864
  %v2866 = vrot.slane %v2865, 2
  %v2867 = vadd.f32 %v2865, %v2866
  %v2868 = vrot.slane %v2867, 1
  %v2869 = vadd.f32 %v2867, %v2868
  %s2870 = vtos %v2869
  %s2871 = smul.f32 %s2856, 0.001953125
  %s2872 = smul.f32 %s2870, 0.001953125
  %s2873 = smul.f32 %s2871, %s2871
  %s2874 = ssub.f32 %s2872, %s2873
  %s2875 = smax.f32 %s2874, 0.0
  %s2876 = sadd.f32 %s2875, 1e-05
  %v2877 = vstv %s2876
  %v2878 = vrsqrt.pop %v2877
  %s2879 = vtos %v2878
  %v2880 = vstv %s2871
  %v2881 = vsub.f32 %v2709, %v2880
  %v2882 = vsub.f32 %v2710, %v2880
  %v2883 = vmul.f32 %v2781, %v2881
  %v2884 = vmul.f32 %v2781, %v2882
  %v2885 = vstv %s2879
  %v2886 = vmul.f32 %v2883, %v2885
  %v2887 = vmul.f32 %v2884, %v2885
  %v2888 = vadd.f32 %v2886, %v2790
  %v2889 = vadd.f32 %v2887, %v2790
  %2890 = vrot.lane.b32.xlu0 %v2846, 96
  %v2891 = vpop.permute.xlu0 %2890
  %v2893 = vsel %vm476, %v2891, 0.0
  %2894 = vadd.xlane.f32.xlu0 %v2893
  %v2895 = vpop.xlane.xlu0 %2894
  %v2896 = vrot.slane %v2895, 4
  %v2897 = vadd.f32 %v2895, %v2896
  %v2898 = vrot.slane %v2897, 2
  %v2899 = vadd.f32 %v2897, %v2898
  %v2900 = vrot.slane %v2899, 1
  %v2901 = vadd.f32 %v2899, %v2900
  %s2902 = vtos %v2901
  %2903 = vrot.lane.b32.xlu0 %v2846, 32
  %v2904 = vpop.permute.xlu0 %2903
  %v2906 = vsel %vm476, %v2904, 0.0
  %2907 = vadd.xlane.f32.xlu0 %v2906
  %v2908 = vpop.xlane.xlu0 %2907
  %v2909 = vrot.slane %v2908, 4
  %v2910 = vadd.f32 %v2908, %v2909
  %v2911 = vrot.slane %v2910, 2
  %v2912 = vadd.f32 %v2910, %v2911
  %v2913 = vrot.slane %v2912, 1
  %v2914 = vadd.f32 %v2912, %v2913
  %s2915 = vtos %v2914
  %s2916 = smul.f32 %s2902, 0.001953125
  %s2917 = smul.f32 %s2915, 0.001953125
  %s2918 = smul.f32 %s2916, %s2916
  %s2919 = ssub.f32 %s2917, %s2918
  %s2920 = smax.f32 %s2919, 0.0
  %s2921 = sadd.f32 %s2920, 1e-05
  %v2922 = vstv %s2921
  %v2923 = vrsqrt.pop %v2922
  %s2924 = vtos %v2923
  %v2925 = vstv %s2916
  %v2926 = vsub.f32 %v2709, %v2925
  %v2927 = vsub.f32 %v2710, %v2925
  %v2928 = vmul.f32 %v2781, %v2926
  %v2929 = vmul.f32 %v2781, %v2927
  %v2930 = vstv %s2924
  %v2931 = vmul.f32 %v2928, %v2930
  %v2932 = vmul.f32 %v2929, %v2930
  %v2933 = vadd.f32 %v2931, %v2790
  %v2934 = vadd.f32 %v2932, %v2790
  %v2935 = vsel %vm461, %v2888, %v2933
  %v2936 = vsel %vm461, %v2889, %v2934
  %v2937 = vlaneseq
  %v2938 = vshrl.u32 %v2937, 7
  %v2939 = vsub.s32 3, %v2938
  %v2940 = vrot.slane %v2287, %v2939
  %v2942 = vsel %vm466, %v2838, 0
  %v2945 = vsel %vm466, %v2839, 0
  %v2948 = vsel %vm466, %v2935, 0
  %v2951 = vsel %vm466, %v2936, 0
  %2953 = vmatprep.subr.mxu0 0.0
  %2954 = vmatpush1.msra.mxu0 0.0
  %2955 = vmatprep.subr.mxu0 0.0
  %2956 = vmatpush1.msra.mxu0 0.0
  %2957 = vmatprep.subr.mxu0 0.0
  %2958 = vmatpush1.msra.mxu0 0.0
  %2959 = vmatprep.subr.mxu0 0.0
  %2960 = vmatpush1.msra.mxu0 0.0
  %2961 = vmatprep.subr.mxu0 0.0
  %2962 = vmatpush1.msra.mxu0 0.0
  %2963 = vmatprep.subr.mxu0 0.0
  %2964 = vmatpush1.msra.mxu0 0.0
  %2965 = vmatprep.subr.mxu0 0.0
  %2966 = vmatpush1.msra.mxu0 0.0
  %2967 = vmatprep.subr.mxu0 0.0
  %2968 = vmatpush1.msra.mxu0 0.0
  %2969 = vmatprep.subr.mxu0 0.0
  %2970 = vmatpush1.msra.mxu0 %v2285
  %2971 = vmatprep.subr.mxu0 0.0
  %2972 = vmatpush1.msra.mxu0 %v2284
  %2973 = vmatprep.subr.mxu0 0.0
  %2974 = vmatpush1.msra.mxu0 %v2283
  %2975 = vmatprep.subr.mxu0 0.0
  %2976 = vmatpush1.msra.mxu0 %v2282
  %2977 = vmatprep.subr.mxu0 0.0
  %2978 = vmatpush1.msra.mxu0 %v2281
  %2979 = vmatprep.subr.mxu0 0.0
  %2980 = vmatpush1.msra.mxu0 %v2280
  %2981 = vmatprep.subr.mxu0 0.0
  %2982 = vmatpush1.msra.mxu0 %v2279
  %2983 = vmatprep.subr.mxu0 0.0
  %2984 = vmatpush1.msra.mxu0 %v2278
  %2985 = vmatprep.subr.mxu0 0.0
  %2986 = vmatpush2.msra.mxu0 0.0
  %2987 = vmatprep.subr.mxu0 0.0
  %2988 = vmatpush2.msra.mxu0 0.0
  %2989 = vmatprep.subr.mxu0 0.0
  %2990 = vmatpush2.msra.mxu0 0.0
  %2991 = vmatprep.subr.mxu0 0.0
  %2992 = vmatpush2.msra.mxu0 0.0
  %2993 = vmatprep.subr.mxu0 0.0
  %2994 = vmatpush2.msra.mxu0 0.0
  %2995 = vmatprep.subr.mxu0 0.0
  %2996 = vmatpush2.msra.mxu0 0.0
  %2997 = vmatprep.subr.mxu0 0.0
  %2998 = vmatpush2.msra.mxu0 0.0
  %2999 = vmatprep.subr.mxu0 0.0
  %3000 = vmatpush2.msra.mxu0 0.0
  %3001 = vmatprep.subr.mxu0 0.0
  %3002 = vmatpush2.msra.mxu0 0.0
  %3003 = vmatprep.subr.mxu0 0.0
  %3004 = vmatpush2.msra.mxu0 0.0
  %3005 = vmatprep.subr.mxu0 0.0
  %3006 = vmatpush2.msra.mxu0 0.0
  %3007 = vmatprep.subr.mxu0 0.0
  %3008 = vmatpush2.msra.mxu0 0.0
  %3009 = vmatprep.subr.mxu0 0.0
  %3010 = vmatpush2.msra.mxu0 0.0
  %3011 = vmatprep.subr.mxu0 0.0
  %3012 = vmatpush2.msra.mxu0 0.0
  %3013 = vmatprep.subr.mxu0 0.0
  %3014 = vmatpush2.msra.mxu0 0.0
  %3015 = vmatprep.subr.mxu0 0.0
  %3016 = vmatpush2.msra.mxu0 0.0
  %3017 = vmatprep.mubr.f32.mxu0 0.0
  %3018 = vmatmul.mubr.f32.gmra.mxu0 %v2942
  %v3019 = vpop.f32.mrf.mxu0
  %v3020 = vadd.f32 %v2940, %v3019
  %v3021 = vpop.f32.mrf.mxu0
  %3022 = vmatprep.mubr.f32.mxu0 0.0
  %3023 = vmatmul.mubr.f32.gmra.mxu0 %v2945
  %v3024 = vpop.f32.mrf.mxu0
  %v3025 = vadd.f32 %v2940, %v3024
  %v3026 = vpop.f32.mrf.mxu0
  %3027 = vmatprep.mubr.f32.mxu0 0.0
  %3028 = vmatmul.mubr.f32.gmra.mxu0 %v2948
  %v3029 = vpop.f32.mrf.mxu0
  %v3030 = vadd.f32 %v2940, %v3029
  %v3031 = vpop.f32.mrf.mxu0
  %3032 = vmatprep.mubr.f32.mxu0 0.0
  %3033 = vmatmul.mubr.f32.gmra.mxu0 %v2951
  %v3034 = vpop.f32.mrf.mxu0
  %v3035 = vadd.f32 %v2940, %v3034
  %v3036 = vpop.f32.mrf.mxu0
  %3037 = vdwg.mxu0
  %v3038 = vadd.f32 %v2270, %v3020
  %v3039 = vadd.f32 %v2271, %v3025
  %v3040 = vadd.f32 %v2272, %v3030
  %v3041 = vadd.f32 %v2273, %v3035
  %s3042 = scalar_lea.vmem %s14, 32
  %v3043 = vld [vmem:[%s3042] sm:$0xff]
  %v3044 = vld [vmem:[%s3042 + $0x8] sm:$0xff]
  %v3045 = vld [vmem:[%s3042 + $0x10] sm:$0xff]
  %v3046 = vld [vmem:[%s3042 + $0x18] sm:$0xff]
  %s3047 = scalar_lea.vmem %s15, 64
  %v3048 = vld [vmem:[%s3047] sm:$0xff]
  %v3049 = vld [vmem:[%s3047 + $0x8] sm:$0xff]
  %v3050 = vld [vmem:[%s3047 + $0x10] sm:$0xff]
  %v3051 = vld [vmem:[%s3047 + $0x18] sm:$0xff]
  %v3052 = vld [vmem:[%s3047 + $0x20] sm:$0xff]
  %v3053 = vld [vmem:[%s3047 + $0x28] sm:$0xff]
  %v3054 = vld [vmem:[%s3047 + $0x30] sm:$0xff]
  %v3055 = vld [vmem:[%s3047 + $0x38] sm:$0xff]
  %s3056 = scalar_lea.vmem %s16, 16
  %v3057 = vld [vmem:[%s3056] sm:$0xff]
  %v3058 = vld [vmem:[%s3056 + $0x8] sm:$0xf]
  %v3059 = vlaneseq
  %v3060 = vshrl.u32 %v3059, 7
  %v3061 = vsub.s32 0, %v3060
  %v3062 = vrot.slane %v3057, %v3061
  %v3064 = vsel %vm461, %v3038, 0
  %v3067 = vsel %vm461, %v3039, 0
  %v3070 = vsel %vm461, %v3040, 0
  %v3073 = vsel %vm461, %v3041, 0
  %3075 = vmatprep.subr.mxu0 0.0
  %3076 = vmatpush1.msra.mxu0 0.0
  %3077 = vmatprep.subr.mxu0 0.0
  %3078 = vmatpush1.msra.mxu0 0.0
  %3079 = vmatprep.subr.mxu0 0.0
  %3080 = vmatpush1.msra.mxu0 0.0
  %3081 = vmatprep.subr.mxu0 0.0
  %3082 = vmatpush1.msra.mxu0 0.0
  %3083 = vmatprep.subr.mxu0 0.0
  %3084 = vmatpush1.msra.mxu0 0.0
  %3085 = vmatprep.subr.mxu0 0.0
  %3086 = vmatpush1.msra.mxu0 0.0
  %3087 = vmatprep.subr.mxu0 0.0
  %3088 = vmatpush1.msra.mxu0 0.0
  %3089 = vmatprep.subr.mxu0 0.0
  %3090 = vmatpush1.msra.mxu0 0.0
  %3091 = vmatprep.subr.mxu0 0.0
  %3092 = vmatpush1.msra.mxu0 0.0
  %3093 = vmatprep.subr.mxu0 0.0
  %3094 = vmatpush1.msra.mxu0 0.0
  %3095 = vmatprep.subr.mxu0 0.0
  %3096 = vmatpush1.msra.mxu0 0.0
  %3097 = vmatprep.subr.mxu0 0.0
  %3098 = vmatpush1.msra.mxu0 0.0
  %3099 = vmatprep.subr.mxu0 0.0
  %3100 = vmatpush1.msra.mxu0 %v3046
  %3101 = vmatprep.subr.mxu0 0.0
  %3102 = vmatpush1.msra.mxu0 %v3045
  %3103 = vmatprep.subr.mxu0 0.0
  %3104 = vmatpush1.msra.mxu0 %v3044
  %3105 = vmatprep.subr.mxu0 0.0
  %3106 = vmatpush1.msra.mxu0 %v3043
  %3107 = vmatprep.subr.mxu0 0.0
  %3108 = vmatpush2.msra.mxu0 0.0
  %3109 = vmatprep.subr.mxu0 0.0
  %3110 = vmatpush2.msra.mxu0 0.0
  %3111 = vmatprep.subr.mxu0 0.0
  %3112 = vmatpush2.msra.mxu0 0.0
  %3113 = vmatprep.subr.mxu0 0.0
  %3114 = vmatpush2.msra.mxu0 0.0
  %3115 = vmatprep.subr.mxu0 0.0
  %3116 = vmatpush2.msra.mxu0 0.0
  %3117 = vmatprep.subr.mxu0 0.0
  %3118 = vmatpush2.msra.mxu0 0.0
  %3119 = vmatprep.subr.mxu0 0.0
  %3120 = vmatpush2.msra.mxu0 0.0
  %3121 = vmatprep.subr.mxu0 0.0
  %3122 = vmatpush2.msra.mxu0 0.0
  %3123 = vmatprep.subr.mxu0 0.0
  %3124 = vmatpush2.msra.mxu0 0.0
  %3125 = vmatprep.subr.mxu0 0.0
  %3126 = vmatpush2.msra.mxu0 0.0
  %3127 = vmatprep.subr.mxu0 0.0
  %3128 = vmatpush2.msra.mxu0 0.0
  %3129 = vmatprep.subr.mxu0 0.0
  %3130 = vmatpush2.msra.mxu0 0.0
  %3131 = vmatprep.subr.mxu0 0.0
  %3132 = vmatpush2.msra.mxu0 0.0
  %3133 = vmatprep.subr.mxu0 0.0
  %3134 = vmatpush2.msra.mxu0 0.0
  %3135 = vmatprep.subr.mxu0 0.0
  %3136 = vmatpush2.msra.mxu0 0.0
  %3137 = vmatprep.subr.mxu0 0.0
  %3138 = vmatpush2.msra.mxu0 0.0
  %3139 = vmatprep.mubr.f32.mxu0 0.0
  %3140 = vmatmul.mubr.f32.gmra.mxu0 %v3064
  %v3141 = vpop.f32.mrf.mxu0
  %v3142 = vadd.f32 %v3062, %v3141
  %v3143 = vpop.f32.mrf.mxu0
  %3144 = vmatprep.mubr.f32.mxu0 0.0
  %3145 = vmatmul.mubr.f32.gmra.mxu0 %v3067
  %v3146 = vpop.f32.mrf.mxu0
  %v3147 = vadd.f32 %v3062, %v3146
  %v3148 = vpop.f32.mrf.mxu0
  %3149 = vmatprep.mubr.f32.mxu0 0.0
  %3150 = vmatmul.mubr.f32.gmra.mxu0 %v3070
  %v3151 = vpop.f32.mrf.mxu0
  %v3152 = vadd.f32 %v3062, %v3151
  %v3153 = vpop.f32.mrf.mxu0
  %3154 = vmatprep.mubr.f32.mxu0 0.0
  %3155 = vmatmul.mubr.f32.gmra.mxu0 %v3073
  %v3156 = vpop.f32.mrf.mxu0
  %v3157 = vadd.f32 %v3062, %v3156
  %v3158 = vpop.f32.mrf.mxu0
  %3159 = vdwg.mxu0
  %vm3160 = vcmp.ge.f32.partialorder %v3142, 0.0
  %vm3161 = vcmp.ge.f32.partialorder %v3147, 0.0
  %vm3162 = vcmp.ge.f32.partialorder %v3152, 0.0
  %vm3163 = vcmp.ge.f32.partialorder %v3157, 0.0
  %v3164 = vlaneseq
  %v3165 = vshrl.u32 %v3164, 7
  %v3166 = vsub.s32 1, %v3165
  %v3167 = vrot.slane %v3057, %v3166
  %v3168 = vmul.f32 %v3167, %v3142
  %v3169 = vmul.f32 %v3167, %v3147
  %v3170 = vmul.f32 %v3167, %v3152
  %v3171 = vmul.f32 %v3167, %v3157
  %v3172 = vsel %vm3160, %v3142, %v3168
  %v3173 = vsel %vm3161, %v3147, %v3169
  %v3174 = vsel %vm3162, %v3152, %v3170
  %v3175 = vsel %vm3163, %v3157, %v3171
  %v3176 = vmul.f32 %v3172, %v3172
  %v3177 = vmul.f32 %v3173, %v3173
  %v3178 = vmul.f32 %v3174, %v3174
  %v3179 = vmul.f32 %v3175, %v3175
  %3184 = vrot.lane.b32.xlu0 %v3176, 64
  %v3185 = vpop.permute.xlu0 %3184
  %3186 = vrot.lane.b32.xlu0 %v3177, 64
  %v3187 = vpop.permute.xlu0 %3186
  %3188 = vrot.lane.b32.xlu0 %v3178, 64
  %v3189 = vpop.permute.xlu0 %3188
  %3190 = vrot.lane.b32.xlu0 %v3179, 64
  %v3191 = vpop.permute.xlu0 %3190
  %v3196 = vsel %vm466, %v3172, %v3185
  %v3197 = vsel %vm466, %v3173, %v3187
  %v3198 = vsel %vm466, %v3174, %v3189
  %v3199 = vsel %vm466, %v3175, %v3191
  %v3200 = vadd.f32 %v3196, %v3197
  %v3201 = vrot.slane %v3200, 4
  %v3202 = vadd.f32 %v3200, %v3201
  %v3203 = vrot.slane %v3202, 2
  %v3204 = vadd.f32 %v3202, %v3203
  %v3205 = vrot.slane %v3204, 1
  %v3206 = vadd.f32 %v3204, %v3205
  %v3207 = vsel %vm476, %v3206, 0.0
  %3208 = vadd.xlane.f32.xlu0 %v3207
  %v3209 = vpop.xlane.xlu0 %3208
  %v3210 = vrot.slane %v3209, 4
  %v3211 = vadd.f32 %v3209, %v3210
  %v3212 = vrot.slane %v3211, 2
  %v3213 = vadd.f32 %v3211, %v3212
  %v3214 = vrot.slane %v3213, 1
  %v3215 = vadd.f32 %v3213, %v3214
  %s3216 = vtos %v3215
  %3218 = vrot.lane.b32.xlu0 %v3206, 64
  %v3219 = vpop.permute.xlu0 %3218
  %v3221 = vsel %vm476, %v3219, 0.0
  %3222 = vadd.xlane.f32.xlu0 %v3221
  %v3223 = vpop.xlane.xlu0 %3222
  %v3224 = vrot.slane %v3223, 4
  %v3225 = vadd.f32 %v3223, %v3224
  %v3226 = vrot.slane %v3225, 2
  %v3227 = vadd.f32 %v3225, %v3226
  %v3228 = vrot.slane %v3227, 1
  %v3229 = vadd.f32 %v3227, %v3228
  %s3230 = vtos %v3229
  %s3231 = smul.f32 %s3216, 0.001953125
  %s3232 = smul.f32 %s3230, 0.001953125
  %s3233 = smul.f32 %s3231, %s3231
  %s3234 = ssub.f32 %s3232, %s3233
  %s3235 = smax.f32 %s3234, 0.0
  %s3236 = sadd.f32 %s3235, 1e-05
  %v3237 = vstv %s3236
  %v3238 = vrsqrt.pop %v3237
  %s3239 = vtos %v3238
  %v3240 = vstv %s3231
  %v3241 = vsub.f32 %v3172, %v3240
  %v3242 = vsub.f32 %v3173, %v3240
  %v3243 = vlaneseq
  %v3244 = vshrl.u32 %v3243, 7
  %v3245 = vsub.s32 2, %v3244
  %v3246 = vrot.slane %v3057, %v3245
  %v3247 = vmul.f32 %v3246, %v3241
  %v3248 = vmul.f32 %v3246, %v3242
  %v3249 = vstv %s3239
  %v3250 = vmul.f32 %v3247, %v3249
  %v3251 = vmul.f32 %v3248, %v3249
  %v3252 = vlaneseq
  %v3253 = vshrl.u32 %v3252, 7
  %v3254 = vsub.s32 3, %v3253
  %v3255 = vrot.slane %v3057, %v3254
  %v3256 = vadd.f32 %v3250, %v3255
  %v3257 = vadd.f32 %v3251, %v3255
  %3258 = vrot.lane.b32.xlu0 %v3206, 96
  %v3259 = vpop.permute.xlu0 %3258
  %v3261 = vsel %vm476, %v3259, 0.0
  %3262 = vadd.xlane.f32.xlu0 %v3261
  %v3263 = vpop.xlane.xlu0 %3262
  %v3264 = vrot.slane %v3263, 4
  %v3265 = vadd.f32 %v3263, %v3264
  %v3266 = vrot.slane %v3265, 2
  %v3267 = vadd.f32 %v3265, %v3266
  %v3268 = vrot.slane %v3267, 1
  %v3269 = vadd.f32 %v3267, %v3268
  %s3270 = vtos %v3269
  %3271 = vrot.lane.b32.xlu0 %v3206, 32
  %v3272 = vpop.permute.xlu0 %3271
  %v3274 = vsel %vm476, %v3272, 0.0
  %3275 = vadd.xlane.f32.xlu0 %v3274
  %v3276 = vpop.xlane.xlu0 %3275
  %v3277 = vrot.slane %v3276, 4
  %v3278 = vadd.f32 %v3276, %v3277
  %v3279 = vrot.slane %v3278, 2
  %v3280 = vadd.f32 %v3278, %v3279
  %v3281 = vrot.slane %v3280, 1
  %v3282 = vadd.f32 %v3280, %v3281
  %s3283 = vtos %v3282
  %s3284 = smul.f32 %s3270, 0.001953125
  %s3285 = smul.f32 %s3283, 0.001953125
  %s3286 = smul.f32 %s3284, %s3284
  %s3287 = ssub.f32 %s3285, %s3286
  %s3288 = smax.f32 %s3287, 0.0
  %s3289 = sadd.f32 %s3288, 1e-05
  %v3290 = vstv %s3289
  %v3291 = vrsqrt.pop %v3290
  %s3292 = vtos %v3291
  %v3293 = vstv %s3284
  %v3294 = vsub.f32 %v3172, %v3293
  %v3295 = vsub.f32 %v3173, %v3293
  %v3296 = vmul.f32 %v3246, %v3294
  %v3297 = vmul.f32 %v3246, %v3295
  %v3298 = vstv %s3292
  %v3299 = vmul.f32 %v3296, %v3298
  %v3300 = vmul.f32 %v3297, %v3298
  %v3301 = vadd.f32 %v3299, %v3255
  %v3302 = vadd.f32 %v3300, %v3255
  %v3303 = vsel %vm461, %v3256, %v3301
  %v3304 = vsel %vm461, %v3257, %v3302
  %v3305 = vadd.f32 %v3198, %v3199
  %v3306 = vrot.slane %v3305, 4
  %v3307 = vadd.f32 %v3305, %v3306
  %v3308 = vrot.slane %v3307, 2
  %v3309 = vadd.f32 %v3307, %v3308
  %v3310 = vrot.slane %v3309, 1
  %v3311 = vadd.f32 %v3309, %v3310
  %v3312 = vsel %vm476, %v3311, 0.0
  %3313 = vadd.xlane.f32.xlu0 %v3312
  %v3314 = vpop.xlane.xlu0 %3313
  %v3315 = vrot.slane %v3314, 4
  %v3316 = vadd.f32 %v3314, %v3315
  %v3317 = vrot.slane %v3316, 2
  %v3318 = vadd.f32 %v3316, %v3317
  %v3319 = vrot.slane %v3318, 1
  %v3320 = vadd.f32 %v3318, %v3319
  %s3321 = vtos %v3320
  %3323 = vrot.lane.b32.xlu0 %v3311, 64
  %v3324 = vpop.permute.xlu0 %3323
  %v3326 = vsel %vm476, %v3324, 0.0
  %3327 = vadd.xlane.f32.xlu0 %v3326
  %v3328 = vpop.xlane.xlu0 %3327
  %v3329 = vrot.slane %v3328, 4
  %v3330 = vadd.f32 %v3328, %v3329
  %v3331 = vrot.slane %v3330, 2
  %v3332 = vadd.f32 %v3330, %v3331
  %v3333 = vrot.slane %v3332, 1
  %v3334 = vadd.f32 %v3332, %v3333
  %s3335 = vtos %v3334
  %s3336 = smul.f32 %s3321, 0.001953125
  %s3337 = smul.f32 %s3335, 0.001953125
  %s3338 = smul.f32 %s3336, %s3336
  %s3339 = ssub.f32 %s3337, %s3338
  %s3340 = smax.f32 %s3339, 0.0
  %s3341 = sadd.f32 %s3340, 1e-05
  %v3342 = vstv %s3341
  %v3343 = vrsqrt.pop %v3342
  %s3344 = vtos %v3343
  %v3345 = vstv %s3336
  %v3346 = vsub.f32 %v3174, %v3345
  %v3347 = vsub.f32 %v3175, %v3345
  %v3348 = vmul.f32 %v3246, %v3346
  %v3349 = vmul.f32 %v3246, %v3347
  %v3350 = vstv %s3344
  %v3351 = vmul.f32 %v3348, %v3350
  %v3352 = vmul.f32 %v3349, %v3350
  %v3353 = vadd.f32 %v3351, %v3255
  %v3354 = vadd.f32 %v3352, %v3255
  %3355 = vrot.lane.b32.xlu0 %v3311, 96
  %v3356 = vpop.permute.xlu0 %3355
  %v3358 = vsel %vm476, %v3356, 0.0
  %3359 = vadd.xlane.f32.xlu0 %v3358
  %v3360 = vpop.xlane.xlu0 %3359
  %v3361 = vrot.slane %v3360, 4
  %v3362 = vadd.f32 %v3360, %v3361
  %v3363 = vrot.slane %v3362, 2
  %v3364 = vadd.f32 %v3362, %v3363
  %v3365 = vrot.slane %v3364, 1
  %v3366 = vadd.f32 %v3364, %v3365
  %s3367 = vtos %v3366
  %3368 = vrot.lane.b32.xlu0 %v3311, 32
  %v3369 = vpop.permute.xlu0 %3368
  %v3371 = vsel %vm476, %v3369, 0.0
  %3372 = vadd.xlane.f32.xlu0 %v3371
  %v3373 = vpop.xlane.xlu0 %3372
  %v3374 = vrot.slane %v3373, 4
  %v3375 = vadd.f32 %v3373, %v3374
  %v3376 = vrot.slane %v3375, 2
  %v3377 = vadd.f32 %v3375, %v3376
  %v3378 = vrot.slane %v3377, 1
  %v3379 = vadd.f32 %v3377, %v3378
  %s3380 = vtos %v3379
  %s3381 = smul.f32 %s3367, 0.001953125
  %s3382 = smul.f32 %s3380, 0.001953125
  %s3383 = smul.f32 %s3381, %s3381
  %s3384 = ssub.f32 %s3382, %s3383
  %s3385 = smax.f32 %s3384, 0.0
  %s3386 = sadd.f32 %s3385, 1e-05
  %v3387 = vstv %s3386
  %v3388 = vrsqrt.pop %v3387
  %s3389 = vtos %v3388
  %v3390 = vstv %s3381
  %v3391 = vsub.f32 %v3174, %v3390
  %v3392 = vsub.f32 %v3175, %v3390
  %v3393 = vmul.f32 %v3246, %v3391
  %v3394 = vmul.f32 %v3246, %v3392
  %v3395 = vstv %s3389
  %v3396 = vmul.f32 %v3393, %v3395
  %v3397 = vmul.f32 %v3394, %v3395
  %v3398 = vadd.f32 %v3396, %v3255
  %v3399 = vadd.f32 %v3397, %v3255
  %v3400 = vsel %vm461, %v3353, %v3398
  %v3401 = vsel %vm461, %v3354, %v3399
  %v3402 = vlaneseq
  %v3403 = vshrl.u32 %v3402, 7
  %v3404 = vsub.s32 5, %v3403
  %v3405 = vrot.slane %v3057, %v3404
  %v3406 = vmul.f32 %v3303, %v3405
  %v3407 = vmul.f32 %v3304, %v3405
  %v3408 = vmul.f32 %v3400, %v3405
  %v3409 = vmul.f32 %v3401, %v3405
  %v3410 = vlaneseq
  %v3411 = vshrl.u32 %v3410, 7
  %v3412 = vsub.s32 7, %v3411
  %v3413 = vrot.slane %v3057, %v3412
  %v3414 = vadd.f32 %v3406, %v3413
  %v3415 = vadd.f32 %v3407, %v3413
  %v3416 = vadd.f32 %v3408, %v3413
  %v3417 = vadd.f32 %v3409, %v3413
  %v3418 = vrot.slane %v3303, 6
  %v3419 = vrot.slane %v3304, 6
  %v3420 = vrot.slane %v3400, 6
  %v3421 = vrot.slane %v3401, 6
  %v3422 = vsel %vm1187, %v3420, %v3421
  %v3423 = vsel %vm1187, %v3419, %v3420
  %v3424 = vsel %vm1187, %v3418, %v3419
  %v3425 = vsel %vm1187, %v3421, %v3418
  %v3426 = vmul.f32 %v3425, %v129
  %v3427 = vmul.f32 %v3424, %v130
  %v3428 = vmul.f32 %v3423, %v131
  %v3429 = vmul.f32 %v3422, %v132
  %v3430 = vlaneseq
  %v3431 = vshrl.u32 %v3430, 7
  %v3432 = vsub.s32 4, %v3431
  %v3433 = vrot.slane %v3057, %v3432
  %v3434 = vmul.f32 %v3426, %v3433
  %v3435 = vmul.f32 %v3427, %v3433
  %v3436 = vmul.f32 %v3428, %v3433
  %v3437 = vmul.f32 %v3429, %v3433
  %v3438 = vadd.f32 %v3414, %v3434
  %v3439 = vadd.f32 %v3415, %v3435
  %v3440 = vadd.f32 %v3416, %v3436
  %v3441 = vadd.f32 %v3417, %v3437
  %v3442 = vrot.slane %v3303, 2
  %v3443 = vrot.slane %v3304, 2
  %v3444 = vrot.slane %v3400, 2
  %v3445 = vrot.slane %v3401, 2
  %v3446 = vsel %vm1212, %v3444, %v3445
  %v3447 = vsel %vm1212, %v3443, %v3444
  %v3448 = vsel %vm1212, %v3442, %v3443
  %v3449 = vsel %vm1212, %v3445, %v3442
  %v3450 = vmul.f32 %v3448, %v201
  %v3451 = vmul.f32 %v3447, %v202
  %v3452 = vmul.f32 %v3446, %v203
  %v3453 = vmul.f32 %v3449, %v204
  %v3454 = vlaneseq
  %v3455 = vshrl.u32 %v3454, 7
  %v3456 = vsub.s32 6, %v3455
  %v3457 = vrot.slane %v3057, %v3456
  %v3458 = vmul.f32 %v3450, %v3457
  %v3459 = vmul.f32 %v3451, %v3457
  %v3460 = vmul.f32 %v3452, %v3457
  %v3461 = vmul.f32 %v3453, %v3457
  %v3462 = vadd.f32 %v3438, %v3458
  %v3463 = vadd.f32 %v3439, %v3459
  %v3464 = vadd.f32 %v3440, %v3460
  %v3465 = vadd.f32 %v3441, %v3461
  %vm3466 = vcmp.ge.f32.partialorder %v3462, 0.0
  %vm3467 = vcmp.ge.f32.partialorder %v3463, 0.0
  %vm3468 = vcmp.ge.f32.partialorder %v3464, 0.0
  %vm3469 = vcmp.ge.f32.partialorder %v3465, 0.0
  %v3470 = vlaneseq
  %v3471 = vshrl.u32 %v3470, 7
  %v3472 = vsub.s32 0, %v3471
  %v3473 = vrot.slane %v3058, %v3472
  %v3474 = vmul.f32 %v3473, %v3462
  %v3475 = vmul.f32 %v3473, %v3463
  %v3476 = vmul.f32 %v3473, %v3464
  %v3477 = vmul.f32 %v3473, %v3465
  %v3478 = vsel %vm3466, %v3462, %v3474
  %v3479 = vsel %vm3467, %v3463, %v3475
  %v3480 = vsel %vm3468, %v3464, %v3476
  %v3481 = vsel %vm3469, %v3465, %v3477
  %v3482 = vmul.f32 %v3478, %v3478
  %v3483 = vmul.f32 %v3479, %v3479
  %v3484 = vmul.f32 %v3480, %v3480
  %v3485 = vmul.f32 %v3481, %v3481
  %3490 = vrot.lane.b32.xlu0 %v3482, 64
  %v3491 = vpop.permute.xlu0 %3490
  %3492 = vrot.lane.b32.xlu0 %v3483, 64
  %v3493 = vpop.permute.xlu0 %3492
  %3494 = vrot.lane.b32.xlu0 %v3484, 64
  %v3495 = vpop.permute.xlu0 %3494
  %3496 = vrot.lane.b32.xlu0 %v3485, 64
  %v3497 = vpop.permute.xlu0 %3496
  %v3502 = vsel %vm466, %v3478, %v3491
  %v3503 = vsel %vm466, %v3479, %v3493
  %v3504 = vsel %vm466, %v3480, %v3495
  %v3505 = vsel %vm466, %v3481, %v3497
  %v3506 = vadd.f32 %v3502, %v3503
  %v3507 = vrot.slane %v3506, 4
  %v3508 = vadd.f32 %v3506, %v3507
  %v3509 = vrot.slane %v3508, 2
  %v3510 = vadd.f32 %v3508, %v3509
  %v3511 = vrot.slane %v3510, 1
  %v3512 = vadd.f32 %v3510, %v3511
  %v3513 = vsel %vm476, %v3512, 0.0
  %3514 = vadd.xlane.f32.xlu0 %v3513
  %v3515 = vpop.xlane.xlu0 %3514
  %v3516 = vrot.slane %v3515, 4
  %v3517 = vadd.f32 %v3515, %v3516
  %v3518 = vrot.slane %v3517, 2
  %v3519 = vadd.f32 %v3517, %v3518
  %v3520 = vrot.slane %v3519, 1
  %v3521 = vadd.f32 %v3519, %v3520
  %s3522 = vtos %v3521
  %3524 = vrot.lane.b32.xlu0 %v3512, 64
  %v3525 = vpop.permute.xlu0 %3524
  %v3527 = vsel %vm476, %v3525, 0.0
  %3528 = vadd.xlane.f32.xlu0 %v3527
  %v3529 = vpop.xlane.xlu0 %3528
  %v3530 = vrot.slane %v3529, 4
  %v3531 = vadd.f32 %v3529, %v3530
  %v3532 = vrot.slane %v3531, 2
  %v3533 = vadd.f32 %v3531, %v3532
  %v3534 = vrot.slane %v3533, 1
  %v3535 = vadd.f32 %v3533, %v3534
  %s3536 = vtos %v3535
  %s3537 = smul.f32 %s3522, 0.001953125
  %s3538 = smul.f32 %s3536, 0.001953125
  %s3539 = smul.f32 %s3537, %s3537
  %s3540 = ssub.f32 %s3538, %s3539
  %s3541 = smax.f32 %s3540, 0.0
  %s3542 = sadd.f32 %s3541, 1e-05
  %v3543 = vstv %s3542
  %v3544 = vrsqrt.pop %v3543
  %s3545 = vtos %v3544
  %v3546 = vstv %s3537
  %v3547 = vsub.f32 %v3478, %v3546
  %v3548 = vsub.f32 %v3479, %v3546
  %v3549 = vlaneseq
  %v3550 = vshrl.u32 %v3549, 7
  %v3551 = vsub.s32 1, %v3550
  %v3552 = vrot.slane %v3058, %v3551
  %v3553 = vmul.f32 %v3552, %v3547
  %v3554 = vmul.f32 %v3552, %v3548
  %v3555 = vstv %s3545
  %v3556 = vmul.f32 %v3553, %v3555
  %v3557 = vmul.f32 %v3554, %v3555
  %v3558 = vlaneseq
  %v3559 = vshrl.u32 %v3558, 7
  %v3560 = vsub.s32 2, %v3559
  %v3561 = vrot.slane %v3058, %v3560
  %v3562 = vadd.f32 %v3556, %v3561
  %v3563 = vadd.f32 %v3557, %v3561
  %3564 = vrot.lane.b32.xlu0 %v3512, 96
  %v3565 = vpop.permute.xlu0 %3564
  %v3567 = vsel %vm476, %v3565, 0.0
  %3568 = vadd.xlane.f32.xlu0 %v3567
  %v3569 = vpop.xlane.xlu0 %3568
  %v3570 = vrot.slane %v3569, 4
  %v3571 = vadd.f32 %v3569, %v3570
  %v3572 = vrot.slane %v3571, 2
  %v3573 = vadd.f32 %v3571, %v3572
  %v3574 = vrot.slane %v3573, 1
  %v3575 = vadd.f32 %v3573, %v3574
  %s3576 = vtos %v3575
  %3577 = vrot.lane.b32.xlu0 %v3512, 32
  %v3578 = vpop.permute.xlu0 %3577
  %v3580 = vsel %vm476, %v3578, 0.0
  %3581 = vadd.xlane.f32.xlu0 %v3580
  %v3582 = vpop.xlane.xlu0 %3581
  %v3583 = vrot.slane %v3582, 4
  %v3584 = vadd.f32 %v3582, %v3583
  %v3585 = vrot.slane %v3584, 2
  %v3586 = vadd.f32 %v3584, %v3585
  %v3587 = vrot.slane %v3586, 1
  %v3588 = vadd.f32 %v3586, %v3587
  %s3589 = vtos %v3588
  %s3590 = smul.f32 %s3576, 0.001953125
  %s3591 = smul.f32 %s3589, 0.001953125
  %s3592 = smul.f32 %s3590, %s3590
  %s3593 = ssub.f32 %s3591, %s3592
  %s3594 = smax.f32 %s3593, 0.0
  %s3595 = sadd.f32 %s3594, 1e-05
  %v3596 = vstv %s3595
  %v3597 = vrsqrt.pop %v3596
  %s3598 = vtos %v3597
  %v3599 = vstv %s3590
  %v3600 = vsub.f32 %v3478, %v3599
  %v3601 = vsub.f32 %v3479, %v3599
  %v3602 = vmul.f32 %v3552, %v3600
  %v3603 = vmul.f32 %v3552, %v3601
  %v3604 = vstv %s3598
  %v3605 = vmul.f32 %v3602, %v3604
  %v3606 = vmul.f32 %v3603, %v3604
  %v3607 = vadd.f32 %v3605, %v3561
  %v3608 = vadd.f32 %v3606, %v3561
  %v3609 = vsel %vm461, %v3562, %v3607
  %v3610 = vsel %vm461, %v3563, %v3608
  %v3611 = vadd.f32 %v3504, %v3505
  %v3612 = vrot.slane %v3611, 4
  %v3613 = vadd.f32 %v3611, %v3612
  %v3614 = vrot.slane %v3613, 2
  %v3615 = vadd.f32 %v3613, %v3614
  %v3616 = vrot.slane %v3615, 1
  %v3617 = vadd.f32 %v3615, %v3616
  %v3618 = vsel %vm476, %v3617, 0.0
  %3619 = vadd.xlane.f32.xlu0 %v3618
  %v3620 = vpop.xlane.xlu0 %3619
  %v3621 = vrot.slane %v3620, 4
  %v3622 = vadd.f32 %v3620, %v3621
  %v3623 = vrot.slane %v3622, 2
  %v3624 = vadd.f32 %v3622, %v3623
  %v3625 = vrot.slane %v3624, 1
  %v3626 = vadd.f32 %v3624, %v3625
  %s3627 = vtos %v3626
  %3629 = vrot.lane.b32.xlu0 %v3617, 64
  %v3630 = vpop.permute.xlu0 %3629
  %v3632 = vsel %vm476, %v3630, 0.0
  %3633 = vadd.xlane.f32.xlu0 %v3632
  %v3634 = vpop.xlane.xlu0 %3633
  %v3635 = vrot.slane %v3634, 4
  %v3636 = vadd.f32 %v3634, %v3635
  %v3637 = vrot.slane %v3636, 2
  %v3638 = vadd.f32 %v3636, %v3637
  %v3639 = vrot.slane %v3638, 1
  %v3640 = vadd.f32 %v3638, %v3639
  %s3641 = vtos %v3640
  %s3642 = smul.f32 %s3627, 0.001953125
  %s3643 = smul.f32 %s3641, 0.001953125
  %s3644 = smul.f32 %s3642, %s3642
  %s3645 = ssub.f32 %s3643, %s3644
  %s3646 = smax.f32 %s3645, 0.0
  %s3647 = sadd.f32 %s3646, 1e-05
  %v3648 = vstv %s3647
  %v3649 = vrsqrt.pop %v3648
  %s3650 = vtos %v3649
  %v3651 = vstv %s3642
  %v3652 = vsub.f32 %v3480, %v3651
  %v3653 = vsub.f32 %v3481, %v3651
  %v3654 = vmul.f32 %v3552, %v3652
  %v3655 = vmul.f32 %v3552, %v3653
  %v3656 = vstv %s3650
  %v3657 = vmul.f32 %v3654, %v3656
  %v3658 = vmul.f32 %v3655, %v3656
  %v3659 = vadd.f32 %v3657, %v3561
  %v3660 = vadd.f32 %v3658, %v3561
  %3661 = vrot.lane.b32.xlu0 %v3617, 96
  %v3662 = vpop.permute.xlu0 %3661
  %v3664 = vsel %vm476, %v3662, 0.0
  %3665 = vadd.xlane.f32.xlu0 %v3664
  %v3666 = vpop.xlane.xlu0 %3665
  %v3667 = vrot.slane %v3666, 4
  %v3668 = vadd.f32 %v3666, %v3667
  %v3669 = vrot.slane %v3668, 2
  %v3670 = vadd.f32 %v3668, %v3669
  %v3671 = vrot.slane %v3670, 1
  %v3672 = vadd.f32 %v3670, %v3671
  %s3673 = vtos %v3672
  %3674 = vrot.lane.b32.xlu0 %v3617, 32
  %v3675 = vpop.permute.xlu0 %3674
  %v3677 = vsel %vm476, %v3675, 0.0
  %3678 = vadd.xlane.f32.xlu0 %v3677
  %v3679 = vpop.xlane.xlu0 %3678
  %v3680 = vrot.slane %v3679, 4
  %v3681 = vadd.f32 %v3679, %v3680
  %v3682 = vrot.slane %v3681, 2
  %v3683 = vadd.f32 %v3681, %v3682
  %v3684 = vrot.slane %v3683, 1
  %v3685 = vadd.f32 %v3683, %v3684
  %s3686 = vtos %v3685
  %s3687 = smul.f32 %s3673, 0.001953125
  %s3688 = smul.f32 %s3686, 0.001953125
  %s3689 = smul.f32 %s3687, %s3687
  %s3690 = ssub.f32 %s3688, %s3689
  %s3691 = smax.f32 %s3690, 0.0
  %s3692 = sadd.f32 %s3691, 1e-05
  %v3693 = vstv %s3692
  %v3694 = vrsqrt.pop %v3693
  %s3695 = vtos %v3694
  %v3696 = vstv %s3687
  %v3697 = vsub.f32 %v3480, %v3696
  %v3698 = vsub.f32 %v3481, %v3696
  %v3699 = vmul.f32 %v3552, %v3697
  %v3700 = vmul.f32 %v3552, %v3698
  %v3701 = vstv %s3695
  %v3702 = vmul.f32 %v3699, %v3701
  %v3703 = vmul.f32 %v3700, %v3701
  %v3704 = vadd.f32 %v3702, %v3561
  %v3705 = vadd.f32 %v3703, %v3561
  %v3706 = vsel %vm461, %v3659, %v3704
  %v3707 = vsel %vm461, %v3660, %v3705
  %v3708 = vlaneseq
  %v3709 = vshrl.u32 %v3708, 7
  %v3710 = vsub.s32 3, %v3709
  %v3711 = vrot.slane %v3058, %v3710
  %v3713 = vsel %vm466, %v3609, 0
  %v3716 = vsel %vm466, %v3610, 0
  %v3719 = vsel %vm466, %v3706, 0
  %v3722 = vsel %vm466, %v3707, 0
  %3724 = vmatprep.subr.mxu0 0.0
  %3725 = vmatpush1.msra.mxu0 0.0
  %3726 = vmatprep.subr.mxu0 0.0
  %3727 = vmatpush1.msra.mxu0 0.0
  %3728 = vmatprep.subr.mxu0 0.0
  %3729 = vmatpush1.msra.mxu0 0.0
  %3730 = vmatprep.subr.mxu0 0.0
  %3731 = vmatpush1.msra.mxu0 0.0
  %3732 = vmatprep.subr.mxu0 0.0
  %3733 = vmatpush1.msra.mxu0 0.0
  %3734 = vmatprep.subr.mxu0 0.0
  %3735 = vmatpush1.msra.mxu0 0.0
  %3736 = vmatprep.subr.mxu0 0.0
  %3737 = vmatpush1.msra.mxu0 0.0
  %3738 = vmatprep.subr.mxu0 0.0
  %3739 = vmatpush1.msra.mxu0 0.0
  %3740 = vmatprep.subr.mxu0 0.0
  %3741 = vmatpush1.msra.mxu0 %v3055
  %3742 = vmatprep.subr.mxu0 0.0
  %3743 = vmatpush1.msra.mxu0 %v3054
  %3744 = vmatprep.subr.mxu0 0.0
  %3745 = vmatpush1.msra.mxu0 %v3053
  %3746 = vmatprep.subr.mxu0 0.0
  %3747 = vmatpush1.msra.mxu0 %v3052
  %3748 = vmatprep.subr.mxu0 0.0
  %3749 = vmatpush1.msra.mxu0 %v3051
  %3750 = vmatprep.subr.mxu0 0.0
  %3751 = vmatpush1.msra.mxu0 %v3050
  %3752 = vmatprep.subr.mxu0 0.0
  %3753 = vmatpush1.msra.mxu0 %v3049
  %3754 = vmatprep.subr.mxu0 0.0
  %3755 = vmatpush1.msra.mxu0 %v3048
  %3756 = vmatprep.subr.mxu0 0.0
  %3757 = vmatpush2.msra.mxu0 0.0
  %3758 = vmatprep.subr.mxu0 0.0
  %3759 = vmatpush2.msra.mxu0 0.0
  %3760 = vmatprep.subr.mxu0 0.0
  %3761 = vmatpush2.msra.mxu0 0.0
  %3762 = vmatprep.subr.mxu0 0.0
  %3763 = vmatpush2.msra.mxu0 0.0
  %3764 = vmatprep.subr.mxu0 0.0
  %3765 = vmatpush2.msra.mxu0 0.0
  %3766 = vmatprep.subr.mxu0 0.0
  %3767 = vmatpush2.msra.mxu0 0.0
  %3768 = vmatprep.subr.mxu0 0.0
  %3769 = vmatpush2.msra.mxu0 0.0
  %3770 = vmatprep.subr.mxu0 0.0
  %3771 = vmatpush2.msra.mxu0 0.0
  %3772 = vmatprep.subr.mxu0 0.0
  %3773 = vmatpush2.msra.mxu0 0.0
  %3774 = vmatprep.subr.mxu0 0.0
  %3775 = vmatpush2.msra.mxu0 0.0
  %3776 = vmatprep.subr.mxu0 0.0
  %3777 = vmatpush2.msra.mxu0 0.0
  %3778 = vmatprep.subr.mxu0 0.0
  %3779 = vmatpush2.msra.mxu0 0.0
  %3780 = vmatprep.subr.mxu0 0.0
  %3781 = vmatpush2.msra.mxu0 0.0
  %3782 = vmatprep.subr.mxu0 0.0
  %3783 = vmatpush2.msra.mxu0 0.0
  %3784 = vmatprep.subr.mxu0 0.0
  %3785 = vmatpush2.msra.mxu0 0.0
  %3786 = vmatprep.subr.mxu0 0.0
  %3787 = vmatpush2.msra.mxu0 0.0
  %3788 = vmatprep.mubr.f32.mxu0 0.0
  %3789 = vmatmul.mubr.f32.gmra.mxu0 %v3713
  %v3790 = vpop.f32.mrf.mxu0
  %v3791 = vadd.f32 %v3711, %v3790
  %v3792 = vpop.f32.mrf.mxu0
  %3793 = vmatprep.mubr.f32.mxu0 0.0
  %3794 = vmatmul.mubr.f32.gmra.mxu0 %v3716
  %v3795 = vpop.f32.mrf.mxu0
  %v3796 = vadd.f32 %v3711, %v3795
  %v3797 = vpop.f32.mrf.mxu0
  %3798 = vmatprep.mubr.f32.mxu0 0.0
  %3799 = vmatmul.mubr.f32.gmra.mxu0 %v3719
  %v3800 = vpop.f32.mrf.mxu0
  %v3801 = vadd.f32 %v3711, %v3800
  %v3802 = vpop.f32.mrf.mxu0
  %3803 = vmatprep.mubr.f32.mxu0 0.0
  %3804 = vmatmul.mubr.f32.gmra.mxu0 %v3722
  %v3805 = vpop.f32.mrf.mxu0
  %v3806 = vadd.f32 %v3711, %v3805
  %v3807 = vpop.f32.mrf.mxu0
  %3808 = vdwg.mxu0
  %v3809 = vadd.f32 %v3038, %v3791
  %v3810 = vadd.f32 %v3039, %v3796
  %v3811 = vadd.f32 %v3040, %v3801
  %v3812 = vadd.f32 %v3041, %v3806
  %v3813 = vld [vmem:[%s9] sm:$0xff]
  %v3814 = vld [vmem:[%s9 + $0x8] sm:$0xff]
  %v3815 = vld [vmem:[%s9 + $0x10] sm:$0xff]
  %v3816 = vld [vmem:[%s9 + $0x18] sm:$0xff]
  %v3817 = vlaneseq
  %v3818 = vshrl.u32 %v3817, 7
  %v3819 = vsub.s32 3, %v3818
  %v3820 = vrot.slane %v205, %v3819
  %v3822 = vsel %vm461, %v3809, 0
  %v3825 = vsel %vm461, %v3810, 0
  %v3828 = vsel %vm461, %v3811, 0
  %v3831 = vsel %vm461, %v3812, 0
  %3833 = vmatprep.subr.mxu0 0.0
  %3834 = vmatpush1.msra.mxu0 0.0
  %3835 = vmatprep.subr.mxu0 0.0
  %3836 = vmatpush1.msra.mxu0 0.0
  %3837 = vmatprep.subr.mxu0 0.0
  %3838 = vmatpush1.msra.mxu0 0.0
  %3839 = vmatprep.subr.mxu0 0.0
  %3840 = vmatpush1.msra.mxu0 0.0
  %3841 = vmatprep.subr.mxu0 0.0
  %3842 = vmatpush1.msra.mxu0 0.0
  %3843 = vmatprep.subr.mxu0 0.0
  %3844 = vmatpush1.msra.mxu0 0.0
  %3845 = vmatprep.subr.mxu0 0.0
  %3846 = vmatpush1.msra.mxu0 0.0
  %3847 = vmatprep.subr.mxu0 0.0
  %3848 = vmatpush1.msra.mxu0 0.0
  %3849 = vmatprep.subr.mxu0 0.0
  %3850 = vmatpush1.msra.mxu0 0.0
  %3851 = vmatprep.subr.mxu0 0.0
  %3852 = vmatpush1.msra.mxu0 0.0
  %3853 = vmatprep.subr.mxu0 0.0
  %3854 = vmatpush1.msra.mxu0 0.0
  %3855 = vmatprep.subr.mxu0 0.0
  %3856 = vmatpush1.msra.mxu0 0.0
  %3857 = vmatprep.subr.mxu0 0.0
  %3858 = vmatpush1.msra.mxu0 %v3816
  %3859 = vmatprep.subr.mxu0 0.0
  %3860 = vmatpush1.msra.mxu0 %v3815
  %3861 = vmatprep.subr.mxu0 0.0
  %3862 = vmatpush1.msra.mxu0 %v3814
  %3863 = vmatprep.subr.mxu0 0.0
  %3864 = vmatpush1.msra.mxu0 %v3813
  %3865 = vmatprep.subr.mxu0 0.0
  %3866 = vmatpush2.msra.mxu0 0.0
  %3867 = vmatprep.subr.mxu0 0.0
  %3868 = vmatpush2.msra.mxu0 0.0
  %3869 = vmatprep.subr.mxu0 0.0
  %3870 = vmatpush2.msra.mxu0 0.0
  %3871 = vmatprep.subr.mxu0 0.0
  %3872 = vmatpush2.msra.mxu0 0.0
  %3873 = vmatprep.subr.mxu0 0.0
  %3874 = vmatpush2.msra.mxu0 0.0
  %3875 = vmatprep.subr.mxu0 0.0
  %3876 = vmatpush2.msra.mxu0 0.0
  %3877 = vmatprep.subr.mxu0 0.0
  %3878 = vmatpush2.msra.mxu0 0.0
  %3879 = vmatprep.subr.mxu0 0.0
  %3880 = vmatpush2.msra.mxu0 0.0
  %3881 = vmatprep.subr.mxu0 0.0
  %3882 = vmatpush2.msra.mxu0 0.0
  %3883 = vmatprep.subr.mxu0 0.0
  %3884 = vmatpush2.msra.mxu0 0.0
  %3885 = vmatprep.subr.mxu0 0.0
  %3886 = vmatpush2.msra.mxu0 0.0
  %3887 = vmatprep.subr.mxu0 0.0
  %3888 = vmatpush2.msra.mxu0 0.0
  %3889 = vmatprep.subr.mxu0 0.0
  %3890 = vmatpush2.msra.mxu0 0.0
  %3891 = vmatprep.subr.mxu0 0.0
  %3892 = vmatpush2.msra.mxu0 0.0
  %3893 = vmatprep.subr.mxu0 0.0
  %3894 = vmatpush2.msra.mxu0 0.0
  %3895 = vmatprep.subr.mxu0 0.0
  %3896 = vmatpush2.msra.mxu0 0.0
  %3897 = vmatprep.mubr.f32.mxu0 0.0
  %3898 = vmatmul.mubr.f32.gmra.mxu0 %v3822
  %v3899 = vpop.f32.mrf.mxu0
  %v3900 = vadd.f32 %v3820, %v3899
  %v3901 = vpop.f32.mrf.mxu0
  %3902 = vmatprep.mubr.f32.mxu0 0.0
  %3903 = vmatmul.mubr.f32.gmra.mxu0 %v3825
  %v3904 = vpop.f32.mrf.mxu0
  %v3905 = vadd.f32 %v3820, %v3904
  %v3906 = vpop.f32.mrf.mxu0
  %3907 = vmatprep.mubr.f32.mxu0 0.0
  %3908 = vmatmul.mubr.f32.gmra.mxu0 %v3828
  %v3909 = vpop.f32.mrf.mxu0
  %v3910 = vadd.f32 %v3820, %v3909
  %v3911 = vpop.f32.mrf.mxu0
  %3912 = vmatprep.mubr.f32.mxu0 0.0
  %3913 = vmatmul.mubr.f32.gmra.mxu0 %v3831
  %v3914 = vpop.f32.mrf.mxu0
  %v3915 = vadd.f32 %v3820, %v3914
  %v3916 = vpop.f32.mrf.mxu0
  %3917 = vdwg.mxu0
  %v3918 = vmax.f32 %v3900, 0.0
  %v3919 = vmax.f32 %v3905, 0.0
  %v3920 = vmax.f32 %v3910, 0.0
  %v3921 = vmax.f32 %v3915, 0.0
  %v3922 = vld [vmem:[%s2] sm:$0xff]
  %v3923 = vld [vmem:[%s2 + $0x8] sm:$0xff]
  %v3924 = vld [vmem:[%s2 + $0x10] sm:$0xff]
  %v3925 = vld [vmem:[%s2 + $0x18] sm:$0xff]
  %3930 = vrot.lane.b32.xlu0 %v3918, 8
  %v3931 = vpop.permute.xlu0 %3930
  %3932 = vrot.lane.b32.xlu0 %v3919, 8
  %v3933 = vpop.permute.xlu0 %3932
  %3934 = vrot.lane.b32.xlu0 %v3920, 8
  %v3935 = vpop.permute.xlu0 %3934
  %3936 = vrot.lane.b32.xlu0 %v3921, 8
  %v3937 = vpop.permute.xlu0 %3936
  %vm3942 = vcmask 64512
  %v3943 = vsel %vm3942, %v3918, %v3931
  %v3944 = vsel %vm3942, %v3919, %v3933
  %v3945 = vsel %vm3942, %v3920, %v3935
  %v3946 = vsel %vm3942, %v3921, %v3937
  %3947 = vrot.lane.b32.xlu0 %v3918, 120
  %v3948 = vpop.permute.xlu0 %3947
  %3949 = vrot.lane.b32.xlu0 %v3919, 120
  %v3950 = vpop.permute.xlu0 %3949
  %3951 = vrot.lane.b32.xlu0 %v3920, 120
  %v3952 = vpop.permute.xlu0 %3951
  %3953 = vrot.lane.b32.xlu0 %v3921, 120
  %v3954 = vpop.permute.xlu0 %3953
  %v3959 = vsel %vm3942, %v3948, %v3918
  %v3960 = vsel %vm3942, %v3950, %v3919
  %v3961 = vsel %vm3942, %v3952, %v3920
  %v3962 = vsel %vm3942, %v3954, %v3921
  %3963 = vrot.lane.b32.xlu0 %v3918, 112
  %v3964 = vpop.permute.xlu0 %3963
  %3965 = vrot.lane.b32.xlu0 %v3919, 112
  %v3966 = vpop.permute.xlu0 %3965
  %3967 = vrot.lane.b32.xlu0 %v3920, 112
  %v3968 = vpop.permute.xlu0 %3967
  %3969 = vrot.lane.b32.xlu0 %v3921, 112
  %v3970 = vpop.permute.xlu0 %3969
  %v3975 = vsel %vm3942, %v3964, %v3948
  %v3976 = vsel %vm3942, %v3966, %v3950
  %v3977 = vsel %vm3942, %v3968, %v3952
  %v3978 = vsel %vm3942, %v3970, %v3954
  %3979 = vrot.lane.b32.xlu0 %v3918, 104
  %v3980 = vpop.permute.xlu0 %3979
  %3981 = vrot.lane.b32.xlu0 %v3919, 104
  %v3982 = vpop.permute.xlu0 %3981
  %3983 = vrot.lane.b32.xlu0 %v3920, 104
  %v3984 = vpop.permute.xlu0 %3983
  %3985 = vrot.lane.b32.xlu0 %v3921, 104
  %v3986 = vpop.permute.xlu0 %3985
  %v3991 = vsel %vm3942, %v3980, %v3964
  %v3992 = vsel %vm3942, %v3982, %v3966
  %v3993 = vsel %vm3942, %v3984, %v3968
  %v3994 = vsel %vm3942, %v3986, %v3970
  %v3995 = vmul.f32 %v3943, %v3922
  %v3996 = vmul.f32 %v3944, %v3923
  %v3997 = vmul.f32 %v3945, %v3924
  %v3998 = vmul.f32 %v3946, %v3925
  %4003 = vrot.lane.b32.xlu0 %v3922, 112
  %v4004 = vpop.permute.xlu0 %4003
  %4005 = vrot.lane.b32.xlu0 %v3923, 112
  %v4006 = vpop.permute.xlu0 %4005
  %4007 = vrot.lane.b32.xlu0 %v3924, 112
  %v4008 = vpop.permute.xlu0 %4007
  %4009 = vrot.lane.b32.xlu0 %v3925, 112
  %v4010 = vpop.permute.xlu0 %4009
  %v4015 = vmul.f32 %v3959, %v4004
  %v4016 = vmul.f32 %v3960, %v4006
  %v4017 = vmul.f32 %v3961, %v4008
  %v4018 = vmul.f32 %v3962, %v4010
  %v4019 = vsub.f32 %v3995, %v4015
  %v4020 = vsub.f32 %v3996, %v4016
  %v4021 = vsub.f32 %v3997, %v4017
  %v4022 = vsub.f32 %v3998, %v4018
  %v4023 = vmul.f32 %v3943, %v4004
  %v4024 = vmul.f32 %v3944, %v4006
  %v4025 = vmul.f32 %v3945, %v4008
  %v4026 = vmul.f32 %v3946, %v4010
  %v4027 = vmul.f32 %v3959, %v3922
  %v4028 = vmul.f32 %v3960, %v3923
  %v4029 = vmul.f32 %v3961, %v3924
  %v4030 = vmul.f32 %v3962, %v3925
  %v4031 = vadd.f32 %v4023, %v4027
  %v4032 = vadd.f32 %v4024, %v4028
  %v4033 = vadd.f32 %v4025, %v4029
  %v4034 = vadd.f32 %v4026, %v4030
  %v4035 = vadd.f32 %v4031, 1e-10
  %v4036 = vadd.f32 %v4032, 1e-10
  %v4037 = vadd.f32 %v4033, 1e-10
  %v4038 = vadd.f32 %v4034, 1e-10
  %v4039 = vmul.f32 %v3975, %v3922
  %v4040 = vmul.f32 %v3976, %v3923
  %v4041 = vmul.f32 %v3977, %v3924
  %v4042 = vmul.f32 %v3978, %v3925
  %v4043 = vmul.f32 %v3991, %v4004
  %v4044 = vmul.f32 %v3992, %v4006
  %v4045 = vmul.f32 %v3993, %v4008
  %v4046 = vmul.f32 %v3994, %v4010
  %v4047 = vsub.f32 %v4039, %v4043
  %v4048 = vsub.f32 %v4040, %v4044
  %v4049 = vsub.f32 %v4041, %v4045
  %v4050 = vsub.f32 %v4042, %v4046
  %v4051 = vmul.f32 %v3975, %v4004
  %v4052 = vmul.f32 %v3976, %v4006
  %v4053 = vmul.f32 %v3977, %v4008
  %v4054 = vmul.f32 %v3978, %v4010
  %v4055 = vmul.f32 %v3991, %v3922
  %v4056 = vmul.f32 %v3992, %v3923
  %v4057 = vmul.f32 %v3993, %v3924
  %v4058 = vmul.f32 %v3994, %v3925
  %v4059 = vadd.f32 %v4051, %v4055
  %v4060 = vadd.f32 %v4052, %v4056
  %v4061 = vadd.f32 %v4053, %v4057
  %v4062 = vadd.f32 %v4054, %v4058
  %v4063 = vadd.f32 %v4059, 1e-10
  %v4064 = vadd.f32 %v4060, 1e-10
  %v4065 = vadd.f32 %v4061, 1e-10
  %v4066 = vadd.f32 %v4062, 1e-10
  %v4067 = vmul.f32 %v4019, %v4019
  %v4068 = vmul.f32 %v4020, %v4020
  %v4069 = vmul.f32 %v4021, %v4021
  %v4070 = vmul.f32 %v4022, %v4022
  %v4071 = vmul.f32 %v4035, %v4035
  %v4072 = vmul.f32 %v4036, %v4036
  %v4073 = vmul.f32 %v4037, %v4037
  %v4074 = vmul.f32 %v4038, %v4038
  %v4075 = vadd.f32 %v4067, %v4071
  %v4076 = vadd.f32 %v4068, %v4072
  %v4077 = vadd.f32 %v4069, %v4073
  %v4078 = vadd.f32 %v4070, %v4074
  %v4079 = vrsqrt.pop %v4075
  %v4080 = vmul.f32 %v4075, %v4079
  %vm4081 = vcmp.eq.f32.partialorder %v4075, inf
  %v4082 = vsel %vm4081, %v4075, %v4080
  %vm4083 = vcmp.eq.f32.partialorder %v4075, 0.0
  %v4084 = vand.u32 %v4075, 2147483648
  %v4085 = vsel %vm4083, %v4084, %v4082
  %v4086 = vrsqrt.pop %v4076
  %v4087 = vmul.f32 %v4076, %v4086
  %vm4088 = vcmp.eq.f32.partialorder %v4076, inf
  %v4089 = vsel %vm4088, %v4076, %v4087
  %vm4090 = vcmp.eq.f32.partialorder %v4076, 0.0
  %v4091 = vand.u32 %v4076, 2147483648
  %v4092 = vsel %vm4090, %v4091, %v4089
  %v4093 = vrsqrt.pop %v4077
  %v4094 = vmul.f32 %v4077, %v4093
  %vm4095 = vcmp.eq.f32.partialorder %v4077, inf
  %v4096 = vsel %vm4095, %v4077, %v4094
  %vm4097 = vcmp.eq.f32.partialorder %v4077, 0.0
  %v4098 = vand.u32 %v4077, 2147483648
  %v4099 = vsel %vm4097, %v4098, %v4096
  %v4100 = vrsqrt.pop %v4078
  %v4101 = vmul.f32 %v4078, %v4100
  %vm4102 = vcmp.eq.f32.partialorder %v4078, inf
  %v4103 = vsel %vm4102, %v4078, %v4101
  %vm4104 = vcmp.eq.f32.partialorder %v4078, 0.0
  %v4105 = vand.u32 %v4078, 2147483648
  %v4106 = vsel %vm4104, %v4105, %v4103
  %4111 = vrot.lane.b32.xlu0 %v4035, 16
  %v4112 = vpop.permute.xlu0 %4111
  %4113 = vrot.lane.b32.xlu0 %v4036, 16
  %v4114 = vpop.permute.xlu0 %4113
  %4115 = vrot.lane.b32.xlu0 %v4037, 16
  %v4116 = vpop.permute.xlu0 %4115
  %4117 = vrot.lane.b32.xlu0 %v4038, 16
  %v4118 = vpop.permute.xlu0 %4117
  %4127 = vrot.lane.b32.xlu0 %v4047, 32
  %v4128 = vpop.permute.xlu0 %4127
  %4129 = vrot.lane.b32.xlu0 %v4048, 32
  %v4130 = vpop.permute.xlu0 %4129
  %4131 = vrot.lane.b32.xlu0 %v4049, 32
  %v4132 = vpop.permute.xlu0 %4131
  %4133 = vrot.lane.b32.xlu0 %v4050, 32
  %v4134 = vpop.permute.xlu0 %4133
  %4143 = vrot.lane.b32.xlu0 %v4063, 48
  %v4144 = vpop.permute.xlu0 %4143
  %4145 = vrot.lane.b32.xlu0 %v4064, 48
  %v4146 = vpop.permute.xlu0 %4145
  %4147 = vrot.lane.b32.xlu0 %v4065, 48
  %v4148 = vpop.permute.xlu0 %4147
  %4149 = vrot.lane.b32.xlu0 %v4066, 48
  %v4150 = vpop.permute.xlu0 %4149
  %4159 = vrot.lane.b32.xlu0 %v4085, 64
  %v4160 = vpop.permute.xlu0 %4159
  %4161 = vrot.lane.b32.xlu0 %v4092, 64
  %v4162 = vpop.permute.xlu0 %4161
  %4163 = vrot.lane.b32.xlu0 %v4099, 64
  %v4164 = vpop.permute.xlu0 %4163
  %4165 = vrot.lane.b32.xlu0 %v4106, 64
  %v4166 = vpop.permute.xlu0 %4165
  %v4171 = vsel %vm327, %v4019, %v4112
  %v4172 = vsel %vm327, %v4020, %v4114
  %v4173 = vsel %vm327, %v4021, %v4116
  %v4174 = vsel %vm327, %v4022, %v4118
  %v4175 = vsel %vm461, %v4171, %v4128
  %v4176 = vsel %vm461, %v4172, %v4130
  %v4177 = vsel %vm461, %v4173, %v4132
  %v4178 = vsel %vm461, %v4174, %v4134
  %vm4179 = vcmask 392192
  %v4180 = vsel %vm4179, %v4175, %v4144
  %v4181 = vsel %vm4179, %v4176, %v4146
  %v4182 = vsel %vm4179, %v4177, %v4148
  %v4183 = vsel %vm4179, %v4178, %v4150
  %v4184 = vsel %vm466, %v4180, %v4160
  %v4185 = vsel %vm466, %v4181, %v4162
  %v4186 = vsel %vm466, %v4182, %v4164
  %v4187 = vsel %vm466, %v4183, %v4166
  %vm4188 = vcmask 588800
  %4189 = vst.msk [vmem:[%s17] sm:$0xff] %vm4188, %v4184
  %4190 = vst.msk [vmem:[%s17 + $0x8] sm:$0xff] %vm4188, %v4185
  %4191 = vst.msk [vmem:[%s17 + $0x10] sm:$0xff] %vm4188, %v4186
  %4192 = vst.msk [vmem:[%s17 + $0x18] sm:$0xff] %vm4188, %v4187
  // Predicated region
  $region70: #{conv_tasnet_forward.1} parent=0 // pred_check
    _
  $region71: #{conv_tasnet_forward.1} parent=0 // pred_check_branch
    %4194 = sbr.rel (0) target = $region73
  $region72: #{conv_tasnet_forward.1} parent=0 // pred_region
    _
  $region73: #{conv_tasnet_forward.1} parent=0 // pred_fallthru
    _
  // Predicated region
  $region74: #{conv_tasnet_forward.1} parent=0 // pred_check
    _
  $region75: #{conv_tasnet_forward.1} parent=0 // pred_check_branch
    %4196 = sbr.rel (0) target = $region77
  $region76: #{conv_tasnet_forward.1} parent=0 // pred_region
    _
  $region77: #{conv_tasnet_forward.1} parent=0 // pred_fallthru
    _

</llo_original>
